<compile_context>
chip_gen: v7x
topology: tpu7x:2x2x1
jax: 0.10.0
libtpu: 0.0.40
codegen_flags: <defaults>
</compile_context>

<pallas_src>
import jax
import jax.numpy as jnp
from jax.experimental import pallas as pl
from jax.experimental.pallas import tpu as pltpu

LOSS_CHANNELS = 4        # loss_map channels (Conv2d(4, 8) / ChannelAlignLayer(4, ...))
N_HEADS = 8              # pooled_loss_map channels -> attention heads
HEAD_DIM = 128           # 1024 / 8
C3 = N_HEADS * HEAD_DIM  # block3_feats channels (1024)
MID = 128                # ChannelAlign hidden dim
SPATIAL = 14             # block3 / aligned loss-map spatial size
NPOS = SPATIAL * SPATIAL # 196 spatial positions
NUM_CLASSES = 2          # nn.Linear(3072, 2)


# ----------------------------- Pallas kernel --------------------------------

def _wmapv6_head_kernel(b3_ref, lma_ref, img_ref, mask_ref,
                        cw_ref, cb_ref, w1_ref, w2_ref,
                        wa_ref, wb_ref, wc_ref, fb_ref, o_ref):
    """One batch element per grid step; all math on VMEM-resident data, MXU-centric.

    b3_ref  : (1, 1024, 196) bf16  block3 feats, NATIVE channels-first, spatial flattened
    lma_ref : (1, 196, 4)    f32   14x14 adaptive-avg-pooled loss map, channels-last
    img_ref : (1, 1024, 1)   bf16  CLIP image embedding (as a column)
    mask_ref: (1024, 8)      f32   block-diagonal head mask: mask[c, h] = (c // 128 == h)
    cw_ref  : (4, 9)  1x1-conv weight^T with an extra zero column (its softmax is exactly
                      uniform 1/196 -> spatial mean folded into the pooling matmul)
    cb_ref  : (1, 9)  conv bias, zero-padded
    w1_ref  : (4, 128)    ChannelAlign fc1^T (bias-free)
    w2_ref  : (128, 1024) ChannelAlign fc2^T (bias-free)
    wa/wb/wc: (2, 1024)   final-FC weight slices (PyTorch-native layout) for
                          [image_feats | pooled_block3 | channel_weighted]
    fb_ref  : (2, 1)      final-FC bias (column)
    o_ref   : (1, 2, 1)   logits (column)
    """
    b3 = b3_ref[0].astype(jnp.float32)           # (1024, 196) upcast right after load (v5e: no bf16 VPU)
    lma = lma_ref[0]                             # (196, 4)
    img = img_ref[0].astype(jnp.float32)         # (1024, 1)

    # --- pooled_loss_map = Conv2d(4, 8, 1x1); column 8 is the all-zero "mean head" --------
    scores = jnp.dot(lma, cw_ref[...], preferred_element_type=jnp.float32) + cb_ref[...]   # (196, 9)

    # --- MultiHeadMapAttention (assumed): softmax over the 196 spatial positions ----------
    m = jnp.max(scores, axis=0, keepdims=True)                                  # (1, 9)
    e = jnp.exp(scores - m)                                                     # (196, 9)
    attn = e / jnp.sum(e, axis=0, keepdims=True)                                # (196, 9); col 8 == 1/196

    # --- ONE MXU pass over block3: 8 per-head spatial sums + the spatial mean -------------
    q = jnp.dot(b3, attn, preferred_element_type=jnp.float32)                   # (1024, 9)
    pooled = jnp.dot(q[:, :N_HEADS] * mask_ref[...],                            # block-diag select
                     jnp.ones((N_HEADS, 1), jnp.float32),
                     preferred_element_type=jnp.float32)                        # (1024, 1)
    b3_mean = q[:, N_HEADS:N_HEADS + 1]                                         # (1024, 1)

    # --- ChannelAlignLayer(4, 128, 1024): sigmoid gate from the mean loss map -------------
    # (mean of the exactly-pooled 14x14 map == mean of the original loss map; H,W % 14 == 0)
    lm_mean = jnp.mean(lma, axis=0, keepdims=True)                              # (1, 4)
    h1 = jnp.maximum(
        jnp.dot(lm_mean, w1_ref[...], preferred_element_type=jnp.float32), 0.0) # (1, 128)
    z = jnp.dot(h1, w2_ref[...], preferred_element_type=jnp.float32)            # (1, 1024)
    gate = 1.0 / (1.0 + jnp.exp(-z))                                            # sigmoid, (1, 1024)

    # --- Linear(3072, 2) on cat([img, pooled, gate * b3_mean]) — concat never materialized -
    logits = (jnp.dot(wa_ref[...], img, preferred_element_type=jnp.float32)
              + jnp.dot(wb_ref[...], pooled, preferred_element_type=jnp.float32)
              + jnp.dot(wc_ref[...] * gate, b3_mean, preferred_element_type=jnp.float32)
              + fb_ref[...])                                                    # (2, 1)
    o_ref[0] = logits.astype(o_ref.dtype)


# ------------------------------ JAX wrapper ----------------------------------

def wmapv6_head(params, image_feats, block3_feats, loss_map, *, feat_dtype=jnp.bfloat16):
    """Everything after clip_model.encode_image, in a single pallas_call."""
    N, c3, S, S2 = block3_feats.shape
    assert c3 == C3 and S == SPATIAL and S2 == SPATIAL, block3_feats.shape
    Nl, Cl, H, W = loss_map.shape
    assert Nl == N and Cl == LOSS_CHANNELS, loss_map.shape
    assert H % SPATIAL == 0 and W % SPATIAL == 0, (
        "adaptive_avg_pool2d implemented only for H,W multiples of 14")
    kh, kw = H // SPATIAL, W // SPATIAL

    # Host-side prep is tiny: exact adaptive pooling of the 4-channel loss map (few KB) and
    # RESHAPES of the feature tensors. The big block3 tensor is NOT transposed on the host.
    lma = loss_map.reshape(N, Cl, SPATIAL, kh, SPATIAL, kw).mean(axis=(3, 5))   # (N,4,14,14)
    lma = jnp.transpose(lma, (0, 2, 3, 1)).reshape(N, NPOS, Cl).astype(jnp.float32)
    b3 = block3_feats.reshape(N, C3, NPOS).astype(feat_dtype)                   # channels-first
    img = image_feats.reshape(N, C3, 1).astype(feat_dtype)                      # column layout

    f32 = jnp.float32
    cw = params['conv_w'].reshape(N_HEADS, Cl).T.astype(f32)                    # (4, 8)
    cw9 = jnp.concatenate([cw, jnp.zeros((Cl, 1), f32)], axis=1)                # (4, 9) zero "mean head"
    cb9 = jnp.concatenate([params['conv_b'].reshape(1, N_HEADS).astype(f32),
                           jnp.zeros((1, 1), f32)], axis=1)                     # (1, 9)
    w1t = params['ca_w1'].T.astype(f32)                                         # (4, 128)
    w2t = params['ca_w2'].T.astype(f32)                                         # (128, 1024)
    fcw = params['fc_w'].astype(f32)                                            # (2, 3072) native layout
    wa, wb, wc = fcw[:, :C3], fcw[:, C3:2 * C3], fcw[:, 2 * C3:]                # (2,1024) each
    fb = params['fc_b'].reshape(NUM_CLASSES, 1).astype(f32)                     # (2, 1)
    head_mask = (jnp.arange(C3)[:, None] // HEAD_DIM
                 == jnp.arange(N_HEADS)[None, :]).astype(f32)                   # (1024, 8)

    def batch_spec(shape):                       # one batch element per grid step
        return pl.BlockSpec((1,) + shape[1:], lambda n: (n, 0, 0))

    def const_spec(shape):                       # weights: resident across all steps
        nd = len(shape)
        return pl.BlockSpec(shape, lambda n, _nd=nd: (0,) * _nd)

    out = pl.pallas_call(
        _wmapv6_head_kernel,
        out_shape=jax.ShapeDtypeStruct((N, NUM_CLASSES, 1), jnp.float32),
        grid=(N,),
        in_specs=[batch_spec(b3.shape), batch_spec(lma.shape), batch_spec(img.shape),
                  const_spec(head_mask.shape), const_spec(cw9.shape), const_spec(cb9.shape),
                  const_spec(w1t.shape), const_spec(w2t.shape),
                  const_spec(wa.shape), const_spec(wb.shape), const_spec(wc.shape),
                  const_spec(fb.shape)],
        out_specs=pl.BlockSpec((1, NUM_CLASSES, 1), lambda n: (n, 0, 0)),
        compiler_params=pltpu.CompilerParams(
            dimension_semantics=("parallel",)),  # batch shards across v7x's two TensorCores
    )(b3, lma, img, head_mask, cw9, cb9, w1t, w2t, wa, wb, wc, fb)
    return out.reshape(N, NUM_CLASSES)


def clip_classifier_wmap_v6(params, image_input, loss_map, clip_feats):
    """CLipClassifierWMapV6.forward.

    clip_feats = (image_feats, block3_feats) stands in for
    clip_model.encode_image(image_input) (see TODO at top of file).
    """
    del image_input  # consumed only by the external CLIP encoder
    image_feats, block3_feats = clip_feats
    return wmapv6_head(params, image_feats, block3_feats, loss_map)


# ------------------------- pure-JAX reference (check) ------------------------

def wmapv6_head_reference(params, image_feats, block3_feats, loss_map, *, feat_dtype=jnp.bfloat16):
    N = block3_feats.shape[0]
    H, W = loss_map.shape[2:]
    kh, kw = H // SPATIAL, W // SPATIAL
    b3 = block3_feats.astype(feat_dtype).astype(jnp.float32).reshape(N, C3, NPOS)
    img = image_feats.astype(feat_dtype).astype(jnp.float32)
    lma = loss_map.reshape(N, LOSS_CHANNELS, SPATIAL, kh, SPATIAL, kw).mean(axis=(3, 5))
    lma = lma.reshape(N, LOSS_CHANNELS, NPOS)

    cw = params['conv_w'].reshape(N_HEADS, LOSS_CHANNELS)
    scores = jnp.einsum('hc,ncs->nhs', cw, lma) + params['conv_b'][None, :, None]
    attn = jax.nn.softmax(scores, axis=-1)                                       # (N, 8, 196)
    heads = jnp.einsum('nhs,nhds->nhd', attn, b3.reshape(N, N_HEADS, HEAD_DIM, NPOS))
    pooled = heads.reshape(N, C3)

    b3_mean = b3.mean(axis=-1)                                                   # (N, 1024)
    lm_mean = loss_map.mean(axis=(2, 3))                                         # (N, 4)
    h1 = jax.nn.relu(lm_mean @ params['ca_w1'].T)
    gate = jax.nn.sigmoid(h1 @ params['ca_w2'].T)
    chw = b3_mean * gate

    feats = jnp.concatenate([img, pooled, chw], axis=1)                          # (N, 3072)
    return feats @ params['fc_w'].T + params['fc_b'][None, :]


# --------------------------- deterministic init ------------------------------

def init_params(key):
    ks = jax.random.split(key, 6)
    p = {}
    p['conv_w'] = 0.20 * jax.random.normal(ks[0], (N_HEADS, LOSS_CHANNELS, 1, 1), jnp.float32)
    p['conv_b'] = 0.05 * jax.random.normal(ks[1], (N_HEADS,), jnp.float32)
    p['ca_w1'] = (LOSS_CHANNELS ** -0.5) * jax.random.normal(
        ks[2], (MID, LOSS_CHANNELS), jnp.float32)                   # Linear(4, 128, bias=False)
    p['ca_w2'] = (MID ** -0.5) * jax.random.normal(
        ks[3], (C3, MID), jnp.float32)                              # Linear(128, 1024, bias=False)
    p['fc_w'] = ((3 * C3) ** -0.5) * jax.random.normal(
        ks[4], (NUM_CLASSES, 3 * C3), jnp.float32)                  # Linear(3072, 2)
    p['fc_b'] = 0.01 * jax.random.normal(ks[5], (NUM_CLASSES,), jnp.float32)
    return p


# --------------------------------- main --------------------------------------

if __name__ == "__main__":
    key = jax.random.PRNGKey(0)
    kp, k_img, k_loss, k_feat, k_b3 = jax.random.split(key, 5)
    params = init_params(kp)

    # Module inputs (small shapes consistent with the forward pass).
    image_input = jax.random.normal(k_img, (2, 3, 64, 64), jnp.float32)  # only the external CLIP encoder uses this
    loss_map = jax.random.normal(k_loss, (2, LOSS_CHANNELS, 28, 28), jnp.float32)

    # TODO(synk): stand-ins for clip_model.encode_image(image_input) outputs — the pretrained
    # RN50x64 weights cannot be loaded in a self-contained script.
    image_feats = jax.random.normal(k_feat, (2, C3), jnp.float32)                    # (2, 1024)
    block3_feats = jax.random.normal(k_b3, (2, C3, SPATIAL, SPATIAL), jnp.float32)   # (2, 1024, 14, 14)

    fwd = jax.jit(clip_classifier_wmap_v6)
    logits = jax.block_until_ready(fwd(params, image_input, loss_map, (image_feats, block3_feats)))
    assert logits.shape == (2, NUM_CLASSES), logits.shape
    assert bool(jnp.all(jnp.isfinite(logits)))

    ref = wmapv6_head_reference(params, image_feats, block3_feats, loss_map)
    assert jnp.allclose(logits, ref, atol=5e-3, rtol=5e-3), (logits, ref)
    print("KERNEL_OK")
</pallas_src>

<mosaic_0001>
module attributes {stable_mosaic.version = 11 : i64} {
  func.func @_wmapv6_head_kernel(%arg0: i32, %arg1: memref<1x1024x196xbf16, #tpu.memory_space<vmem>>, %arg2: memref<1x196x4xf32, #tpu.memory_space<vmem>>, %arg3: memref<1x1024x1xbf16, #tpu.memory_space<vmem>>, %arg4: memref<1024x8xf32, #tpu.memory_space<vmem>>, %arg5: memref<4x9xf32, #tpu.memory_space<vmem>>, %arg6: memref<1x9xf32, #tpu.memory_space<vmem>>, %arg7: memref<4x128xf32, #tpu.memory_space<vmem>>, %arg8: memref<128x1024xf32, #tpu.memory_space<vmem>>, %arg9: memref<2x1024xf32, #tpu.memory_space<vmem>>, %arg10: memref<2x1024xf32, #tpu.memory_space<vmem>>, %arg11: memref<2x1024xf32, #tpu.memory_space<vmem>>, %arg12: memref<2x1xf32, #tpu.memory_space<vmem>>, %arg13: memref<1x2x1xf32, #tpu.memory_space<vmem>>) attributes {dimension_semantics = [#tpu.dimension_semantics<parallel>], iteration_bounds = array<i64: 2>, scalar_prefetch = 0 : i64, scratch_operands = 0 : i64, tpu.core_type = #tpu.core_type<tc>, window_params = [{transform_indices = @transform_0, window_bounds = array<i64: 1, 1024, 196>}, {transform_indices = @transform_1, window_bounds = array<i64: 1, 196, 4>}, {transform_indices = @transform_2, window_bounds = array<i64: 1, 1024, 1>}, {pipeline_mode = #tpu.pipeline_mode<synchronous>, transform_indices = @transform_3, window_bounds = array<i64: 1024, 8>}, {pipeline_mode = #tpu.pipeline_mode<synchronous>, transform_indices = @transform_4, window_bounds = array<i64: 4, 9>}, {pipeline_mode = #tpu.pipeline_mode<synchronous>, transform_indices = @transform_5, window_bounds = array<i64: 1, 9>}, {pipeline_mode = #tpu.pipeline_mode<synchronous>, transform_indices = @transform_6, window_bounds = array<i64: 4, 128>}, {pipeline_mode = #tpu.pipeline_mode<synchronous>, transform_indices = @transform_7, window_bounds = array<i64: 128, 1024>}, {pipeline_mode = #tpu.pipeline_mode<synchronous>, transform_indices = @transform_8, window_bounds = array<i64: 2, 1024>}, {pipeline_mode = #tpu.pipeline_mode<synchronous>, transform_indices = @transform_9, window_bounds = array<i64: 2, 1024>}, {pipeline_mode = #tpu.pipeline_mode<synchronous>, transform_indices = @transform_10, window_bounds = array<i64: 2, 1024>}, {pipeline_mode = #tpu.pipeline_mode<synchronous>, transform_indices = @transform_11, window_bounds = array<i64: 2, 1>}, {transform_indices = @transform_12, window_bounds = array<i64: 1, 2, 1>}]} {
    %c0 = arith.constant 0 : index
    %c0_0 = arith.constant 0 : index
    %c0_1 = arith.constant 0 : index
    %0 = vector.load %arg1[%c0, %c0_0, %c0_1] : memref<1x1024x196xbf16, #tpu.memory_space<vmem>>, vector<1x1024x196xbf16>
    %1 = vector.shape_cast %0 : vector<1x1024x196xbf16> to vector<1024x196xbf16>
    %2 = arith.extf %1 : vector<1024x196xbf16> to vector<1024x196xf32>
    %c0_2 = arith.constant 0 : index
    %c0_3 = arith.constant 0 : index
    %c0_4 = arith.constant 0 : index
    %3 = vector.load %arg2[%c0_2, %c0_3, %c0_4] : memref<1x196x4xf32, #tpu.memory_space<vmem>>, vector<1x196x4xf32>
    %4 = vector.shape_cast %3 : vector<1x196x4xf32> to vector<196x4xf32>
    %c0_5 = arith.constant 0 : index
    %c0_6 = arith.constant 0 : index
    %c0_7 = arith.constant 0 : index
    %5 = vector.load %arg3[%c0_5, %c0_6, %c0_7] : memref<1x1024x1xbf16, #tpu.memory_space<vmem>>, vector<1x1024x1xbf16>
    %6 = vector.shape_cast %5 : vector<1x1024x1xbf16> to vector<1024x1xbf16>
    %7 = arith.extf %6 : vector<1024x1xbf16> to vector<1024x1xf32>
    %c0_8 = arith.constant 0 : index
    %c0_9 = arith.constant 0 : index
    %8 = vector.load %arg5[%c0_8, %c0_9] : memref<4x9xf32, #tpu.memory_space<vmem>>, vector<4x9xf32>
    %cst = arith.constant dense<0.000000e+00> : vector<196x9xf32>
    %9 = tpu.matmul %4, %8, %cst {dimension_numbers = #tpu.dot_dimension_numbers<[1], [0], [0], [1], [0, 0, 1, 1], [], []>} : vector<196x4xf32>, vector<4x9xf32>, vector<196x9xf32> -> vector<196x9xf32>
    %c0_10 = arith.constant 0 : index
    %c0_11 = arith.constant 0 : index
    %10 = vector.load %arg6[%c0_10, %c0_11] : memref<1x9xf32, #tpu.memory_space<vmem>>, vector<1x9xf32>
    %11 = vector.broadcast %10 : vector<1x9xf32> to vector<196x9xf32>
    %12 = arith.addf %9, %11 : vector<196x9xf32>
    %cst_12 = arith.constant dense<0xFF800000> : vector<9xf32>
    %13 = vector.multi_reduction <maximumf>, %12, %cst_12 [0] : vector<196x9xf32> to vector<9xf32>
    %14 = vector.shape_cast %13 : vector<9xf32> to vector<1x9xf32>
    %15 = vector.broadcast %14 : vector<1x9xf32> to vector<196x9xf32>
    %16 = arith.subf %12, %15 : vector<196x9xf32>
    %17 = math.exp %16 : vector<196x9xf32>
    %cst_13 = arith.constant dense<0.000000e+00> : vector<9xf32>
    %18 = vector.multi_reduction <add>, %17, %cst_13 [0] : vector<196x9xf32> to vector<9xf32>
    %19 = vector.shape_cast %18 : vector<9xf32> to vector<1x9xf32>
    %20 = vector.broadcast %19 : vector<1x9xf32> to vector<196x9xf32>
    %21 = arith.divf %17, %20 : vector<196x9xf32>
    %cst_14 = arith.constant dense<0.000000e+00> : vector<1024x9xf32>
    %22 = tpu.matmul %2, %21, %cst_14 {dimension_numbers = #tpu.dot_dimension_numbers<[1], [0], [0], [1], [0, 0, 1, 1], [], []>} : vector<1024x196xf32>, vector<196x9xf32>, vector<1024x9xf32> -> vector<1024x9xf32>
    %23 = vector.extract_strided_slice %22 {offsets = [0, 0], sizes = [1024, 8], strides = [1, 1]} : vector<1024x9xf32> to vector<1024x8xf32>
    %c0_15 = arith.constant 0 : index
    %c0_16 = arith.constant 0 : index
    %24 = vector.load %arg4[%c0_15, %c0_16] : memref<1024x8xf32, #tpu.memory_space<vmem>>, vector<1024x8xf32>
    %25 = arith.mulf %23, %24 : vector<1024x8xf32>
    %cst_17 = arith.constant 1.000000e+00 : f32
    %26 = vector.broadcast %cst_17 : f32 to vector<8x1xf32>
    %cst_18 = arith.constant dense<0.000000e+00> : vector<1024x1xf32>
    %27 = tpu.matmul %25, %26, %cst_18 {dimension_numbers = #tpu.dot_dimension_numbers<[1], [0], [0], [1], [0, 0, 1, 1], [], []>} : vector<1024x8xf32>, vector<8x1xf32>, vector<1024x1xf32> -> vector<1024x1xf32>
    %28 = vector.extract_strided_slice %22 {offsets = [0, 8], sizes = [1024, 1], strides = [1, 1]} : vector<1024x9xf32> to vector<1024x1xf32>
    %cst_19 = arith.constant dense<0.000000e+00> : vector<4xf32>
    %29 = vector.multi_reduction <add>, %4, %cst_19 [0] : vector<196x4xf32> to vector<4xf32>
    %30 = vector.shape_cast %29 : vector<4xf32> to vector<1x4xf32>
    %cst_20 = arith.constant 1.960000e+02 : f32
    %31 = vector.broadcast %cst_20 : f32 to vector<1x4xf32>
    %32 = arith.divf %30, %31 : vector<1x4xf32>
    %c0_21 = arith.constant 0 : index
    %c0_22 = arith.constant 0 : index
    %33 = vector.load %arg7[%c0_21, %c0_22] : memref<4x128xf32, #tpu.memory_space<vmem>>, vector<4x128xf32>
    %cst_23 = arith.constant dense<0.000000e+00> : vector<1x128xf32>
    %34 = tpu.matmul %32, %33, %cst_23 {dimension_numbers = #tpu.dot_dimension_numbers<[1], [0], [0], [1], [0, 0, 1, 1], [], []>} : vector<1x4xf32>, vector<4x128xf32>, vector<1x128xf32> -> vector<1x128xf32>
    %cst_24 = arith.constant 0.000000e+00 : f32
    %35 = vector.broadcast %cst_24 : f32 to vector<1x128xf32>
    %36 = arith.maximumf %34, %35 : vector<1x128xf32>
    %c0_25 = arith.constant 0 : index
    %c0_26 = arith.constant 0 : index
    %37 = vector.load %arg8[%c0_25, %c0_26] : memref<128x1024xf32, #tpu.memory_space<vmem>>, vector<128x1024xf32>
    %cst_27 = arith.constant dense<0.000000e+00> : vector<1x1024xf32>
    %38 = tpu.matmul %36, %37, %cst_27 {dimension_numbers = #tpu.dot_dimension_numbers<[1], [0], [0], [1], [0, 0, 1, 1], [], []>} : vector<1x128xf32>, vector<128x1024xf32>, vector<1x1024xf32> -> vector<1x1024xf32>
    %cst_28 = arith.constant 0.000000e+00 : f32
    %39 = vector.broadcast %cst_28 : f32 to vector<1x1024xf32>
    %40 = arith.subf %39, %38 : vector<1x1024xf32>
    %41 = math.exp %40 : vector<1x1024xf32>
    %cst_29 = arith.constant 1.000000e+00 : f32
    %42 = vector.broadcast %cst_29 : f32 to vector<1x1024xf32>
    %43 = arith.addf %42, %41 : vector<1x1024xf32>
    %cst_30 = arith.constant 1.000000e+00 : f32
    %44 = vector.broadcast %cst_30 : f32 to vector<1x1024xf32>
    %45 = arith.divf %44, %43 : vector<1x1024xf32>
    %c0_31 = arith.constant 0 : index
    %c0_32 = arith.constant 0 : index
    %46 = vector.load %arg9[%c0_31, %c0_32] : memref<2x1024xf32, #tpu.memory_space<vmem>>, vector<2x1024xf32>
    %cst_33 = arith.constant dense<0.000000e+00> : vector<2x1xf32>
    %47 = tpu.matmul %46, %7, %cst_33 {dimension_numbers = #tpu.dot_dimension_numbers<[1], [0], [0], [1], [0, 0, 1, 1], [], []>} : vector<2x1024xf32>, vector<1024x1xf32>, vector<2x1xf32> -> vector<2x1xf32>
    %c0_34 = arith.constant 0 : index
    %c0_35 = arith.constant 0 : index
    %48 = vector.load %arg10[%c0_34, %c0_35] : memref<2x1024xf32, #tpu.memory_space<vmem>>, vector<2x1024xf32>
    %cst_36 = arith.constant dense<0.000000e+00> : vector<2x1xf32>
    %49 = tpu.matmul %48, %27, %cst_36 {dimension_numbers = #tpu.dot_dimension_numbers<[1], [0], [0], [1], [0, 0, 1, 1], [], []>} : vector<2x1024xf32>, vector<1024x1xf32>, vector<2x1xf32> -> vector<2x1xf32>
    %50 = arith.addf %47, %49 : vector<2x1xf32>
    %c0_37 = arith.constant 0 : index
    %c0_38 = arith.constant 0 : index
    %51 = vector.load %arg11[%c0_37, %c0_38] : memref<2x1024xf32, #tpu.memory_space<vmem>>, vector<2x1024xf32>
    %52 = vector.broadcast %45 : vector<1x1024xf32> to vector<2x1024xf32>
    %53 = arith.mulf %51, %52 : vector<2x1024xf32>
    %cst_39 = arith.constant dense<0.000000e+00> : vector<2x1xf32>
    %54 = tpu.matmul %53, %28, %cst_39 {dimension_numbers = #tpu.dot_dimension_numbers<[1], [0], [0], [1], [0, 0, 1, 1], [], []>} : vector<2x1024xf32>, vector<1024x1xf32>, vector<2x1xf32> -> vector<2x1xf32>
    %55 = arith.addf %50, %54 : vector<2x1xf32>
    %c0_40 = arith.constant 0 : index
    %c0_41 = arith.constant 0 : index
    %56 = vector.load %arg12[%c0_40, %c0_41] : memref<2x1xf32, #tpu.memory_space<vmem>>, vector<2x1xf32>
    %57 = arith.addf %55, %56 : vector<2x1xf32>
    %c0_42 = arith.constant 0 : index
    %c0_43 = arith.constant 0 : index
    %c0_44 = arith.constant 0 : index
    %58 = vector.load %arg13[%c0_42, %c0_43, %c0_44] : memref<1x2x1xf32, #tpu.memory_space<vmem>>, vector<1x2x1xf32>
    %59 = vector.shape_cast %58 : vector<1x2x1xf32> to vector<2x1xf32>
    %60 = vector.shape_cast %57 : vector<2x1xf32> to vector<1x2x1xf32>
    tpu.vector_store %arg13[%c0_42, %c0_43, %c0_44], %60 {strides = array<i32>} : memref<1x2x1xf32, #tpu.memory_space<vmem>>, vector<1x2x1xf32>,
    return
  }
  func.func @transform_0(%arg0: i32) -> (i32, i32, i32) {
    %c0_i32 = arith.constant 0 : i32
    %c0_i32_0 = arith.constant 0 : i32
    %c0_i32_1 = arith.constant 0 : i32
    return %arg0, %c0_i32, %c0_i32_0 : i32, i32, i32
  }
  func.func @transform_1(%arg0: i32) -> (i32, i32, i32) {
    %c0_i32 = arith.constant 0 : i32
    %c0_i32_0 = arith.constant 0 : i32
    %c0_i32_1 = arith.constant 0 : i32
    return %arg0, %c0_i32, %c0_i32_0 : i32, i32, i32
  }
  func.func @transform_2(%arg0: i32) -> (i32, i32, i32) {
    %c0_i32 = arith.constant 0 : i32
    %c0_i32_0 = arith.constant 0 : i32
    %c0_i32_1 = arith.constant 0 : i32
    return %arg0, %c0_i32, %c0_i32_0 : i32, i32, i32
  }
  func.func @transform_3(%arg0: i32) -> (i32, i32) {
    %c0_i32 = arith.constant 0 : i32
    %c0_i32_0 = arith.constant 0 : i32
    %c0_i32_1 = arith.constant 0 : i32
    return %c0_i32, %c0_i32_0 : i32, i32
  }
  func.func @transform_4(%arg0: i32) -> (i32, i32) {
    %c0_i32 = arith.constant 0 : i32
    %c0_i32_0 = arith.constant 0 : i32
    %c0_i32_1 = arith.constant 0 : i32
    return %c0_i32, %c0_i32_0 : i32, i32
  }
  func.func @transform_5(%arg0: i32) -> (i32, i32) {
    %c0_i32 = arith.constant 0 : i32
    %c0_i32_0 = arith.constant 0 : i32
    %c0_i32_1 = arith.constant 0 : i32
    return %c0_i32, %c0_i32_0 : i32, i32
  }
  func.func @transform_6(%arg0: i32) -> (i32, i32) {
    %c0_i32 = arith.constant 0 : i32
    %c0_i32_0 = arith.constant 0 : i32
    %c0_i32_1 = arith.constant 0 : i32
    return %c0_i32, %c0_i32_0 : i32, i32
  }
  func.func @transform_7(%arg0: i32) -> (i32, i32) {
    %c0_i32 = arith.constant 0 : i32
    %c0_i32_0 = arith.constant 0 : i32
    %c0_i32_1 = arith.constant 0 : i32
    return %c0_i32, %c0_i32_0 : i32, i32
  }
  func.func @transform_8(%arg0: i32) -> (i32, i32) {
    %c0_i32 = arith.constant 0 : i32
    %c0_i32_0 = arith.constant 0 : i32
    %c0_i32_1 = arith.constant 0 : i32
    return %c0_i32, %c0_i32_0 : i32, i32
  }
  func.func @transform_9(%arg0: i32) -> (i32, i32) {
    %c0_i32 = arith.constant 0 : i32
    %c0_i32_0 = arith.constant 0 : i32
    %c0_i32_1 = arith.constant 0 : i32
    return %c0_i32, %c0_i32_0 : i32, i32
  }
  func.func @transform_10(%arg0: i32) -> (i32, i32) {
    %c0_i32 = arith.constant 0 : i32
    %c0_i32_0 = arith.constant 0 : i32
    %c0_i32_1 = arith.constant 0 : i32
    return %c0_i32, %c0_i32_0 : i32, i32
  }
  func.func @transform_11(%arg0: i32) -> (i32, i32) {
    %c0_i32 = arith.constant 0 : i32
    %c0_i32_0 = arith.constant 0 : i32
    %c0_i32_1 = arith.constant 0 : i32
    return %c0_i32, %c0_i32_0 : i32, i32
  }
  func.func @transform_12(%arg0: i32) -> (i32, i32, i32) {
    %c0_i32 = arith.constant 0 : i32
    %c0_i32_0 = arith.constant 0 : i32
    %c0_i32_1 = arith.constant 0 : i32
    return %arg0, %c0_i32, %c0_i32_0 : i32, i32, i32
  }
}

</mosaic_0001>

<llo_original>
// kernel: clip_classifier_wmap_v6.1
$region0: #{clip_classifier_wmap_v6.1}
  #allocation0 [shape = 'u32[]', space=smem, size = 0x4, offset = 0x4, fixed_abs, tag = 'smem constant byte address 0x4 - core index']
  #allocation1 [shape = 'u32[144,128]{1,0:T(1,128)}', space=vmem, size = 0x12000, scoped, tag = 'internal scratch']
  %s0 = inlined_call_operand.vmem [shape: bf16[2,1024,196], index: 0, kind: input, shape index: {}]
  %s1 = inlined_call_operand.vmem [shape: f32[2,196,4], index: 1, kind: input, shape index: {}]
  %s2 = inlined_call_operand.vmem [shape: bf16[2,1024,1], index: 2, kind: input, shape index: {}]
  %s3 = inlined_call_operand.vmem [shape: f32[1024,8], index: 3, kind: input, shape index: {}]
  %s4 = inlined_call_operand.vmem [shape: f32[4,9], index: 4, kind: input, shape index: {}]
  %s5 = inlined_call_operand.vmem [shape: f32[1,9], index: 5, kind: input, shape index: {}]
  %s6 = inlined_call_operand.vmem [shape: f32[4,128], index: 6, kind: input, shape index: {}]
  %s7 = inlined_call_operand.vmem [shape: f32[128,1024], index: 7, kind: input, shape index: {}]
  %s8 = inlined_call_operand.vmem [shape: f32[2,1024], index: 8, kind: input, shape index: {}]
  %s9 = inlined_call_operand.vmem [shape: f32[2,1024], index: 9, kind: input, shape index: {}]
  %s10 = inlined_call_operand.vmem [shape: f32[2,1024], index: 10, kind: input, shape index: {}]
  %s11 = inlined_call_operand.vmem [shape: f32[2,1], index: 11, kind: input, shape index: {}]
  %s12 = inlined_call_operand.vmem [shape: f32[2,2,1], index: 12, kind: output, shape index: {}]
  %s13 = sld [smem:[#allocation0]]
  $region81: #{clip_classifier_wmap_v6.1} parent=0
    _
  %s15 = ssub.s32 1, %s13
  %s16 = scalar_select 0, %s15, %s13
  loop: start=0, step=1, limit=4
  $region2: #{clip_classifier_wmap_v6.1} parent=0 // loop_pre_header
    _
  $region3: #{clip_classifier_wmap_v6.1} parent=0 // loop_header
    %s18 = sphi 0, %s22
    %p19 = scmp.ge.s32.totalorder %s18, 4
    %s28 = sphi 0, %s30
    %s31 = sphi 0, %s28
    %s32 = sphi 0, %s31
    %s48 = sphi 0, %s32
    %s54 = sphi 0, %s56
    %s57 = sphi 0, %s54
    %s58 = sphi 0, %s57
    %s74 = sphi 0, %s58
    %s80 = sphi 0, %s82
    %s83 = sphi 0, %s80
    %s84 = sphi 0, %s83
    %s100 = sphi 0, %s84
    %s104 = sphi 0, %s104
    %s106 = sphi 0, %s104
    %s107 = sphi 0, %s106
    %s121 = sphi 0, %s107
    %s125 = sphi 0, %s125
    %s127 = sphi 0, %s125
    %s128 = sphi 0, %s127
    %s142 = sphi 0, %s128
    %s146 = sphi 0, %s146
    %s148 = sphi 0, %s146
    %s149 = sphi 0, %s148
    %s163 = sphi 0, %s149
    %s167 = sphi 0, %s167
    %s169 = sphi 0, %s167
    %s170 = sphi 0, %s169
    %s184 = sphi 0, %s170
    %s188 = sphi 0, %s188
    %s190 = sphi 0, %s188
    %s191 = sphi 0, %s190
    %s205 = sphi 0, %s191
    %s209 = sphi 0, %s209
    %s211 = sphi 0, %s209
    %s212 = sphi 0, %s211
    %s226 = sphi 0, %s212
    %s230 = sphi 0, %s230
    %s232 = sphi 0, %s230
    %s233 = sphi 0, %s232
    %s247 = sphi 0, %s233
    %s251 = sphi 0, %s251
    %s253 = sphi 0, %s251
    %s254 = sphi 0, %s253
    %s268 = sphi 0, %s254
    %s272 = sphi 0, %s272
    %s274 = sphi 0, %s272
    %s275 = sphi 0, %s274
    %s289 = sphi 0, %s275
    %s295 = sphi 0, %s297
    %s298 = sphi 0, %s295
    %s299 = sphi 0, %s298
    %s315 = sphi 0, %s299
  $region4: #{clip_classifier_wmap_v6.1} parent=0 // loop_header_branch
    %21 = sbr.rel (%p19) target = $region8
  $region5: #{clip_classifier_wmap_v6.1} parent=0 // loop_body
    %s23 = ssub.s32 %s18, 1
    %s24 = ssub.s32 %s18, 2
    %s25 = sadd.s32 %s18, 1
    %s26 = ssub.s32 %s18, %s25
    %p27 = scmp.eq.s32.totalorder %s26, 0
    %s29 = sadd.s32 %s28, 1
    %s30 = scalar_select %p27, %s28, %s29
    %p33 = pneg %p27
    %p34 = scmp.eq.s32.totalorder %s18, 1
    %p35 = por %p33, %p34
    %p36 = scmp.ne.s32.totalorder %s28, %s31
    %p37 = scmp.eq.s32.totalorder %s18, 0
    %p38 = por %p36, %p37
    %p39 = scmp.ne.s32.totalorder %s28, %s31
    %p40 = scmp.eq.s32.totalorder %s23, 1
    %p41 = por %p39, %p40
    %p42 = scmp.ne.s32.totalorder %s31, %s32
    %p43 = scmp.eq.s32.totalorder %s23, 0
    %p44 = por %p42, %p43
    %p45 = scmp.ne.s32.totalorder %s31, %s32
    %p46 = scmp.eq.s32.totalorder %s24, 1
    %p47 = por %p45, %p46
    %p49 = scmp.ne.s32.totalorder %s32, %s48
    %p50 = scmp.eq.s32.totalorder %s24, 0
    %p51 = por %p49, %p50
    %s52 = ssub.s32 %s18, %s25
    %p53 = scmp.eq.s32.totalorder %s52, 0
    %s55 = sadd.s32 %s54, 1
    %s56 = scalar_select %p53, %s54, %s55
    %p59 = pneg %p53
    %p60 = scmp.eq.s32.totalorder %s18, 1
    %p61 = por %p59, %p60
    %p62 = scmp.ne.s32.totalorder %s54, %s57
    %p63 = scmp.eq.s32.totalorder %s18, 0
    %p64 = por %p62, %p63
    %p65 = scmp.ne.s32.totalorder %s54, %s57
    %p66 = scmp.eq.s32.totalorder %s23, 1
    %p67 = por %p65, %p66
    %p68 = scmp.ne.s32.totalorder %s57, %s58
    %p69 = scmp.eq.s32.totalorder %s23, 0
    %p70 = por %p68, %p69
    %p71 = scmp.ne.s32.totalorder %s57, %s58
    %p72 = scmp.eq.s32.totalorder %s24, 1
    %p73 = por %p71, %p72
    %p75 = scmp.ne.s32.totalorder %s58, %s74
    %p76 = scmp.eq.s32.totalorder %s24, 0
    %p77 = por %p75, %p76
    %s78 = ssub.s32 %s18, %s25
    %p79 = scmp.eq.s32.totalorder %s78, 0
    %s81 = sadd.s32 %s80, 1
    %s82 = scalar_select %p79, %s80, %s81
    %p85 = pneg %p79
    %p86 = scmp.eq.s32.totalorder %s18, 1
    %p87 = por %p85, %p86
    %p88 = scmp.ne.s32.totalorder %s80, %s83
    %p89 = scmp.eq.s32.totalorder %s18, 0
    %p90 = por %p88, %p89
    %p91 = scmp.ne.s32.totalorder %s80, %s83
    %p92 = scmp.eq.s32.totalorder %s23, 1
    %p93 = por %p91, %p92
    %p94 = scmp.ne.s32.totalorder %s83, %s84
    %p95 = scmp.eq.s32.totalorder %s23, 0
    %p96 = por %p94, %p95
    %p97 = scmp.ne.s32.totalorder %s83, %s84
    %p98 = scmp.eq.s32.totalorder %s24, 1
    %p99 = por %p97, %p98
    %p101 = scmp.ne.s32.totalorder %s84, %s100
    %p102 = scmp.eq.s32.totalorder %s24, 0
    %p103 = por %p101, %p102
    %s105 = sadd.s32 %s104, 1
    %p108 = scmp.eq.s32.totalorder %s18, 1
    %p109 = scmp.ne.s32.totalorder %s104, %s106
    %p110 = scmp.eq.s32.totalorder %s18, 0
    %p111 = por %p109, %p110
    %p112 = scmp.ne.s32.totalorder %s104, %s106
    %p113 = scmp.eq.s32.totalorder %s23, 1
    %p114 = por %p112, %p113
    %p115 = scmp.ne.s32.totalorder %s106, %s107
    %p116 = scmp.eq.s32.totalorder %s23, 0
    %p117 = por %p115, %p116
    %p118 = scmp.ne.s32.totalorder %s106, %s107
    %p119 = scmp.eq.s32.totalorder %s24, 1
    %p120 = por %p118, %p119
    %p122 = scmp.ne.s32.totalorder %s107, %s121
    %p123 = scmp.eq.s32.totalorder %s24, 0
    %p124 = por %p122, %p123
    %s126 = sadd.s32 %s125, 1
    %p129 = scmp.eq.s32.totalorder %s18, 1
    %p130 = scmp.ne.s32.totalorder %s125, %s127
    %p131 = scmp.eq.s32.totalorder %s18, 0
    %p132 = por %p130, %p131
    %p133 = scmp.ne.s32.totalorder %s125, %s127
    %p134 = scmp.eq.s32.totalorder %s23, 1
    %p135 = por %p133, %p134
    %p136 = scmp.ne.s32.totalorder %s127, %s128
    %p137 = scmp.eq.s32.totalorder %s23, 0
    %p138 = por %p136, %p137
    %p139 = scmp.ne.s32.totalorder %s127, %s128
    %p140 = scmp.eq.s32.totalorder %s24, 1
    %p141 = por %p139, %p140
    %p143 = scmp.ne.s32.totalorder %s128, %s142
    %p144 = scmp.eq.s32.totalorder %s24, 0
    %p145 = por %p143, %p144
    %s147 = sadd.s32 %s146, 1
    %p150 = scmp.eq.s32.totalorder %s18, 1
    %p151 = scmp.ne.s32.totalorder %s146, %s148
    %p152 = scmp.eq.s32.totalorder %s18, 0
    %p153 = por %p151, %p152
    %p154 = scmp.ne.s32.totalorder %s146, %s148
    %p155 = scmp.eq.s32.totalorder %s23, 1
    %p156 = por %p154, %p155
    %p157 = scmp.ne.s32.totalorder %s148, %s149
    %p158 = scmp.eq.s32.totalorder %s23, 0
    %p159 = por %p157, %p158
    %p160 = scmp.ne.s32.totalorder %s148, %s149
    %p161 = scmp.eq.s32.totalorder %s24, 1
    %p162 = por %p160, %p161
    %p164 = scmp.ne.s32.totalorder %s149, %s163
    %p165 = scmp.eq.s32.totalorder %s24, 0
    %p166 = por %p164, %p165
    %s168 = sadd.s32 %s167, 1
    %p171 = scmp.eq.s32.totalorder %s18, 1
    %p172 = scmp.ne.s32.totalorder %s167, %s169
    %p173 = scmp.eq.s32.totalorder %s18, 0
    %p174 = por %p172, %p173
    %p175 = scmp.ne.s32.totalorder %s167, %s169
    %p176 = scmp.eq.s32.totalorder %s23, 1
    %p177 = por %p175, %p176
    %p178 = scmp.ne.s32.totalorder %s169, %s170
    %p179 = scmp.eq.s32.totalorder %s23, 0
    %p180 = por %p178, %p179
    %p181 = scmp.ne.s32.totalorder %s169, %s170
    %p182 = scmp.eq.s32.totalorder %s24, 1
    %p183 = por %p181, %p182
    %p185 = scmp.ne.s32.totalorder %s170, %s184
    %p186 = scmp.eq.s32.totalorder %s24, 0
    %p187 = por %p185, %p186
    %s189 = sadd.s32 %s188, 1
    %p192 = scmp.eq.s32.totalorder %s18, 1
    %p193 = scmp.ne.s32.totalorder %s188, %s190
    %p194 = scmp.eq.s32.totalorder %s18, 0
    %p195 = por %p193, %p194
    %p196 = scmp.ne.s32.totalorder %s188, %s190
    %p197 = scmp.eq.s32.totalorder %s23, 1
    %p198 = por %p196, %p197
    %p199 = scmp.ne.s32.totalorder %s190, %s191
    %p200 = scmp.eq.s32.totalorder %s23, 0
    %p201 = por %p199, %p200
    %p202 = scmp.ne.s32.totalorder %s190, %s191
    %p203 = scmp.eq.s32.totalorder %s24, 1
    %p204 = por %p202, %p203
    %p206 = scmp.ne.s32.totalorder %s191, %s205
    %p207 = scmp.eq.s32.totalorder %s24, 0
    %p208 = por %p206, %p207
    %s210 = sadd.s32 %s209, 1
    %p213 = scmp.eq.s32.totalorder %s18, 1
    %p214 = scmp.ne.s32.totalorder %s209, %s211
    %p215 = scmp.eq.s32.totalorder %s18, 0
    %p216 = por %p214, %p215
    %p217 = scmp.ne.s32.totalorder %s209, %s211
    %p218 = scmp.eq.s32.totalorder %s23, 1
    %p219 = por %p217, %p218
    %p220 = scmp.ne.s32.totalorder %s211, %s212
    %p221 = scmp.eq.s32.totalorder %s23, 0
    %p222 = por %p220, %p221
    %p223 = scmp.ne.s32.totalorder %s211, %s212
    %p224 = scmp.eq.s32.totalorder %s24, 1
    %p225 = por %p223, %p224
    %p227 = scmp.ne.s32.totalorder %s212, %s226
    %p228 = scmp.eq.s32.totalorder %s24, 0
    %p229 = por %p227, %p228
    %s231 = sadd.s32 %s230, 1
    %p234 = scmp.eq.s32.totalorder %s18, 1
    %p235 = scmp.ne.s32.totalorder %s230, %s232
    %p236 = scmp.eq.s32.totalorder %s18, 0
    %p237 = por %p235, %p236
    %p238 = scmp.ne.s32.totalorder %s230, %s232
    %p239 = scmp.eq.s32.totalorder %s23, 1
    %p240 = por %p238, %p239
    %p241 = scmp.ne.s32.totalorder %s232, %s233
    %p242 = scmp.eq.s32.totalorder %s23, 0
    %p243 = por %p241, %p242
    %p244 = scmp.ne.s32.totalorder %s232, %s233
    %p245 = scmp.eq.s32.totalorder %s24, 1
    %p246 = por %p244, %p245
    %p248 = scmp.ne.s32.totalorder %s233, %s247
    %p249 = scmp.eq.s32.totalorder %s24, 0
    %p250 = por %p248, %p249
    %s252 = sadd.s32 %s251, 1
    %p255 = scmp.eq.s32.totalorder %s18, 1
    %p256 = scmp.ne.s32.totalorder %s251, %s253
    %p257 = scmp.eq.s32.totalorder %s18, 0
    %p258 = por %p256, %p257
    %p259 = scmp.ne.s32.totalorder %s251, %s253
    %p260 = scmp.eq.s32.totalorder %s23, 1
    %p261 = por %p259, %p260
    %p262 = scmp.ne.s32.totalorder %s253, %s254
    %p263 = scmp.eq.s32.totalorder %s23, 0
    %p264 = por %p262, %p263
    %p265 = scmp.ne.s32.totalorder %s253, %s254
    %p266 = scmp.eq.s32.totalorder %s24, 1
    %p267 = por %p265, %p266
    %p269 = scmp.ne.s32.totalorder %s254, %s268
    %p270 = scmp.eq.s32.totalorder %s24, 0
    %p271 = por %p269, %p270
    %s273 = sadd.s32 %s272, 1
    %p276 = scmp.eq.s32.totalorder %s18, 1
    %p277 = scmp.ne.s32.totalorder %s272, %s274
    %p278 = scmp.eq.s32.totalorder %s18, 0
    %p279 = por %p277, %p278
    %p280 = scmp.ne.s32.totalorder %s272, %s274
    %p281 = scmp.eq.s32.totalorder %s23, 1
    %p282 = por %p280, %p281
    %p283 = scmp.ne.s32.totalorder %s274, %s275
    %p284 = scmp.eq.s32.totalorder %s23, 0
    %p285 = por %p283, %p284
    %p286 = scmp.ne.s32.totalorder %s274, %s275
    %p287 = scmp.eq.s32.totalorder %s24, 1
    %p288 = por %p286, %p287
    %p290 = scmp.ne.s32.totalorder %s275, %s289
    %p291 = scmp.eq.s32.totalorder %s24, 0
    %p292 = por %p290, %p291
    %s293 = ssub.s32 %s18, %s25
    %p294 = scmp.eq.s32.totalorder %s293, 0
    %s296 = sadd.s32 %s295, 1
    %s297 = scalar_select %p294, %s295, %s296
    %p300 = pneg %p294
    %p301 = scmp.eq.s32.totalorder %s18, 1
    %p302 = por %p300, %p301
    %p303 = scmp.ne.s32.totalorder %s295, %s298
    %p304 = scmp.eq.s32.totalorder %s18, 0
    %p305 = por %p303, %p304
    %p306 = scmp.ne.s32.totalorder %s295, %s298
    %p307 = scmp.eq.s32.totalorder %s23, 1
    %p308 = por %p306, %p307
    %p309 = scmp.ne.s32.totalorder %s298, %s299
    %p310 = scmp.eq.s32.totalorder %s23, 0
    %p311 = por %p309, %p310
    %p312 = scmp.ne.s32.totalorder %s298, %s299
    %p313 = scmp.eq.s32.totalorder %s24, 1
    %p314 = por %p312, %p313
    %p316 = scmp.ne.s32.totalorder %s299, %s315
    %p317 = scmp.eq.s32.totalorder %s24, 0
    %p318 = por %p316, %p317
    %p319 = scmp.le.s32.totalorder 1, %s18
    %p320 = scmp.lt.s32.totalorder %s18, 3
    %p321 = pnand %p319, %p320
    %p322 = pneg %p321
    // Predicated region
    $region9: #{clip_classifier_wmap_v6.1} parent=5 // pred_check
      _
    $region10: #{clip_classifier_wmap_v6.1} parent=5 // pred_check_branch
      %324 = sbr.rel (%p321) target = $region12
    $region11: #{clip_classifier_wmap_v6.1} parent=5 // pred_region
      %s325 = ssub.s32 %s18, 1
      // Predicated region
      $region13: #{clip_classifier_wmap_v6.1} parent=11 // pred_check
        %p326 = pneg %p117
      $region14: #{clip_classifier_wmap_v6.1} parent=11 // pred_check_branch
        %328 = sbr.rel (%p326) target = $region16
      $region15: #{clip_classifier_wmap_v6.1} parent=11 // pred_region
        _
      $region16: #{clip_classifier_wmap_v6.1} parent=11 // pred_fallthru
        _
      // Predicated region
      $region17: #{clip_classifier_wmap_v6.1} parent=11 // pred_check
        %p329 = pneg %p138
      $region18: #{clip_classifier_wmap_v6.1} parent=11 // pred_check_branch
        %331 = sbr.rel (%p329) target = $region20
      $region19: #{clip_classifier_wmap_v6.1} parent=11 // pred_region
        _
      $region20: #{clip_classifier_wmap_v6.1} parent=11 // pred_fallthru
        _
      // Predicated region
      $region21: #{clip_classifier_wmap_v6.1} parent=11 // pred_check
        %p332 = pneg %p159
      $region22: #{clip_classifier_wmap_v6.1} parent=11 // pred_check_branch
        %334 = sbr.rel (%p332) target = $region24
      $region23: #{clip_classifier_wmap_v6.1} parent=11 // pred_region
        _
      $region24: #{clip_classifier_wmap_v6.1} parent=11 // pred_fallthru
        _
      // Predicated region
      $region25: #{clip_classifier_wmap_v6.1} parent=11 // pred_check
        %p335 = pneg %p180
      $region26: #{clip_classifier_wmap_v6.1} parent=11 // pred_check_branch
        %337 = sbr.rel (%p335) target = $region28
      $region27: #{clip_classifier_wmap_v6.1} parent=11 // pred_region
        _
      $region28: #{clip_classifier_wmap_v6.1} parent=11 // pred_fallthru
        _
      // Predicated region
      $region29: #{clip_classifier_wmap_v6.1} parent=11 // pred_check
        %p338 = pneg %p201
      $region30: #{clip_classifier_wmap_v6.1} parent=11 // pred_check_branch
        %340 = sbr.rel (%p338) target = $region32
      $region31: #{clip_classifier_wmap_v6.1} parent=11 // pred_region
        _
      $region32: #{clip_classifier_wmap_v6.1} parent=11 // pred_fallthru
        _
      // Predicated region
      $region33: #{clip_classifier_wmap_v6.1} parent=11 // pred_check
        %p341 = pneg %p222
      $region34: #{clip_classifier_wmap_v6.1} parent=11 // pred_check_branch
        %343 = sbr.rel (%p341) target = $region36
      $region35: #{clip_classifier_wmap_v6.1} parent=11 // pred_region
        _
      $region36: #{clip_classifier_wmap_v6.1} parent=11 // pred_fallthru
        _
      // Predicated region
      $region37: #{clip_classifier_wmap_v6.1} parent=11 // pred_check
        %p344 = pneg %p243
      $region38: #{clip_classifier_wmap_v6.1} parent=11 // pred_check_branch
        %346 = sbr.rel (%p344) target = $region40
      $region39: #{clip_classifier_wmap_v6.1} parent=11 // pred_region
        _
      $region40: #{clip_classifier_wmap_v6.1} parent=11 // pred_fallthru
        _
      // Predicated region
      $region41: #{clip_classifier_wmap_v6.1} parent=11 // pred_check
        %p347 = pneg %p264
      $region42: #{clip_classifier_wmap_v6.1} parent=11 // pred_check_branch
        %349 = sbr.rel (%p347) target = $region44
      $region43: #{clip_classifier_wmap_v6.1} parent=11 // pred_region
        _
      $region44: #{clip_classifier_wmap_v6.1} parent=11 // pred_fallthru
        _
      // Predicated region
      $region45: #{clip_classifier_wmap_v6.1} parent=11 // pred_check
        %p350 = pneg %p285
      $region46: #{clip_classifier_wmap_v6.1} parent=11 // pred_check_branch
        %352 = sbr.rel (%p350) target = $region48
      $region47: #{clip_classifier_wmap_v6.1} parent=11 // pred_region
        _
      $region48: #{clip_classifier_wmap_v6.1} parent=11 // pred_fallthru
        _
    $region12: #{clip_classifier_wmap_v6.1} parent=5 // pred_fallthru
      _
    %p353 = scmp.lt.s32.totalorder %s18, 2
    // Predicated region
    $region49: #{clip_classifier_wmap_v6.1} parent=5 // pred_check
      %p354 = pneg %p353
    $region50: #{clip_classifier_wmap_v6.1} parent=5 // pred_check_branch
      %356 = sbr.rel (%p354) target = $region52
    $region51: #{clip_classifier_wmap_v6.1} parent=5 // pred_region
      // Predicated region
      $region53: #{clip_classifier_wmap_v6.1} parent=51 // pred_check
        %p357 = pneg %p38
      $region54: #{clip_classifier_wmap_v6.1} parent=51 // pred_check_branch
        %359 = sbr.rel (%p357) target = $region56
      $region55: #{clip_classifier_wmap_v6.1} parent=51 // pred_region
        %p360 = scmp.lt.s32.totalorder %s18, 1
        %s361 = scalar_select %p360, %s18, 1
        %s362 = smul.addr %s361, 256
        %s363 = smul.addr %s362, 4
        %s364 = scalar_lea.vmem %s0, %s363
      $region56: #{clip_classifier_wmap_v6.1} parent=51 // pred_fallthru
        _
      // Predicated region
      $region57: #{clip_classifier_wmap_v6.1} parent=51 // pred_check
        %p365 = pneg %p64
      $region58: #{clip_classifier_wmap_v6.1} parent=51 // pred_check_branch
        %367 = sbr.rel (%p365) target = $region60
      $region59: #{clip_classifier_wmap_v6.1} parent=51 // pred_region
        %p368 = scmp.lt.s32.totalorder %s18, 1
        %s369 = scalar_select %p368, %s18, 1
        %s370 = smul.addr %s369, 25
        %s371 = smul.addr %s370, 8
        %s372 = scalar_lea.vmem %s1, %s371
      $region60: #{clip_classifier_wmap_v6.1} parent=51 // pred_fallthru
        _
      // Predicated region
      $region61: #{clip_classifier_wmap_v6.1} parent=51 // pred_check
        %p373 = pneg %p90
      $region62: #{clip_classifier_wmap_v6.1} parent=51 // pred_check_branch
        %375 = sbr.rel (%p373) target = $region64
      $region63: #{clip_classifier_wmap_v6.1} parent=51 // pred_region
        %p376 = scmp.lt.s32.totalorder %s18, 1
        %s377 = scalar_select %p376, %s18, 1
        %s378 = smul.addr %s377, 128
        %s379 = smul.addr %s378, 4
        %s380 = scalar_lea.vmem %s2, %s379
      $region64: #{clip_classifier_wmap_v6.1} parent=51 // pred_fallthru
        _
    $region52: #{clip_classifier_wmap_v6.1} parent=5 // pred_fallthru
      _
    %p381 = scmp.le.s32.totalorder 1, %s18
    %p382 = scmp.lt.s32.totalorder %s18, 3
    %p383 = pnand %p381, %p382
    %p384 = pneg %p383
    // Predicated region
    $region65: #{clip_classifier_wmap_v6.1} parent=5 // pred_check
      _
    $region66: #{clip_classifier_wmap_v6.1} parent=5 // pred_check_branch
      %386 = sbr.rel (%p383) target = $region68
    $region67: #{clip_classifier_wmap_v6.1} parent=5 // pred_region
      %s387 = ssub.s32 %s18, 1
      %p388 = scmp.lt.s32.totalorder %s23, 1
      %s389 = scalar_select %p388, %s23, 1
      %s390 = smul.addr %s389, 256
      %s391 = smul.addr %s390, 4
      %s392 = scalar_lea.vmem %s0, %s391
      %p393 = pneg %p44
      %p394 = pneg %p41
      %p395 = scmp.lt.s32.totalorder %s23, 1
      %s396 = scalar_select %p395, %s23, 1
      %s397 = smul.addr %s396, 25
      %s398 = smul.addr %s397, 8
      %s399 = scalar_lea.vmem %s1, %s398
      %p400 = pneg %p70
      %p401 = pneg %p67
      %p402 = scmp.lt.s32.totalorder %s23, 1
      %s403 = scalar_select %p402, %s23, 1
      %s404 = smul.addr %s403, 128
      %s405 = smul.addr %s404, 4
      %s406 = scalar_lea.vmem %s2, %s405
      %p407 = pneg %p96
      %p408 = pneg %p93
      %p409 = pneg %p117
      %p410 = pneg %p114
      %p411 = pneg %p138
      %p412 = pneg %p135
      %p413 = pneg %p159
      %p414 = pneg %p156
      %p415 = pneg %p180
      %p416 = pneg %p177
      %p417 = pneg %p201
      %p418 = pneg %p198
      %p419 = pneg %p222
      %p420 = pneg %p219
      %p421 = pneg %p243
      %p422 = pneg %p240
      %p423 = pneg %p264
      %p424 = pneg %p261
      %p425 = pneg %p285
      %p426 = pneg %p282
      %p427 = pneg %p311
      %p428 = pneg %p308
      %p429 = scmp.lt.s32.totalorder %s23, 1
      %s430 = scalar_select %p429, %s23, 1
      %s431 = smul.addr %s430, 2
      %s432 = scalar_lea.vmem %s12, %s431
      %p433 = scmp.lt.s32.totalorder %s23, 1
      %s434 = scalar_select %p433, %s23, 1
      %s435 = smul.addr %s434, 256
      %s436 = smul.addr %s435, 4
      %s437 = scalar_lea.vmem %s0, %s436
      %p438 = scmp.lt.s32.totalorder %s23, 1
      %s439 = scalar_select %p438, %s23, 1
      %s440 = smul.addr %s439, 25
      %s441 = smul.addr %s440, 8
      %s442 = scalar_lea.vmem %s1, %s441
      %p443 = scmp.lt.s32.totalorder %s23, 1
      %s444 = scalar_select %p443, %s23, 1
      %s445 = smul.addr %s444, 128
      %s446 = smul.addr %s445, 4
      %s447 = scalar_lea.vmem %s2, %s446
      %p448 = scmp.lt.s32.totalorder %s23, 1
      %s449 = scalar_select %p448, %s23, 1
      %s450 = smul.addr %s449, 2
      %s451 = scalar_lea.vmem %s12, %s450
      %v452 = vld [vmem:[%s437] sm:$0xff]
      %v453 = vld [vmem:[%s437 + $0x8] sm:$0xff]
      %v454 = vld [vmem:[%s437 + $0x10] sm:$0xff]
      %v455 = vld [vmem:[%s437 + $0x18] sm:$0xff]
      %v456 = vld [vmem:[%s437 + $0x20] sm:$0xff]
      %v457 = vld [vmem:[%s437 + $0x28] sm:$0xff]
      %v458 = vld [vmem:[%s437 + $0x30] sm:$0xff]
      %v459 = vld [vmem:[%s437 + $0x38] sm:$0xff]
      %v460 = vld [vmem:[%s437 + $0x40] sm:$0xff]
      %v461 = vld [vmem:[%s437 + $0x48] sm:$0xff]
      %v462 = vld [vmem:[%s437 + $0x50] sm:$0xff]
      %v463 = vld [vmem:[%s437 + $0x58] sm:$0xff]
      %v464 = vld [vmem:[%s437 + $0x60] sm:$0xff]
      %v465 = vld [vmem:[%s437 + $0x68] sm:$0xff]
      %v466 = vld [vmem:[%s437 + $0x70] sm:$0xff]
      %v467 = vld [vmem:[%s437 + $0x78] sm:$0xff]
      %v468 = vld [vmem:[%s437 + $0x80] sm:$0xff]
      %v469 = vld [vmem:[%s437 + $0x88] sm:$0xff]
      %v470 = vld [vmem:[%s437 + $0x90] sm:$0xff]
      %v471 = vld [vmem:[%s437 + $0x98] sm:$0xff]
      %v472 = vld [vmem:[%s437 + $0xa0] sm:$0xff]
      %v473 = vld [vmem:[%s437 + $0xa8] sm:$0xff]
      %v474 = vld [vmem:[%s437 + $0xb0] sm:$0xff]
      %v475 = vld [vmem:[%s437 + $0xb8] sm:$0xff]
      %v476 = vld [vmem:[%s437 + $0xc0] sm:$0xff]
      %v477 = vld [vmem:[%s437 + $0xc8] sm:$0xff]
      %v478 = vld [vmem:[%s437 + $0xd0] sm:$0xff]
      %v479 = vld [vmem:[%s437 + $0xd8] sm:$0xff]
      %v480 = vld [vmem:[%s437 + $0xe0] sm:$0xff]
      %v481 = vld [vmem:[%s437 + $0xe8] sm:$0xff]
      %v482 = vld [vmem:[%s437 + $0xf0] sm:$0xff]
      %v483 = vld [vmem:[%s437 + $0xf8] sm:$0xff]
      %v484 = vld [vmem:[%s437 + $0x100] sm:$0xff]
      %v485 = vld [vmem:[%s437 + $0x108] sm:$0xff]
      %v486 = vld [vmem:[%s437 + $0x110] sm:$0xff]
      %v487 = vld [vmem:[%s437 + $0x118] sm:$0xff]
      %v488 = vld [vmem:[%s437 + $0x120] sm:$0xff]
      %v489 = vld [vmem:[%s437 + $0x128] sm:$0xff]
      %v490 = vld [vmem:[%s437 + $0x130] sm:$0xff]
      %v491 = vld [vmem:[%s437 + $0x138] sm:$0xff]
      %v492 = vld [vmem:[%s437 + $0x140] sm:$0xff]
      %v493 = vld [vmem:[%s437 + $0x148] sm:$0xff]
      %v494 = vld [vmem:[%s437 + $0x150] sm:$0xff]
      %v495 = vld [vmem:[%s437 + $0x158] sm:$0xff]
      %v496 = vld [vmem:[%s437 + $0x160] sm:$0xff]
      %v497 = vld [vmem:[%s437 + $0x168] sm:$0xff]
      %v498 = vld [vmem:[%s437 + $0x170] sm:$0xff]
      %v499 = vld [vmem:[%s437 + $0x178] sm:$0xff]
      %v500 = vld [vmem:[%s437 + $0x180] sm:$0xff]
      %v501 = vld [vmem:[%s437 + $0x188] sm:$0xff]
      %v502 = vld [vmem:[%s437 + $0x190] sm:$0xff]
      %v503 = vld [vmem:[%s437 + $0x198] sm:$0xff]
      %v504 = vld [vmem:[%s437 + $0x1a0] sm:$0xff]
      %v505 = vld [vmem:[%s437 + $0x1a8] sm:$0xff]
      %v506 = vld [vmem:[%s437 + $0x1b0] sm:$0xff]
      %v507 = vld [vmem:[%s437 + $0x1b8] sm:$0xff]
      %v508 = vld [vmem:[%s437 + $0x1c0] sm:$0xff]
      %v509 = vld [vmem:[%s437 + $0x1c8] sm:$0xff]
      %v510 = vld [vmem:[%s437 + $0x1d0] sm:$0xff]
      %v511 = vld [vmem:[%s437 + $0x1d8] sm:$0xff]
      %v512 = vld [vmem:[%s437 + $0x1e0] sm:$0xff]
      %v513 = vld [vmem:[%s437 + $0x1e8] sm:$0xff]
      %v514 = vld [vmem:[%s437 + $0x1f0] sm:$0xff]
      %v515 = vld [vmem:[%s437 + $0x1f8] sm:$0xff]
      %v516 = vld [vmem:[%s437 + $0x200] sm:$0xff]
      %v517 = vld [vmem:[%s437 + $0x208] sm:$0xff]
      %v518 = vld [vmem:[%s437 + $0x210] sm:$0xff]
      %v519 = vld [vmem:[%s437 + $0x218] sm:$0xff]
      %v520 = vld [vmem:[%s437 + $0x220] sm:$0xff]
      %v521 = vld [vmem:[%s437 + $0x228] sm:$0xff]
      %v522 = vld [vmem:[%s437 + $0x230] sm:$0xff]
      %v523 = vld [vmem:[%s437 + $0x238] sm:$0xff]
      %v524 = vld [vmem:[%s437 + $0x240] sm:$0xff]
      %v525 = vld [vmem:[%s437 + $0x248] sm:$0xff]
      %v526 = vld [vmem:[%s437 + $0x250] sm:$0xff]
      %v527 = vld [vmem:[%s437 + $0x258] sm:$0xff]
      %v528 = vld [vmem:[%s437 + $0x260] sm:$0xff]
      %v529 = vld [vmem:[%s437 + $0x268] sm:$0xff]
      %v530 = vld [vmem:[%s437 + $0x270] sm:$0xff]
      %v531 = vld [vmem:[%s437 + $0x278] sm:$0xff]
      %v532 = vld [vmem:[%s437 + $0x280] sm:$0xff]
      %v533 = vld [vmem:[%s437 + $0x288] sm:$0xff]
      %v534 = vld [vmem:[%s437 + $0x290] sm:$0xff]
      %v535 = vld [vmem:[%s437 + $0x298] sm:$0xff]
      %v536 = vld [vmem:[%s437 + $0x2a0] sm:$0xff]
      %v537 = vld [vmem:[%s437 + $0x2a8] sm:$0xff]
      %v538 = vld [vmem:[%s437 + $0x2b0] sm:$0xff]
      %v539 = vld [vmem:[%s437 + $0x2b8] sm:$0xff]
      %v540 = vld [vmem:[%s437 + $0x2c0] sm:$0xff]
      %v541 = vld [vmem:[%s437 + $0x2c8] sm:$0xff]
      %v542 = vld [vmem:[%s437 + $0x2d0] sm:$0xff]
      %v543 = vld [vmem:[%s437 + $0x2d8] sm:$0xff]
      %v544 = vld [vmem:[%s437 + $0x2e0] sm:$0xff]
      %v545 = vld [vmem:[%s437 + $0x2e8] sm:$0xff]
      %v546 = vld [vmem:[%s437 + $0x2f0] sm:$0xff]
      %v547 = vld [vmem:[%s437 + $0x2f8] sm:$0xff]
      %v548 = vld [vmem:[%s437 + $0x300] sm:$0xff]
      %v549 = vld [vmem:[%s437 + $0x308] sm:$0xff]
      %v550 = vld [vmem:[%s437 + $0x310] sm:$0xff]
      %v551 = vld [vmem:[%s437 + $0x318] sm:$0xff]
      %v552 = vld [vmem:[%s437 + $0x320] sm:$0xff]
      %v553 = vld [vmem:[%s437 + $0x328] sm:$0xff]
      %v554 = vld [vmem:[%s437 + $0x330] sm:$0xff]
      %v555 = vld [vmem:[%s437 + $0x338] sm:$0xff]
      %v556 = vld [vmem:[%s437 + $0x340] sm:$0xff]
      %v557 = vld [vmem:[%s437 + $0x348] sm:$0xff]
      %v558 = vld [vmem:[%s437 + $0x350] sm:$0xff]
      %v559 = vld [vmem:[%s437 + $0x358] sm:$0xff]
      %v560 = vld [vmem:[%s437 + $0x360] sm:$0xff]
      %v561 = vld [vmem:[%s437 + $0x368] sm:$0xff]
      %v562 = vld [vmem:[%s437 + $0x370] sm:$0xff]
      %v563 = vld [vmem:[%s437 + $0x378] sm:$0xff]
      %v564 = vld [vmem:[%s437 + $0x380] sm:$0xff]
      %v565 = vld [vmem:[%s437 + $0x388] sm:$0xff]
      %v566 = vld [vmem:[%s437 + $0x390] sm:$0xff]
      %v567 = vld [vmem:[%s437 + $0x398] sm:$0xff]
      %v568 = vld [vmem:[%s437 + $0x3a0] sm:$0xff]
      %v569 = vld [vmem:[%s437 + $0x3a8] sm:$0xff]
      %v570 = vld [vmem:[%s437 + $0x3b0] sm:$0xff]
      %v571 = vld [vmem:[%s437 + $0x3b8] sm:$0xff]
      %v572 = vld [vmem:[%s437 + $0x3c0] sm:$0xff]
      %v573 = vld [vmem:[%s437 + $0x3c8] sm:$0xff]
      %v574 = vld [vmem:[%s437 + $0x3d0] sm:$0xff]
      %v575 = vld [vmem:[%s437 + $0x3d8] sm:$0xff]
      %v576 = vld [vmem:[%s437 + $0x3e0] sm:$0xff]
      %v577 = vld [vmem:[%s437 + $0x3e8] sm:$0xff]
      %v578 = vld [vmem:[%s437 + $0x3f0] sm:$0xff]
      %v579 = vld [vmem:[%s437 + $0x3f8] sm:$0xff]
      %v580 = vunpack.c.l.bf16 %v452
      %v581 = vunpack.c.h.bf16 %v452
      %v582 = vunpack.c.l.bf16 %v453
      %v583 = vunpack.c.h.bf16 %v453
      %v584 = vunpack.c.l.bf16 %v454
      %v585 = vunpack.c.h.bf16 %v454
      %v586 = vunpack.c.l.bf16 %v455
      %v587 = vunpack.c.h.bf16 %v455
      %v588 = vunpack.c.l.bf16 %v456
      %v589 = vunpack.c.h.bf16 %v456
      %v590 = vunpack.c.l.bf16 %v457
      %v591 = vunpack.c.h.bf16 %v457
      %v592 = vunpack.c.l.bf16 %v458
      %v593 = vunpack.c.h.bf16 %v458
      %v594 = vunpack.c.l.bf16 %v459
      %v595 = vunpack.c.h.bf16 %v459
      %v596 = vunpack.c.l.bf16 %v460
      %v597 = vunpack.c.h.bf16 %v460
      %v598 = vunpack.c.l.bf16 %v461
      %v599 = vunpack.c.h.bf16 %v461
      %v600 = vunpack.c.l.bf16 %v462
      %v601 = vunpack.c.h.bf16 %v462
      %v602 = vunpack.c.l.bf16 %v463
      %v603 = vunpack.c.h.bf16 %v463
      %v604 = vunpack.c.l.bf16 %v464
      %v605 = vunpack.c.h.bf16 %v464
      %v606 = vunpack.c.l.bf16 %v465
      %v607 = vunpack.c.h.bf16 %v465
      %v608 = vunpack.c.l.bf16 %v466
      %v609 = vunpack.c.h.bf16 %v466
      %v610 = vunpack.c.l.bf16 %v467
      %v611 = vunpack.c.h.bf16 %v467
      %v612 = vunpack.c.l.bf16 %v468
      %v613 = vunpack.c.h.bf16 %v468
      %v614 = vunpack.c.l.bf16 %v469
      %v615 = vunpack.c.h.bf16 %v469
      %v616 = vunpack.c.l.bf16 %v470
      %v617 = vunpack.c.h.bf16 %v470
      %v618 = vunpack.c.l.bf16 %v471
      %v619 = vunpack.c.h.bf16 %v471
      %v620 = vunpack.c.l.bf16 %v472
      %v621 = vunpack.c.h.bf16 %v472
      %v622 = vunpack.c.l.bf16 %v473
      %v623 = vunpack.c.h.bf16 %v473
      %v624 = vunpack.c.l.bf16 %v474
      %v625 = vunpack.c.h.bf16 %v474
      %v626 = vunpack.c.l.bf16 %v475
      %v627 = vunpack.c.h.bf16 %v475
      %v628 = vunpack.c.l.bf16 %v476
      %v629 = vunpack.c.h.bf16 %v476
      %v630 = vunpack.c.l.bf16 %v477
      %v631 = vunpack.c.h.bf16 %v477
      %v632 = vunpack.c.l.bf16 %v478
      %v633 = vunpack.c.h.bf16 %v478
      %v634 = vunpack.c.l.bf16 %v479
      %v635 = vunpack.c.h.bf16 %v479
      %v636 = vunpack.c.l.bf16 %v480
      %v637 = vunpack.c.h.bf16 %v480
      %v638 = vunpack.c.l.bf16 %v481
      %v639 = vunpack.c.h.bf16 %v481
      %v640 = vunpack.c.l.bf16 %v482
      %v641 = vunpack.c.h.bf16 %v482
      %v642 = vunpack.c.l.bf16 %v483
      %v643 = vunpack.c.h.bf16 %v483
      %v644 = vunpack.c.l.bf16 %v484
      %v645 = vunpack.c.h.bf16 %v484
      %v646 = vunpack.c.l.bf16 %v485
      %v647 = vunpack.c.h.bf16 %v485
      %v648 = vunpack.c.l.bf16 %v486
      %v649 = vunpack.c.h.bf16 %v486
      %v650 = vunpack.c.l.bf16 %v487
      %v651 = vunpack.c.h.bf16 %v487
      %v652 = vunpack.c.l.bf16 %v488
      %v653 = vunpack.c.h.bf16 %v488
      %v654 = vunpack.c.l.bf16 %v489
      %v655 = vunpack.c.h.bf16 %v489
      %v656 = vunpack.c.l.bf16 %v490
      %v657 = vunpack.c.h.bf16 %v490
      %v658 = vunpack.c.l.bf16 %v491
      %v659 = vunpack.c.h.bf16 %v491
      %v660 = vunpack.c.l.bf16 %v492
      %v661 = vunpack.c.h.bf16 %v492
      %v662 = vunpack.c.l.bf16 %v493
      %v663 = vunpack.c.h.bf16 %v493
      %v664 = vunpack.c.l.bf16 %v494
      %v665 = vunpack.c.h.bf16 %v494
      %v666 = vunpack.c.l.bf16 %v495
      %v667 = vunpack.c.h.bf16 %v495
      %v668 = vunpack.c.l.bf16 %v496
      %v669 = vunpack.c.h.bf16 %v496
      %v670 = vunpack.c.l.bf16 %v497
      %v671 = vunpack.c.h.bf16 %v497
      %v672 = vunpack.c.l.bf16 %v498
      %v673 = vunpack.c.h.bf16 %v498
      %v674 = vunpack.c.l.bf16 %v499
      %v675 = vunpack.c.h.bf16 %v499
      %v676 = vunpack.c.l.bf16 %v500
      %v677 = vunpack.c.h.bf16 %v500
      %v678 = vunpack.c.l.bf16 %v501
      %v679 = vunpack.c.h.bf16 %v501
      %v680 = vunpack.c.l.bf16 %v502
      %v681 = vunpack.c.h.bf16 %v502
      %v682 = vunpack.c.l.bf16 %v503
      %v683 = vunpack.c.h.bf16 %v503
      %v684 = vunpack.c.l.bf16 %v504
      %v685 = vunpack.c.h.bf16 %v504
      %v686 = vunpack.c.l.bf16 %v505
      %v687 = vunpack.c.h.bf16 %v505
      %v688 = vunpack.c.l.bf16 %v506
      %v689 = vunpack.c.h.bf16 %v506
      %v690 = vunpack.c.l.bf16 %v507
      %v691 = vunpack.c.h.bf16 %v507
      %v692 = vunpack.c.l.bf16 %v508
      %v693 = vunpack.c.h.bf16 %v508
      %v694 = vunpack.c.l.bf16 %v509
      %v695 = vunpack.c.h.bf16 %v509
      %v696 = vunpack.c.l.bf16 %v510
      %v697 = vunpack.c.h.bf16 %v510
      %v698 = vunpack.c.l.bf16 %v511
      %v699 = vunpack.c.h.bf16 %v511
      %v700 = vunpack.c.l.bf16 %v512
      %v701 = vunpack.c.h.bf16 %v512
      %v702 = vunpack.c.l.bf16 %v513
      %v703 = vunpack.c.h.bf16 %v513
      %v704 = vunpack.c.l.bf16 %v514
      %v705 = vunpack.c.h.bf16 %v514
      %v706 = vunpack.c.l.bf16 %v515
      %v707 = vunpack.c.h.bf16 %v515
      %v708 = vunpack.c.l.bf16 %v516
      %v709 = vunpack.c.h.bf16 %v516
      %v710 = vunpack.c.l.bf16 %v517
      %v711 = vunpack.c.h.bf16 %v517
      %v712 = vunpack.c.l.bf16 %v518
      %v713 = vunpack.c.h.bf16 %v518
      %v714 = vunpack.c.l.bf16 %v519
      %v715 = vunpack.c.h.bf16 %v519
      %v716 = vunpack.c.l.bf16 %v520
      %v717 = vunpack.c.h.bf16 %v520
      %v718 = vunpack.c.l.bf16 %v521
      %v719 = vunpack.c.h.bf16 %v521
      %v720 = vunpack.c.l.bf16 %v522
      %v721 = vunpack.c.h.bf16 %v522
      %v722 = vunpack.c.l.bf16 %v523
      %v723 = vunpack.c.h.bf16 %v523
      %v724 = vunpack.c.l.bf16 %v524
      %v725 = vunpack.c.h.bf16 %v524
      %v726 = vunpack.c.l.bf16 %v525
      %v727 = vunpack.c.h.bf16 %v525
      %v728 = vunpack.c.l.bf16 %v526
      %v729 = vunpack.c.h.bf16 %v526
      %v730 = vunpack.c.l.bf16 %v527
      %v731 = vunpack.c.h.bf16 %v527
      %v732 = vunpack.c.l.bf16 %v528
      %v733 = vunpack.c.h.bf16 %v528
      %v734 = vunpack.c.l.bf16 %v529
      %v735 = vunpack.c.h.bf16 %v529
      %v736 = vunpack.c.l.bf16 %v530
      %v737 = vunpack.c.h.bf16 %v530
      %v738 = vunpack.c.l.bf16 %v531
      %v739 = vunpack.c.h.bf16 %v531
      %v740 = vunpack.c.l.bf16 %v532
      %v741 = vunpack.c.h.bf16 %v532
      %v742 = vunpack.c.l.bf16 %v533
      %v743 = vunpack.c.h.bf16 %v533
      %v744 = vunpack.c.l.bf16 %v534
      %v745 = vunpack.c.h.bf16 %v534
      %v746 = vunpack.c.l.bf16 %v535
      %v747 = vunpack.c.h.bf16 %v535
      %v748 = vunpack.c.l.bf16 %v536
      %v749 = vunpack.c.h.bf16 %v536
      %v750 = vunpack.c.l.bf16 %v537
      %v751 = vunpack.c.h.bf16 %v537
      %v752 = vunpack.c.l.bf16 %v538
      %v753 = vunpack.c.h.bf16 %v538
      %v754 = vunpack.c.l.bf16 %v539
      %v755 = vunpack.c.h.bf16 %v539
      %v756 = vunpack.c.l.bf16 %v540
      %v757 = vunpack.c.h.bf16 %v540
      %v758 = vunpack.c.l.bf16 %v541
      %v759 = vunpack.c.h.bf16 %v541
      %v760 = vunpack.c.l.bf16 %v542
      %v761 = vunpack.c.h.bf16 %v542
      %v762 = vunpack.c.l.bf16 %v543
      %v763 = vunpack.c.h.bf16 %v543
      %v764 = vunpack.c.l.bf16 %v544
      %v765 = vunpack.c.h.bf16 %v544
      %v766 = vunpack.c.l.bf16 %v545
      %v767 = vunpack.c.h.bf16 %v545
      %v768 = vunpack.c.l.bf16 %v546
      %v769 = vunpack.c.h.bf16 %v546
      %v770 = vunpack.c.l.bf16 %v547
      %v771 = vunpack.c.h.bf16 %v547
      %v772 = vunpack.c.l.bf16 %v548
      %v773 = vunpack.c.h.bf16 %v548
      %v774 = vunpack.c.l.bf16 %v549
      %v775 = vunpack.c.h.bf16 %v549
      %v776 = vunpack.c.l.bf16 %v550
      %v777 = vunpack.c.h.bf16 %v550
      %v778 = vunpack.c.l.bf16 %v551
      %v779 = vunpack.c.h.bf16 %v551
      %v780 = vunpack.c.l.bf16 %v552
      %v781 = vunpack.c.h.bf16 %v552
      %v782 = vunpack.c.l.bf16 %v553
      %v783 = vunpack.c.h.bf16 %v553
      %v784 = vunpack.c.l.bf16 %v554
      %v785 = vunpack.c.h.bf16 %v554
      %v786 = vunpack.c.l.bf16 %v555
      %v787 = vunpack.c.h.bf16 %v555
      %v788 = vunpack.c.l.bf16 %v556
      %v789 = vunpack.c.h.bf16 %v556
      %v790 = vunpack.c.l.bf16 %v557
      %v791 = vunpack.c.h.bf16 %v557
      %v792 = vunpack.c.l.bf16 %v558
      %v793 = vunpack.c.h.bf16 %v558
      %v794 = vunpack.c.l.bf16 %v559
      %v795 = vunpack.c.h.bf16 %v559
      %v796 = vunpack.c.l.bf16 %v560
      %v797 = vunpack.c.h.bf16 %v560
      %v798 = vunpack.c.l.bf16 %v561
      %v799 = vunpack.c.h.bf16 %v561
      %v800 = vunpack.c.l.bf16 %v562
      %v801 = vunpack.c.h.bf16 %v562
      %v802 = vunpack.c.l.bf16 %v563
      %v803 = vunpack.c.h.bf16 %v563
      %v804 = vunpack.c.l.bf16 %v564
      %v805 = vunpack.c.h.bf16 %v564
      %v806 = vunpack.c.l.bf16 %v565
      %v807 = vunpack.c.h.bf16 %v565
      %v808 = vunpack.c.l.bf16 %v566
      %v809 = vunpack.c.h.bf16 %v566
      %v810 = vunpack.c.l.bf16 %v567
      %v811 = vunpack.c.h.bf16 %v567
      %v812 = vunpack.c.l.bf16 %v568
      %v813 = vunpack.c.h.bf16 %v568
      %v814 = vunpack.c.l.bf16 %v569
      %v815 = vunpack.c.h.bf16 %v569
      %v816 = vunpack.c.l.bf16 %v570
      %v817 = vunpack.c.h.bf16 %v570
      %v818 = vunpack.c.l.bf16 %v571
      %v819 = vunpack.c.h.bf16 %v571
      %v820 = vunpack.c.l.bf16 %v572
      %v821 = vunpack.c.h.bf16 %v572
      %v822 = vunpack.c.l.bf16 %v573
      %v823 = vunpack.c.h.bf16 %v573
      %v824 = vunpack.c.l.bf16 %v574
      %v825 = vunpack.c.h.bf16 %v574
      %v826 = vunpack.c.l.bf16 %v575
      %v827 = vunpack.c.h.bf16 %v575
      %v828 = vunpack.c.l.bf16 %v576
      %v829 = vunpack.c.h.bf16 %v576
      %v830 = vunpack.c.l.bf16 %v577
      %v831 = vunpack.c.h.bf16 %v577
      %v832 = vunpack.c.l.bf16 %v578
      %v833 = vunpack.c.h.bf16 %v578
      %v834 = vunpack.c.l.bf16 %v579
      %v835 = vunpack.c.h.bf16 %v579
      %v836 = vld [vmem:[%s442] sm:$0xff]
      %v837 = vld [vmem:[%s442 + $0x8] sm:$0xff]
      %v838 = vld [vmem:[%s442 + $0x10] sm:$0xff]
      %v839 = vld [vmem:[%s442 + $0x18] sm:$0xff]
      %v840 = vld [vmem:[%s442 + $0x20] sm:$0xff]
      %v841 = vld [vmem:[%s442 + $0x28] sm:$0xff]
      %v842 = vld [vmem:[%s442 + $0x30] sm:$0xff]
      %v843 = vld [vmem:[%s442 + $0x38] sm:$0xff]
      %v844 = vld [vmem:[%s442 + $0x40] sm:$0xff]
      %v845 = vld [vmem:[%s442 + $0x48] sm:$0xff]
      %v846 = vld [vmem:[%s442 + $0x50] sm:$0xff]
      %v847 = vld [vmem:[%s442 + $0x58] sm:$0xff]
      %v848 = vld [vmem:[%s442 + $0x60] sm:$0xff]
      %v849 = vld [vmem:[%s442 + $0x68] sm:$0xff]
      %v850 = vld [vmem:[%s442 + $0x70] sm:$0xff]
      %v851 = vld [vmem:[%s442 + $0x78] sm:$0xff]
      %v852 = vld [vmem:[%s442 + $0x80] sm:$0xff]
      %v853 = vld [vmem:[%s442 + $0x88] sm:$0xff]
      %v854 = vld [vmem:[%s442 + $0x90] sm:$0xff]
      %v855 = vld [vmem:[%s442 + $0x98] sm:$0xff]
      %v856 = vld [vmem:[%s442 + $0xa0] sm:$0xff]
      %v857 = vld [vmem:[%s442 + $0xa8] sm:$0xff]
      %v858 = vld [vmem:[%s442 + $0xb0] sm:$0xff]
      %v859 = vld [vmem:[%s442 + $0xb8] sm:$0xff]
      %v860 = vld [vmem:[%s442 + $0xc0] sm:$0xf]
      %v861 = vld [vmem:[%s447] sm:$0xf]
      %v862 = vld [vmem:[%s447 + $0x4] sm:$0xf]
      %v863 = vld [vmem:[%s447 + $0x8] sm:$0xf]
      %v864 = vld [vmem:[%s447 + $0xc] sm:$0xf]
      %v865 = vld [vmem:[%s447 + $0x10] sm:$0xf]
      %v866 = vld [vmem:[%s447 + $0x14] sm:$0xf]
      %v867 = vld [vmem:[%s447 + $0x18] sm:$0xf]
      %v868 = vld [vmem:[%s447 + $0x1c] sm:$0xf]
      %v869 = vld [vmem:[%s447 + $0x20] sm:$0xf]
      %v870 = vld [vmem:[%s447 + $0x24] sm:$0xf]
      %v871 = vld [vmem:[%s447 + $0x28] sm:$0xf]
      %v872 = vld [vmem:[%s447 + $0x2c] sm:$0xf]
      %v873 = vld [vmem:[%s447 + $0x30] sm:$0xf]
      %v874 = vld [vmem:[%s447 + $0x34] sm:$0xf]
      %v875 = vld [vmem:[%s447 + $0x38] sm:$0xf]
      %v876 = vld [vmem:[%s447 + $0x3c] sm:$0xf]
      %v877 = vld [vmem:[%s447 + $0x40] sm:$0xf]
      %v878 = vld [vmem:[%s447 + $0x44] sm:$0xf]
      %v879 = vld [vmem:[%s447 + $0x48] sm:$0xf]
      %v880 = vld [vmem:[%s447 + $0x4c] sm:$0xf]
      %v881 = vld [vmem:[%s447 + $0x50] sm:$0xf]
      %v882 = vld [vmem:[%s447 + $0x54] sm:$0xf]
      %v883 = vld [vmem:[%s447 + $0x58] sm:$0xf]
      %v884 = vld [vmem:[%s447 + $0x5c] sm:$0xf]
      %v885 = vld [vmem:[%s447 + $0x60] sm:$0xf]
      %v886 = vld [vmem:[%s447 + $0x64] sm:$0xf]
      %v887 = vld [vmem:[%s447 + $0x68] sm:$0xf]
      %v888 = vld [vmem:[%s447 + $0x6c] sm:$0xf]
      %v889 = vld [vmem:[%s447 + $0x70] sm:$0xf]
      %v890 = vld [vmem:[%s447 + $0x74] sm:$0xf]
      %v891 = vld [vmem:[%s447 + $0x78] sm:$0xf]
      %v892 = vld [vmem:[%s447 + $0x7c] sm:$0xf]
      %v893 = vld [vmem:[%s447 + $0x80] sm:$0xf]
      %v894 = vld [vmem:[%s447 + $0x84] sm:$0xf]
      %v895 = vld [vmem:[%s447 + $0x88] sm:$0xf]
      %v896 = vld [vmem:[%s447 + $0x8c] sm:$0xf]
      %v897 = vld [vmem:[%s447 + $0x90] sm:$0xf]
      %v898 = vld [vmem:[%s447 + $0x94] sm:$0xf]
      %v899 = vld [vmem:[%s447 + $0x98] sm:$0xf]
      %v900 = vld [vmem:[%s447 + $0x9c] sm:$0xf]
      %v901 = vld [vmem:[%s447 + $0xa0] sm:$0xf]
      %v902 = vld [vmem:[%s447 + $0xa4] sm:$0xf]
      %v903 = vld [vmem:[%s447 + $0xa8] sm:$0xf]
      %v904 = vld [vmem:[%s447 + $0xac] sm:$0xf]
      %v905 = vld [vmem:[%s447 + $0xb0] sm:$0xf]
      %v906 = vld [vmem:[%s447 + $0xb4] sm:$0xf]
      %v907 = vld [vmem:[%s447 + $0xb8] sm:$0xf]
      %v908 = vld [vmem:[%s447 + $0xbc] sm:$0xf]
      %v909 = vld [vmem:[%s447 + $0xc0] sm:$0xf]
      %v910 = vld [vmem:[%s447 + $0xc4] sm:$0xf]
      %v911 = vld [vmem:[%s447 + $0xc8] sm:$0xf]
      %v912 = vld [vmem:[%s447 + $0xcc] sm:$0xf]
      %v913 = vld [vmem:[%s447 + $0xd0] sm:$0xf]
      %v914 = vld [vmem:[%s447 + $0xd4] sm:$0xf]
      %v915 = vld [vmem:[%s447 + $0xd8] sm:$0xf]
      %v916 = vld [vmem:[%s447 + $0xdc] sm:$0xf]
      %v917 = vld [vmem:[%s447 + $0xe0] sm:$0xf]
      %v918 = vld [vmem:[%s447 + $0xe4] sm:$0xf]
      %v919 = vld [vmem:[%s447 + $0xe8] sm:$0xf]
      %v920 = vld [vmem:[%s447 + $0xec] sm:$0xf]
      %v921 = vld [vmem:[%s447 + $0xf0] sm:$0xf]
      %v922 = vld [vmem:[%s447 + $0xf4] sm:$0xf]
      %v923 = vld [vmem:[%s447 + $0xf8] sm:$0xf]
      %v924 = vld [vmem:[%s447 + $0xfc] sm:$0xf]
      %v925 = vld [vmem:[%s447 + $0x100] sm:$0xf]
      %v926 = vld [vmem:[%s447 + $0x104] sm:$0xf]
      %v927 = vld [vmem:[%s447 + $0x108] sm:$0xf]
      %v928 = vld [vmem:[%s447 + $0x10c] sm:$0xf]
      %v929 = vld [vmem:[%s447 + $0x110] sm:$0xf]
      %v930 = vld [vmem:[%s447 + $0x114] sm:$0xf]
      %v931 = vld [vmem:[%s447 + $0x118] sm:$0xf]
      %v932 = vld [vmem:[%s447 + $0x11c] sm:$0xf]
      %v933 = vld [vmem:[%s447 + $0x120] sm:$0xf]
      %v934 = vld [vmem:[%s447 + $0x124] sm:$0xf]
      %v935 = vld [vmem:[%s447 + $0x128] sm:$0xf]
      %v936 = vld [vmem:[%s447 + $0x12c] sm:$0xf]
      %v937 = vld [vmem:[%s447 + $0x130] sm:$0xf]
      %v938 = vld [vmem:[%s447 + $0x134] sm:$0xf]
      %v939 = vld [vmem:[%s447 + $0x138] sm:$0xf]
      %v940 = vld [vmem:[%s447 + $0x13c] sm:$0xf]
      %v941 = vld [vmem:[%s447 + $0x140] sm:$0xf]
      %v942 = vld [vmem:[%s447 + $0x144] sm:$0xf]
      %v943 = vld [vmem:[%s447 + $0x148] sm:$0xf]
      %v944 = vld [vmem:[%s447 + $0x14c] sm:$0xf]
      %v945 = vld [vmem:[%s447 + $0x150] sm:$0xf]
      %v946 = vld [vmem:[%s447 + $0x154] sm:$0xf]
      %v947 = vld [vmem:[%s447 + $0x158] sm:$0xf]
      %v948 = vld [vmem:[%s447 + $0x15c] sm:$0xf]
      %v949 = vld [vmem:[%s447 + $0x160] sm:$0xf]
      %v950 = vld [vmem:[%s447 + $0x164] sm:$0xf]
      %v951 = vld [vmem:[%s447 + $0x168] sm:$0xf]
      %v952 = vld [vmem:[%s447 + $0x16c] sm:$0xf]
      %v953 = vld [vmem:[%s447 + $0x170] sm:$0xf]
      %v954 = vld [vmem:[%s447 + $0x174] sm:$0xf]
      %v955 = vld [vmem:[%s447 + $0x178] sm:$0xf]
      %v956 = vld [vmem:[%s447 + $0x17c] sm:$0xf]
      %v957 = vld [vmem:[%s447 + $0x180] sm:$0xf]
      %v958 = vld [vmem:[%s447 + $0x184] sm:$0xf]
      %v959 = vld [vmem:[%s447 + $0x188] sm:$0xf]
      %v960 = vld [vmem:[%s447 + $0x18c] sm:$0xf]
      %v961 = vld [vmem:[%s447 + $0x190] sm:$0xf]
      %v962 = vld [vmem:[%s447 + $0x194] sm:$0xf]
      %v963 = vld [vmem:[%s447 + $0x198] sm:$0xf]
      %v964 = vld [vmem:[%s447 + $0x19c] sm:$0xf]
      %v965 = vld [vmem:[%s447 + $0x1a0] sm:$0xf]
      %v966 = vld [vmem:[%s447 + $0x1a4] sm:$0xf]
      %v967 = vld [vmem:[%s447 + $0x1a8] sm:$0xf]
      %v968 = vld [vmem:[%s447 + $0x1ac] sm:$0xf]
      %v969 = vld [vmem:[%s447 + $0x1b0] sm:$0xf]
      %v970 = vld [vmem:[%s447 + $0x1b4] sm:$0xf]
      %v971 = vld [vmem:[%s447 + $0x1b8] sm:$0xf]
      %v972 = vld [vmem:[%s447 + $0x1bc] sm:$0xf]
      %v973 = vld [vmem:[%s447 + $0x1c0] sm:$0xf]
      %v974 = vld [vmem:[%s447 + $0x1c4] sm:$0xf]
      %v975 = vld [vmem:[%s447 + $0x1c8] sm:$0xf]
      %v976 = vld [vmem:[%s447 + $0x1cc] sm:$0xf]
      %v977 = vld [vmem:[%s447 + $0x1d0] sm:$0xf]
      %v978 = vld [vmem:[%s447 + $0x1d4] sm:$0xf]
      %v979 = vld [vmem:[%s447 + $0x1d8] sm:$0xf]
      %v980 = vld [vmem:[%s447 + $0x1dc] sm:$0xf]
      %v981 = vld [vmem:[%s447 + $0x1e0] sm:$0xf]
      %v982 = vld [vmem:[%s447 + $0x1e4] sm:$0xf]
      %v983 = vld [vmem:[%s447 + $0x1e8] sm:$0xf]
      %v984 = vld [vmem:[%s447 + $0x1ec] sm:$0xf]
      %v985 = vld [vmem:[%s447 + $0x1f0] sm:$0xf]
      %v986 = vld [vmem:[%s447 + $0x1f4] sm:$0xf]
      %v987 = vld [vmem:[%s447 + $0x1f8] sm:$0xf]
      %v988 = vld [vmem:[%s447 + $0x1fc] sm:$0xf]
      %v989 = vunpack.c.l.bf16 %v861
      %v990 = vunpack.c.l.bf16 %v862
      %v991 = vunpack.c.l.bf16 %v863
      %v992 = vunpack.c.l.bf16 %v864
      %v993 = vunpack.c.l.bf16 %v865
      %v994 = vunpack.c.l.bf16 %v866
      %v995 = vunpack.c.l.bf16 %v867
      %v996 = vunpack.c.l.bf16 %v868
      %v997 = vunpack.c.l.bf16 %v869
      %v998 = vunpack.c.l.bf16 %v870
      %v999 = vunpack.c.l.bf16 %v871
      %v1000 = vunpack.c.l.bf16 %v872
      %v1001 = vunpack.c.l.bf16 %v873
      %v1002 = vunpack.c.l.bf16 %v874
      %v1003 = vunpack.c.l.bf16 %v875
      %v1004 = vunpack.c.l.bf16 %v876
      %v1005 = vunpack.c.l.bf16 %v877
      %v1006 = vunpack.c.l.bf16 %v878
      %v1007 = vunpack.c.l.bf16 %v879
      %v1008 = vunpack.c.l.bf16 %v880
      %v1009 = vunpack.c.l.bf16 %v881
      %v1010 = vunpack.c.l.bf16 %v882
      %v1011 = vunpack.c.l.bf16 %v883
      %v1012 = vunpack.c.l.bf16 %v884
      %v1013 = vunpack.c.l.bf16 %v885
      %v1014 = vunpack.c.l.bf16 %v886
      %v1015 = vunpack.c.l.bf16 %v887
      %v1016 = vunpack.c.l.bf16 %v888
      %v1017 = vunpack.c.l.bf16 %v889
      %v1018 = vunpack.c.l.bf16 %v890
      %v1019 = vunpack.c.l.bf16 %v891
      %v1020 = vunpack.c.l.bf16 %v892
      %v1021 = vunpack.c.l.bf16 %v893
      %v1022 = vunpack.c.l.bf16 %v894
      %v1023 = vunpack.c.l.bf16 %v895
      %v1024 = vunpack.c.l.bf16 %v896
      %v1025 = vunpack.c.l.bf16 %v897
      %v1026 = vunpack.c.l.bf16 %v898
      %v1027 = vunpack.c.l.bf16 %v899
      %v1028 = vunpack.c.l.bf16 %v900
      %v1029 = vunpack.c.l.bf16 %v901
      %v1030 = vunpack.c.l.bf16 %v902
      %v1031 = vunpack.c.l.bf16 %v903
      %v1032 = vunpack.c.l.bf16 %v904
      %v1033 = vunpack.c.l.bf16 %v905
      %v1034 = vunpack.c.l.bf16 %v906
      %v1035 = vunpack.c.l.bf16 %v907
      %v1036 = vunpack.c.l.bf16 %v908
      %v1037 = vunpack.c.l.bf16 %v909
      %v1038 = vunpack.c.l.bf16 %v910
      %v1039 = vunpack.c.l.bf16 %v911
      %v1040 = vunpack.c.l.bf16 %v912
      %v1041 = vunpack.c.l.bf16 %v913
      %v1042 = vunpack.c.l.bf16 %v914
      %v1043 = vunpack.c.l.bf16 %v915
      %v1044 = vunpack.c.l.bf16 %v916
      %v1045 = vunpack.c.l.bf16 %v917
      %v1046 = vunpack.c.l.bf16 %v918
      %v1047 = vunpack.c.l.bf16 %v919
      %v1048 = vunpack.c.l.bf16 %v920
      %v1049 = vunpack.c.l.bf16 %v921
      %v1050 = vunpack.c.l.bf16 %v922
      %v1051 = vunpack.c.l.bf16 %v923
      %v1052 = vunpack.c.l.bf16 %v924
      %v1053 = vunpack.c.l.bf16 %v925
      %v1054 = vunpack.c.l.bf16 %v926
      %v1055 = vunpack.c.l.bf16 %v927
      %v1056 = vunpack.c.l.bf16 %v928
      %v1057 = vunpack.c.l.bf16 %v929
      %v1058 = vunpack.c.l.bf16 %v930
      %v1059 = vunpack.c.l.bf16 %v931
      %v1060 = vunpack.c.l.bf16 %v932
      %v1061 = vunpack.c.l.bf16 %v933
      %v1062 = vunpack.c.l.bf16 %v934
      %v1063 = vunpack.c.l.bf16 %v935
      %v1064 = vunpack.c.l.bf16 %v936
      %v1065 = vunpack.c.l.bf16 %v937
      %v1066 = vunpack.c.l.bf16 %v938
      %v1067 = vunpack.c.l.bf16 %v939
      %v1068 = vunpack.c.l.bf16 %v940
      %v1069 = vunpack.c.l.bf16 %v941
      %v1070 = vunpack.c.l.bf16 %v942
      %v1071 = vunpack.c.l.bf16 %v943
      %v1072 = vunpack.c.l.bf16 %v944
      %v1073 = vunpack.c.l.bf16 %v945
      %v1074 = vunpack.c.l.bf16 %v946
      %v1075 = vunpack.c.l.bf16 %v947
      %v1076 = vunpack.c.l.bf16 %v948
      %v1077 = vunpack.c.l.bf16 %v949
      %v1078 = vunpack.c.l.bf16 %v950
      %v1079 = vunpack.c.l.bf16 %v951
      %v1080 = vunpack.c.l.bf16 %v952
      %v1081 = vunpack.c.l.bf16 %v953
      %v1082 = vunpack.c.l.bf16 %v954
      %v1083 = vunpack.c.l.bf16 %v955
      %v1084 = vunpack.c.l.bf16 %v956
      %v1085 = vunpack.c.l.bf16 %v957
      %v1086 = vunpack.c.l.bf16 %v958
      %v1087 = vunpack.c.l.bf16 %v959
      %v1088 = vunpack.c.l.bf16 %v960
      %v1089 = vunpack.c.l.bf16 %v961
      %v1090 = vunpack.c.l.bf16 %v962
      %v1091 = vunpack.c.l.bf16 %v963
      %v1092 = vunpack.c.l.bf16 %v964
      %v1093 = vunpack.c.l.bf16 %v965
      %v1094 = vunpack.c.l.bf16 %v966
      %v1095 = vunpack.c.l.bf16 %v967
      %v1096 = vunpack.c.l.bf16 %v968
      %v1097 = vunpack.c.l.bf16 %v969
      %v1098 = vunpack.c.l.bf16 %v970
      %v1099 = vunpack.c.l.bf16 %v971
      %v1100 = vunpack.c.l.bf16 %v972
      %v1101 = vunpack.c.l.bf16 %v973
      %v1102 = vunpack.c.l.bf16 %v974
      %v1103 = vunpack.c.l.bf16 %v975
      %v1104 = vunpack.c.l.bf16 %v976
      %v1105 = vunpack.c.l.bf16 %v977
      %v1106 = vunpack.c.l.bf16 %v978
      %v1107 = vunpack.c.l.bf16 %v979
      %v1108 = vunpack.c.l.bf16 %v980
      %v1109 = vunpack.c.l.bf16 %v981
      %v1110 = vunpack.c.l.bf16 %v982
      %v1111 = vunpack.c.l.bf16 %v983
      %v1112 = vunpack.c.l.bf16 %v984
      %v1113 = vunpack.c.l.bf16 %v985
      %v1114 = vunpack.c.l.bf16 %v986
      %v1115 = vunpack.c.l.bf16 %v987
      %v1116 = vunpack.c.l.bf16 %v988
      %v1117 = vld [vmem:[%s4] sm:$0xf]
      %v1118 = vld [vmem:[%s5] sm:$0x1]
      %v1120 = vlaneseq
      %v1121 = vshrl.u32 %v1120, 7
      %v1122 = vsub.s32 0, %v1121
      %v1123 = vrot.slane %v1118, %v1122
      %vm1125 = vcmask 31744
      %v1127 = vsel %vm1125, %v836, 0
      %v1130 = vsel %vm1125, %v837, 0
      %v1133 = vsel %vm1125, %v838, 0
      %v1136 = vsel %vm1125, %v839, 0
      %v1139 = vsel %vm1125, %v840, 0
      %v1142 = vsel %vm1125, %v841, 0
      %v1145 = vsel %vm1125, %v842, 0
      %v1148 = vsel %vm1125, %v843, 0
      %v1151 = vsel %vm1125, %v844, 0
      %v1154 = vsel %vm1125, %v845, 0
      %v1157 = vsel %vm1125, %v846, 0
      %v1160 = vsel %vm1125, %v847, 0
      %v1163 = vsel %vm1125, %v848, 0
      %v1166 = vsel %vm1125, %v849, 0
      %v1169 = vsel %vm1125, %v850, 0
      %v1172 = vsel %vm1125, %v851, 0
      %v1175 = vsel %vm1125, %v852, 0
      %v1178 = vsel %vm1125, %v853, 0
      %v1181 = vsel %vm1125, %v854, 0
      %v1184 = vsel %vm1125, %v855, 0
      %v1187 = vsel %vm1125, %v856, 0
      %v1190 = vsel %vm1125, %v857, 0
      %v1193 = vsel %vm1125, %v858, 0
      %v1196 = vsel %vm1125, %v859, 0
      %v1199 = vsel %vm1125, %v860, 0
      %vm1201 = vcmask 1043456
      %v1203 = vsel %vm1201, %v1117, 0
      %1205 = vmatprep.subr.mxu0 0.0
      %1206 = vmatpush1.msra.mxu0 %v1203
      %1207 = vmatprep.subr.mxu0 0.0
      %1208 = vmatpush1.msra.mxu0 0.0
      %1209 = vmatprep.subr.mxu0 0.0
      %1210 = vmatpush1.msra.mxu0 0.0
      %1211 = vmatprep.subr.mxu0 0.0
      %1212 = vmatpush1.msra.mxu0 0.0
      %1213 = vmatprep.subr.mxu0 0.0
      %1214 = vmatpush1.msra.mxu0 0.0
      %1215 = vmatprep.subr.mxu0 0.0
      %1216 = vmatpush1.msra.mxu0 0.0
      %1217 = vmatprep.subr.mxu0 0.0
      %1218 = vmatpush1.msra.mxu0 0.0
      %1219 = vmatprep.subr.mxu0 0.0
      %1220 = vmatpush1.msra.mxu0 0.0
      %1221 = vmatprep.subr.mxu0 0.0
      %1222 = vmatpush1.msra.mxu0 0.0
      %1223 = vmatprep.subr.mxu0 0.0
      %1224 = vmatpush1.msra.mxu0 0.0
      %1225 = vmatprep.subr.mxu0 0.0
      %1226 = vmatpush1.msra.mxu0 0.0
      %1227 = vmatprep.subr.mxu0 0.0
      %1228 = vmatpush1.msra.mxu0 0.0
      %1229 = vmatprep.subr.mxu0 0.0
      %1230 = vmatpush1.msra.mxu0 0.0
      %1231 = vmatprep.subr.mxu0 0.0
      %1232 = vmatpush1.msra.mxu0 0.0
      %1233 = vmatprep.subr.mxu0 0.0
      %1234 = vmatpush1.msra.mxu0 0.0
      %1235 = vmatprep.subr.mxu0 0.0
      %1236 = vmatpush1.msra.mxu0 0.0
      %1237 = vmatprep.subr.mxu0 0.0
      %1238 = vmatpush1.msra.mxu0 0.0
      %1239 = vmatprep.subr.mxu0 0.0
      %1240 = vmatpush1.msra.mxu0 0.0
      %1241 = vmatprep.subr.mxu0 0.0
      %1242 = vmatpush1.msra.mxu0 0.0
      %1243 = vmatprep.subr.mxu0 0.0
      %1244 = vmatpush1.msra.mxu0 0.0
      %1245 = vmatprep.subr.mxu0 0.0
      %1246 = vmatpush1.msra.mxu0 0.0
      %1247 = vmatprep.subr.mxu0 0.0
      %1248 = vmatpush1.msra.mxu0 0.0
      %1249 = vmatprep.subr.mxu0 0.0
      %1250 = vmatpush1.msra.mxu0 0.0
      %1251 = vmatprep.subr.mxu0 0.0
      %1252 = vmatpush1.msra.mxu0 0.0
      %1253 = vmatprep.subr.mxu0 0.0
      %1254 = vmatpush1.msra.mxu0 0.0
      %1255 = vmatprep.subr.mxu0 0.0
      %1256 = vmatpush1.msra.mxu0 0.0
      %1257 = vmatprep.subr.mxu0 0.0
      %1258 = vmatpush1.msra.mxu0 0.0
      %1259 = vmatprep.subr.mxu0 0.0
      %1260 = vmatpush1.msra.mxu0 0.0
      %1261 = vmatprep.subr.mxu0 0.0
      %1262 = vmatpush1.msra.mxu0 0.0
      %1263 = vmatprep.subr.mxu0 0.0
      %1264 = vmatpush1.msra.mxu0 0.0
      %1265 = vmatprep.subr.mxu0 0.0
      %1266 = vmatpush1.msra.mxu0 0.0
      %1267 = vmatprep.subr.mxu0 0.0
      %1268 = vmatpush1.msra.mxu0 0.0
      %1269 = vmatprep.mubr.f32.mxu0 0.0
      %1270 = vmatmul.mubr.f32.gmra.mrb[0].mxu0 %v1127
      %v1271 = vpop.f32.mrb[0].mxu0
      %v1272 = vadd.f32 %v1123, %v1271
      %v1273 = vpop.f32.mrb[0].mxu0
      %1274 = vmatprep.mubr.f32.mxu0 0.0
      %1275 = vmatmul.mubr.f32.gmra.mrb[0].mxu0 %v1130
      %v1276 = vpop.f32.mrb[0].mxu0
      %v1277 = vadd.f32 %v1123, %v1276
      %v1278 = vpop.f32.mrb[0].mxu0
      %1279 = vmatprep.mubr.f32.mxu0 0.0
      %1280 = vmatmul.mubr.f32.gmra.mrb[0].mxu0 %v1133
      %v1281 = vpop.f32.mrb[0].mxu0
      %v1282 = vadd.f32 %v1123, %v1281
      %v1283 = vpop.f32.mrb[0].mxu0
      %1284 = vmatprep.mubr.f32.mxu0 0.0
      %1285 = vmatmul.mubr.f32.gmra.mrb[0].mxu0 %v1136
      %v1286 = vpop.f32.mrb[0].mxu0
      %v1287 = vadd.f32 %v1123, %v1286
      %v1288 = vpop.f32.mrb[0].mxu0
      %1289 = vmatprep.mubr.f32.mxu0 0.0
      %1290 = vmatmul.mubr.f32.gmra.mrb[0].mxu0 %v1139
      %v1291 = vpop.f32.mrb[0].mxu0
      %v1292 = vadd.f32 %v1123, %v1291
      %v1293 = vpop.f32.mrb[0].mxu0
      %1294 = vmatprep.mubr.f32.mxu0 0.0
      %1295 = vmatmul.mubr.f32.gmra.mrb[0].mxu0 %v1142
      %v1296 = vpop.f32.mrb[0].mxu0
      %v1297 = vadd.f32 %v1123, %v1296
      %v1298 = vpop.f32.mrb[0].mxu0
      %1299 = vmatprep.mubr.f32.mxu0 0.0
      %1300 = vmatmul.mubr.f32.gmra.mrb[0].mxu0 %v1145
      %v1301 = vpop.f32.mrb[0].mxu0
      %v1302 = vadd.f32 %v1123, %v1301
      %v1303 = vpop.f32.mrb[0].mxu0
      %1304 = vmatprep.mubr.f32.mxu0 0.0
      %1305 = vmatmul.mubr.f32.gmra.mrb[0].mxu0 %v1148
      %v1306 = vpop.f32.mrb[0].mxu0
      %v1307 = vadd.f32 %v1123, %v1306
      %v1308 = vpop.f32.mrb[0].mxu0
      %1309 = vmatprep.mubr.f32.mxu0 0.0
      %1310 = vmatmul.mubr.f32.gmra.mrb[0].mxu0 %v1151
      %v1311 = vpop.f32.mrb[0].mxu0
      %v1312 = vadd.f32 %v1123, %v1311
      %v1313 = vpop.f32.mrb[0].mxu0
      %1314 = vmatprep.mubr.f32.mxu0 0.0
      %1315 = vmatmul.mubr.f32.gmra.mrb[0].mxu0 %v1154
      %v1316 = vpop.f32.mrb[0].mxu0
      %v1317 = vadd.f32 %v1123, %v1316
      %v1318 = vpop.f32.mrb[0].mxu0
      %1319 = vmatprep.mubr.f32.mxu0 0.0
      %1320 = vmatmul.mubr.f32.gmra.mrb[0].mxu0 %v1157
      %v1321 = vpop.f32.mrb[0].mxu0
      %v1322 = vadd.f32 %v1123, %v1321
      %v1323 = vpop.f32.mrb[0].mxu0
      %1324 = vmatprep.mubr.f32.mxu0 0.0
      %1325 = vmatmul.mubr.f32.gmra.mrb[0].mxu0 %v1160
      %v1326 = vpop.f32.mrb[0].mxu0
      %v1327 = vadd.f32 %v1123, %v1326
      %v1328 = vpop.f32.mrb[0].mxu0
      %1329 = vmatprep.mubr.f32.mxu0 0.0
      %1330 = vmatmul.mubr.f32.gmra.mrb[0].mxu0 %v1163
      %v1331 = vpop.f32.mrb[0].mxu0
      %v1332 = vadd.f32 %v1123, %v1331
      %v1333 = vpop.f32.mrb[0].mxu0
      %1334 = vmatprep.mubr.f32.mxu0 0.0
      %1335 = vmatmul.mubr.f32.gmra.mrb[0].mxu0 %v1166
      %v1336 = vpop.f32.mrb[0].mxu0
      %v1337 = vadd.f32 %v1123, %v1336
      %v1338 = vpop.f32.mrb[0].mxu0
      %1339 = vmatprep.mubr.f32.mxu0 0.0
      %1340 = vmatmul.mubr.f32.gmra.mrb[0].mxu0 %v1169
      %v1341 = vpop.f32.mrb[0].mxu0
      %v1342 = vadd.f32 %v1123, %v1341
      %v1343 = vpop.f32.mrb[0].mxu0
      %1344 = vmatprep.mubr.f32.mxu0 0.0
      %1345 = vmatmul.mubr.f32.gmra.mrb[0].mxu0 %v1172
      %v1346 = vpop.f32.mrb[0].mxu0
      %v1347 = vadd.f32 %v1123, %v1346
      %v1348 = vpop.f32.mrb[0].mxu0
      %1349 = vmatprep.mubr.f32.mxu0 0.0
      %1350 = vmatmul.mubr.f32.gmra.mrb[0].mxu0 %v1175
      %v1351 = vpop.f32.mrb[0].mxu0
      %v1352 = vadd.f32 %v1123, %v1351
      %v1353 = vpop.f32.mrb[0].mxu0
      %1354 = vmatprep.mubr.f32.mxu0 0.0
      %1355 = vmatmul.mubr.f32.gmra.mrb[0].mxu0 %v1178
      %v1356 = vpop.f32.mrb[0].mxu0
      %v1357 = vadd.f32 %v1123, %v1356
      %v1358 = vpop.f32.mrb[0].mxu0
      %1359 = vmatprep.mubr.f32.mxu0 0.0
      %1360 = vmatmul.mubr.f32.gmra.mrb[0].mxu0 %v1181
      %v1361 = vpop.f32.mrb[0].mxu0
      %v1362 = vadd.f32 %v1123, %v1361
      %v1363 = vpop.f32.mrb[0].mxu0
      %1364 = vmatprep.mubr.f32.mxu0 0.0
      %1365 = vmatmul.mubr.f32.gmra.mrb[0].mxu0 %v1184
      %v1366 = vpop.f32.mrb[0].mxu0
      %v1367 = vadd.f32 %v1123, %v1366
      %v1368 = vpop.f32.mrb[0].mxu0
      %1369 = vmatprep.mubr.f32.mxu0 0.0
      %1370 = vmatmul.mubr.f32.gmra.mrb[0].mxu0 %v1187
      %v1371 = vpop.f32.mrb[0].mxu0
      %v1372 = vadd.f32 %v1123, %v1371
      %v1373 = vpop.f32.mrb[0].mxu0
      %1374 = vmatprep.mubr.f32.mxu0 0.0
      %1375 = vmatmul.mubr.f32.gmra.mrb[0].mxu0 %v1190
      %v1376 = vpop.f32.mrb[0].mxu0
      %v1377 = vadd.f32 %v1123, %v1376
      %v1378 = vpop.f32.mrb[0].mxu0
      %1379 = vmatprep.mubr.f32.mxu0 0.0
      %1380 = vmatmul.mubr.f32.gmra.mrb[0].mxu0 %v1193
      %v1381 = vpop.f32.mrb[0].mxu0
      %v1382 = vadd.f32 %v1123, %v1381
      %v1383 = vpop.f32.mrb[0].mxu0
      %1384 = vmatprep.mubr.f32.mxu0 0.0
      %1385 = vmatmul.mubr.f32.gmra.mrb[0].mxu0 %v1196
      %v1386 = vpop.f32.mrb[0].mxu0
      %v1387 = vadd.f32 %v1123, %v1386
      %v1388 = vpop.f32.mrb[0].mxu0
      %1389 = vmatprep.mubr.f32.mxu0 0.0
      %1390 = vmatmul.mubr.f32.gmra.mrb[0].mxu0 %v1199
      %v1391 = vpop.f32.mrb[0].mxu0
      %v1392 = vadd.f32 %v1123, %v1391
      %v1393 = vpop.f32.mrb[0].mxu0
      %1394 = vdwg.mxu0
      %vm1395 = vcmask 72704
      %v1396 = vsel %vm1395, %v1272, -inf
      %v1397 = vsel %vm1395, %v1277, -inf
      %v1398 = vsel %vm1395, %v1282, -inf
      %v1399 = vsel %vm1395, %v1287, -inf
      %v1400 = vsel %vm1395, %v1292, -inf
      %v1401 = vmax.f32 %v1396, %v1400
      %v1402 = vsel %vm1395, %v1297, -inf
      %v1403 = vmax.f32 %v1397, %v1402
      %v1404 = vsel %vm1395, %v1302, -inf
      %v1405 = vmax.f32 %v1398, %v1404
      %v1406 = vsel %vm1395, %v1307, -inf
      %v1407 = vmax.f32 %v1399, %v1406
      %v1408 = vsel %vm1395, %v1312, -inf
      %v1409 = vmax.f32 %v1401, %v1408
      %v1410 = vsel %vm1395, %v1317, -inf
      %v1411 = vmax.f32 %v1403, %v1410
      %v1412 = vsel %vm1395, %v1322, -inf
      %v1413 = vmax.f32 %v1405, %v1412
      %v1414 = vsel %vm1395, %v1327, -inf
      %v1415 = vmax.f32 %v1407, %v1414
      %v1416 = vsel %vm1395, %v1332, -inf
      %v1417 = vmax.f32 %v1409, %v1416
      %v1418 = vsel %vm1395, %v1337, -inf
      %v1419 = vmax.f32 %v1411, %v1418
      %v1420 = vsel %vm1395, %v1342, -inf
      %v1421 = vmax.f32 %v1413, %v1420
      %v1422 = vsel %vm1395, %v1347, -inf
      %v1423 = vmax.f32 %v1415, %v1422
      %v1424 = vsel %vm1395, %v1352, -inf
      %v1425 = vmax.f32 %v1417, %v1424
      %v1426 = vsel %vm1395, %v1357, -inf
      %v1427 = vmax.f32 %v1419, %v1426
      %v1428 = vsel %vm1395, %v1362, -inf
      %v1429 = vmax.f32 %v1421, %v1428
      %v1430 = vsel %vm1395, %v1367, -inf
      %v1431 = vmax.f32 %v1423, %v1430
      %v1432 = vsel %vm1395, %v1372, -inf
      %v1433 = vmax.f32 %v1425, %v1432
      %v1434 = vsel %vm1395, %v1377, -inf
      %v1435 = vmax.f32 %v1427, %v1434
      %v1436 = vsel %vm1395, %v1382, -inf
      %v1437 = vmax.f32 %v1429, %v1436
      %v1438 = vsel %vm1395, %v1387, -inf
      %v1439 = vmax.f32 %v1431, %v1438
      %vm1440 = vcmask 68608
      %v1441 = vsel %vm1440, %v1392, -inf
      %v1442 = vmax.f32 %v1433, %v1441
      %v1443 = vmax.f32 %v1442, %v1435
      %v1444 = vmax.f32 %v1437, %v1439
      %v1445 = vmax.f32 %v1443, %v1444
      %v1446 = vrot.slane %v1445, 4
      %v1447 = vmax.f32 %v1445, %v1446
      %v1448 = vrot.slane %v1447, 2
      %v1449 = vmax.f32 %v1447, %v1448
      %v1450 = vrot.slane %v1449, 1
      %v1451 = vmax.f32 %v1449, %v1450
      %v1452 = vsub.f32 %v1272, %v1451
      %v1453 = vsub.f32 %v1277, %v1451
      %v1454 = vsub.f32 %v1282, %v1451
      %v1455 = vsub.f32 %v1287, %v1451
      %v1456 = vsub.f32 %v1292, %v1451
      %v1457 = vsub.f32 %v1297, %v1451
      %v1458 = vsub.f32 %v1302, %v1451
      %v1459 = vsub.f32 %v1307, %v1451
      %v1460 = vsub.f32 %v1312, %v1451
      %v1461 = vsub.f32 %v1317, %v1451
      %v1462 = vsub.f32 %v1322, %v1451
      %v1463 = vsub.f32 %v1327, %v1451
      %v1464 = vsub.f32 %v1332, %v1451
      %v1465 = vsub.f32 %v1337, %v1451
      %v1466 = vsub.f32 %v1342, %v1451
      %v1467 = vsub.f32 %v1347, %v1451
      %v1468 = vsub.f32 %v1352, %v1451
      %v1469 = vsub.f32 %v1357, %v1451
      %v1470 = vsub.f32 %v1362, %v1451
      %v1471 = vsub.f32 %v1367, %v1451
      %v1472 = vsub.f32 %v1372, %v1451
      %v1473 = vsub.f32 %v1377, %v1451
      %v1474 = vsub.f32 %v1382, %v1451
      %v1475 = vsub.f32 %v1387, %v1451
      %v1476 = vsub.f32 %v1392, %v1451
      %v1477 = vmul.f32 %v1452, 1.442695
      %v1478 = vpow.pop %v1477
      %v1479 = vmul.f32 %v1453, 1.442695
      %v1480 = vpow.pop %v1479
      %v1481 = vmul.f32 %v1454, 1.442695
      %v1482 = vpow.pop %v1481
      %v1483 = vmul.f32 %v1455, 1.442695
      %v1484 = vpow.pop %v1483
      %v1485 = vmul.f32 %v1456, 1.442695
      %v1486 = vpow.pop %v1485
      %v1487 = vmul.f32 %v1457, 1.442695
      %v1488 = vpow.pop %v1487
      %v1489 = vmul.f32 %v1458, 1.442695
      %v1490 = vpow.pop %v1489
      %v1491 = vmul.f32 %v1459, 1.442695
      %v1492 = vpow.pop %v1491
      %v1493 = vmul.f32 %v1460, 1.442695
      %v1494 = vpow.pop %v1493
      %v1495 = vmul.f32 %v1461, 1.442695
      %v1496 = vpow.pop %v1495
      %v1497 = vmul.f32 %v1462, 1.442695
      %v1498 = vpow.pop %v1497
      %v1499 = vmul.f32 %v1463, 1.442695
      %v1500 = vpow.pop %v1499
      %v1501 = vmul.f32 %v1464, 1.442695
      %v1502 = vpow.pop %v1501
      %v1503 = vmul.f32 %v1465, 1.442695
      %v1504 = vpow.pop %v1503
      %v1505 = vmul.f32 %v1466, 1.442695
      %v1506 = vpow.pop %v1505
      %v1507 = vmul.f32 %v1467, 1.442695
      %v1508 = vpow.pop %v1507
      %v1509 = vmul.f32 %v1468, 1.442695
      %v1510 = vpow.pop %v1509
      %v1511 = vmul.f32 %v1469, 1.442695
      %v1512 = vpow.pop %v1511
      %v1513 = vmul.f32 %v1470, 1.442695
      %v1514 = vpow.pop %v1513
      %v1515 = vmul.f32 %v1471, 1.442695
      %v1516 = vpow.pop %v1515
      %v1517 = vmul.f32 %v1472, 1.442695
      %v1518 = vpow.pop %v1517
      %v1519 = vmul.f32 %v1473, 1.442695
      %v1520 = vpow.pop %v1519
      %v1521 = vmul.f32 %v1474, 1.442695
      %v1522 = vpow.pop %v1521
      %v1523 = vmul.f32 %v1475, 1.442695
      %v1524 = vpow.pop %v1523
      %v1525 = vmul.f32 %v1476, 1.442695
      %v1526 = vpow.pop %v1525
      %v1527 = vsel %vm1395, %v1478, 0.0
      %v1528 = vsel %vm1395, %v1480, 0.0
      %v1529 = vadd.f32 %v1527, %v1528
      %v1530 = vsel %vm1395, %v1482, 0.0
      %v1531 = vadd.f32 %v1529, %v1530
      %v1532 = vsel %vm1395, %v1484, 0.0
      %v1533 = vadd.f32 %v1531, %v1532
      %v1534 = vsel %vm1395, %v1486, 0.0
      %v1535 = vadd.f32 %v1533, %v1534
      %v1536 = vsel %vm1395, %v1488, 0.0
      %v1537 = vadd.f32 %v1535, %v1536
      %v1538 = vsel %vm1395, %v1490, 0.0
      %v1539 = vadd.f32 %v1537, %v1538
      %v1540 = vsel %vm1395, %v1492, 0.0
      %v1541 = vadd.f32 %v1539, %v1540
      %v1542 = vsel %vm1395, %v1494, 0.0
      %v1543 = vadd.f32 %v1541, %v1542
      %v1544 = vsel %vm1395, %v1496, 0.0
      %v1545 = vadd.f32 %v1543, %v1544
      %v1546 = vsel %vm1395, %v1498, 0.0
      %v1547 = vadd.f32 %v1545, %v1546
      %v1548 = vsel %vm1395, %v1500, 0.0
      %v1549 = vadd.f32 %v1547, %v1548
      %v1550 = vsel %vm1395, %v1502, 0.0
      %v1551 = vadd.f32 %v1549, %v1550
      %v1552 = vsel %vm1395, %v1504, 0.0
      %v1553 = vadd.f32 %v1551, %v1552
      %v1554 = vsel %vm1395, %v1506, 0.0
      %v1555 = vadd.f32 %v1553, %v1554
      %v1556 = vsel %vm1395, %v1508, 0.0
      %v1557 = vadd.f32 %v1555, %v1556
      %v1558 = vsel %vm1395, %v1510, 0.0
      %v1559 = vadd.f32 %v1557, %v1558
      %v1560 = vsel %vm1395, %v1512, 0.0
      %v1561 = vadd.f32 %v1559, %v1560
      %v1562 = vsel %vm1395, %v1514, 0.0
      %v1563 = vadd.f32 %v1561, %v1562
      %v1564 = vsel %vm1395, %v1516, 0.0
      %v1565 = vadd.f32 %v1563, %v1564
      %v1566 = vsel %vm1395, %v1518, 0.0
      %v1567 = vadd.f32 %v1565, %v1566
      %v1568 = vsel %vm1395, %v1520, 0.0
      %v1569 = vadd.f32 %v1567, %v1568
      %v1570 = vsel %vm1395, %v1522, 0.0
      %v1571 = vadd.f32 %v1569, %v1570
      %v1572 = vsel %vm1395, %v1524, 0.0
      %v1573 = vadd.f32 %v1571, %v1572
      %v1574 = vsel %vm1440, %v1526, 0.0
      %v1575 = vadd.f32 %v1573, %v1574
      %v1576 = vrot.slane %v1575, 4
      %v1577 = vadd.f32 %v1575, %v1576
      %v1578 = vrot.slane %v1577, 2
      %v1579 = vadd.f32 %v1577, %v1578
      %v1580 = vrot.slane %v1579, 1
      %v1581 = vadd.f32 %v1579, %v1580
      %v1582 = vrcp.pop %v1581
      %v1583 = vmul.f32 %v1478, %v1582
      %v1584 = vmul.f32 %v1480, %v1582
      %v1585 = vmul.f32 %v1482, %v1582
      %v1586 = vmul.f32 %v1484, %v1582
      %v1587 = vmul.f32 %v1486, %v1582
      %v1588 = vmul.f32 %v1488, %v1582
      %v1589 = vmul.f32 %v1490, %v1582
      %v1590 = vmul.f32 %v1492, %v1582
      %v1591 = vmul.f32 %v1494, %v1582
      %v1592 = vmul.f32 %v1496, %v1582
      %v1593 = vmul.f32 %v1498, %v1582
      %v1594 = vmul.f32 %v1500, %v1582
      %v1595 = vmul.f32 %v1502, %v1582
      %v1596 = vmul.f32 %v1504, %v1582
      %v1597 = vmul.f32 %v1506, %v1582
      %v1598 = vmul.f32 %v1508, %v1582
      %v1599 = vmul.f32 %v1510, %v1582
      %v1600 = vmul.f32 %v1512, %v1582
      %v1601 = vmul.f32 %v1514, %v1582
      %v1602 = vmul.f32 %v1516, %v1582
      %v1603 = vmul.f32 %v1518, %v1582
      %v1604 = vmul.f32 %v1520, %v1582
      %v1605 = vmul.f32 %v1522, %v1582
      %v1606 = vmul.f32 %v1524, %v1582
      %v1607 = vmul.f32 %v1526, %v1582
      %vm1608 = vcmask 556032
      %v1610 = vsel %vm1608, %v581, 0
      %v1613 = vsel %vm1608, %v583, 0
      %v1616 = vsel %vm1608, %v585, 0
      %v1619 = vsel %vm1608, %v587, 0
      %v1622 = vsel %vm1608, %v589, 0
      %v1625 = vsel %vm1608, %v591, 0
      %v1628 = vsel %vm1608, %v593, 0
      %v1631 = vsel %vm1608, %v595, 0
      %v1634 = vsel %vm1608, %v597, 0
      %v1637 = vsel %vm1608, %v599, 0
      %v1640 = vsel %vm1608, %v601, 0
      %v1643 = vsel %vm1608, %v603, 0
      %v1646 = vsel %vm1608, %v605, 0
      %v1649 = vsel %vm1608, %v607, 0
      %v1652 = vsel %vm1608, %v609, 0
      %v1655 = vsel %vm1608, %v611, 0
      %v1658 = vsel %vm1608, %v613, 0
      %v1661 = vsel %vm1608, %v615, 0
      %v1664 = vsel %vm1608, %v617, 0
      %v1667 = vsel %vm1608, %v619, 0
      %v1670 = vsel %vm1608, %v621, 0
      %v1673 = vsel %vm1608, %v623, 0
      %v1676 = vsel %vm1608, %v625, 0
      %v1679 = vsel %vm1608, %v627, 0
      %v1682 = vsel %vm1608, %v629, 0
      %v1685 = vsel %vm1608, %v631, 0
      %v1688 = vsel %vm1608, %v633, 0
      %v1691 = vsel %vm1608, %v635, 0
      %v1694 = vsel %vm1608, %v637, 0
      %v1697 = vsel %vm1608, %v639, 0
      %v1700 = vsel %vm1608, %v641, 0
      %v1703 = vsel %vm1608, %v643, 0
      %v1706 = vsel %vm1608, %v645, 0
      %v1709 = vsel %vm1608, %v647, 0
      %v1712 = vsel %vm1608, %v649, 0
      %v1715 = vsel %vm1608, %v651, 0
      %v1718 = vsel %vm1608, %v653, 0
      %v1721 = vsel %vm1608, %v655, 0
      %v1724 = vsel %vm1608, %v657, 0
      %v1727 = vsel %vm1608, %v659, 0
      %v1730 = vsel %vm1608, %v661, 0
      %v1733 = vsel %vm1608, %v663, 0
      %v1736 = vsel %vm1608, %v665, 0
      %v1739 = vsel %vm1608, %v667, 0
      %v1742 = vsel %vm1608, %v669, 0
      %v1745 = vsel %vm1608, %v671, 0
      %v1748 = vsel %vm1608, %v673, 0
      %v1751 = vsel %vm1608, %v675, 0
      %v1754 = vsel %vm1608, %v677, 0
      %v1757 = vsel %vm1608, %v679, 0
      %v1760 = vsel %vm1608, %v681, 0
      %v1763 = vsel %vm1608, %v683, 0
      %v1766 = vsel %vm1608, %v685, 0
      %v1769 = vsel %vm1608, %v687, 0
      %v1772 = vsel %vm1608, %v689, 0
      %v1775 = vsel %vm1608, %v691, 0
      %v1778 = vsel %vm1608, %v693, 0
      %v1781 = vsel %vm1608, %v695, 0
      %v1784 = vsel %vm1608, %v697, 0
      %v1787 = vsel %vm1608, %v699, 0
      %v1790 = vsel %vm1608, %v701, 0
      %v1793 = vsel %vm1608, %v703, 0
      %v1796 = vsel %vm1608, %v705, 0
      %v1799 = vsel %vm1608, %v707, 0
      %v1802 = vsel %vm1608, %v709, 0
      %v1805 = vsel %vm1608, %v711, 0
      %v1808 = vsel %vm1608, %v713, 0
      %v1811 = vsel %vm1608, %v715, 0
      %v1814 = vsel %vm1608, %v717, 0
      %v1817 = vsel %vm1608, %v719, 0
      %v1820 = vsel %vm1608, %v721, 0
      %v1823 = vsel %vm1608, %v723, 0
      %v1826 = vsel %vm1608, %v725, 0
      %v1829 = vsel %vm1608, %v727, 0
      %v1832 = vsel %vm1608, %v729, 0
      %v1835 = vsel %vm1608, %v731, 0
      %v1838 = vsel %vm1608, %v733, 0
      %v1841 = vsel %vm1608, %v735, 0
      %v1844 = vsel %vm1608, %v737, 0
      %v1847 = vsel %vm1608, %v739, 0
      %v1850 = vsel %vm1608, %v741, 0
      %v1853 = vsel %vm1608, %v743, 0
      %v1856 = vsel %vm1608, %v745, 0
      %v1859 = vsel %vm1608, %v747, 0
      %v1862 = vsel %vm1608, %v749, 0
      %v1865 = vsel %vm1608, %v751, 0
      %v1868 = vsel %vm1608, %v753, 0
      %v1871 = vsel %vm1608, %v755, 0
      %v1874 = vsel %vm1608, %v757, 0
      %v1877 = vsel %vm1608, %v759, 0
      %v1880 = vsel %vm1608, %v761, 0
      %v1883 = vsel %vm1608, %v763, 0
      %v1886 = vsel %vm1608, %v765, 0
      %v1889 = vsel %vm1608, %v767, 0
      %v1892 = vsel %vm1608, %v769, 0
      %v1895 = vsel %vm1608, %v771, 0
      %v1898 = vsel %vm1608, %v773, 0
      %v1901 = vsel %vm1608, %v775, 0
      %v1904 = vsel %vm1608, %v777, 0
      %v1907 = vsel %vm1608, %v779, 0
      %v1910 = vsel %vm1608, %v781, 0
      %v1913 = vsel %vm1608, %v783, 0
      %v1916 = vsel %vm1608, %v785, 0
      %v1919 = vsel %vm1608, %v787, 0
      %v1922 = vsel %vm1608, %v789, 0
      %v1925 = vsel %vm1608, %v791, 0
      %v1928 = vsel %vm1608, %v793, 0
      %v1931 = vsel %vm1608, %v795, 0
      %v1934 = vsel %vm1608, %v797, 0
      %v1937 = vsel %vm1608, %v799, 0
      %v1940 = vsel %vm1608, %v801, 0
      %v1943 = vsel %vm1608, %v803, 0
      %v1946 = vsel %vm1608, %v805, 0
      %v1949 = vsel %vm1608, %v807, 0
      %v1952 = vsel %vm1608, %v809, 0
      %v1955 = vsel %vm1608, %v811, 0
      %v1958 = vsel %vm1608, %v813, 0
      %v1961 = vsel %vm1608, %v815, 0
      %v1964 = vsel %vm1608, %v817, 0
      %v1967 = vsel %vm1608, %v819, 0
      %v1970 = vsel %vm1608, %v821, 0
      %v1973 = vsel %vm1608, %v823, 0
      %v1976 = vsel %vm1608, %v825, 0
      %v1979 = vsel %vm1608, %v827, 0
      %v1982 = vsel %vm1608, %v829, 0
      %v1985 = vsel %vm1608, %v831, 0
      %v1988 = vsel %vm1608, %v833, 0
      %v1991 = vsel %vm1608, %v835, 0
      %v1994 = vsel %vm1201, %v1607, 0
      %1996 = vmatprep.subr.mxu0 0.0
      %1997 = vmatpush1.msra.mxu0 %v1583
      %1998 = vmatprep.subr.mxu0 0.0
      %1999 = vmatpush1.msra.mxu0 %v1584
      %2000 = vmatprep.subr.mxu0 0.0
      %2001 = vmatpush1.msra.mxu0 %v1585
      %2002 = vmatprep.subr.mxu0 0.0
      %2003 = vmatpush1.msra.mxu0 %v1586
      %2004 = vmatprep.subr.mxu0 0.0
      %2005 = vmatpush1.msra.mxu0 %v1587
      %2006 = vmatprep.subr.mxu0 0.0
      %2007 = vmatpush1.msra.mxu0 %v1588
      %2008 = vmatprep.subr.mxu0 0.0
      %2009 = vmatpush1.msra.mxu0 %v1589
      %2010 = vmatprep.subr.mxu0 0.0
      %2011 = vmatpush1.msra.mxu0 %v1590
      %2012 = vmatprep.subr.mxu0 0.0
      %2013 = vmatpush1.msra.mxu0 %v1591
      %2014 = vmatprep.subr.mxu0 0.0
      %2015 = vmatpush1.msra.mxu0 %v1592
      %2016 = vmatprep.subr.mxu0 0.0
      %2017 = vmatpush1.msra.mxu0 %v1593
      %2018 = vmatprep.subr.mxu0 0.0
      %2019 = vmatpush1.msra.mxu0 %v1594
      %2020 = vmatprep.subr.mxu0 0.0
      %2021 = vmatpush1.msra.mxu0 %v1595
      %2022 = vmatprep.subr.mxu0 0.0
      %2023 = vmatpush1.msra.mxu0 %v1596
      %2024 = vmatprep.subr.mxu0 0.0
      %2025 = vmatpush1.msra.mxu0 %v1597
      %2026 = vmatprep.subr.mxu0 0.0
      %2027 = vmatpush1.msra.mxu0 %v1598
      %2028 = vmatprep.subr.mxu0 0.0
      %2029 = vmatpush1.msra.mxu0 %v1599
      %2030 = vmatprep.subr.mxu0 0.0
      %2031 = vmatpush1.msra.mxu0 %v1600
      %2032 = vmatprep.subr.mxu0 0.0
      %2033 = vmatpush1.msra.mxu0 %v1601
      %2034 = vmatprep.subr.mxu0 0.0
      %2035 = vmatpush1.msra.mxu0 %v1602
      %2036 = vmatprep.subr.mxu0 0.0
      %2037 = vmatpush1.msra.mxu0 %v1603
      %2038 = vmatprep.subr.mxu0 0.0
      %2039 = vmatpush1.msra.mxu0 %v1604
      %2040 = vmatprep.subr.mxu0 0.0
      %2041 = vmatpush1.msra.mxu0 %v1605
      %2042 = vmatprep.subr.mxu0 0.0
      %2043 = vmatpush1.msra.mxu0 %v1606
      %2044 = vmatprep.subr.mxu0 0.0
      %2045 = vmatpush1.msra.mxu0 %v1994
      %2046 = vmatprep.subr.mxu0 0.0
      %2047 = vmatpush1.msra.mxu0 0.0
      %2048 = vmatprep.subr.mxu0 0.0
      %2049 = vmatpush1.msra.mxu0 0.0
      %2050 = vmatprep.subr.mxu0 0.0
      %2051 = vmatpush1.msra.mxu0 0.0
      %2052 = vmatprep.subr.mxu0 0.0
      %2053 = vmatpush1.msra.mxu0 0.0
      %2054 = vmatprep.subr.mxu0 0.0
      %2055 = vmatpush1.msra.mxu0 0.0
      %2056 = vmatprep.subr.mxu0 0.0
      %2057 = vmatpush1.msra.mxu0 0.0
      %2058 = vmatprep.subr.mxu0 0.0
      %2059 = vmatpush1.msra.mxu0 0.0
      %2060 = vmatprep.mubr.f32.mxu0 %v1610
      %2061 = vmatmul.mubr.f32.gmra.mrb[0].mxu0 %v580
      %v2062 = vpop.f32.mrb[0].mxu0
      %v2063 = vadd.f32 0.0, %v2062
      %v2064 = vpop.f32.mrb[0].mxu0
      %2065 = vmatprep.mubr.f32.mxu0 %v1613
      %2066 = vmatmul.mubr.f32.gmra.mrb[0].mxu0 %v582
      %v2067 = vpop.f32.mrb[0].mxu0
      %v2068 = vadd.f32 0.0, %v2067
      %v2069 = vpop.f32.mrb[0].mxu0
      %2070 = vmatprep.mubr.f32.mxu0 %v1616
      %2071 = vmatmul.mubr.f32.gmra.mrb[0].mxu0 %v584
      %v2072 = vpop.f32.mrb[0].mxu0
      %v2073 = vadd.f32 0.0, %v2072
      %v2074 = vpop.f32.mrb[0].mxu0
      %2075 = vmatprep.mubr.f32.mxu0 %v1619
      %2076 = vmatmul.mubr.f32.gmra.mrb[0].mxu0 %v586
      %v2077 = vpop.f32.mrb[0].mxu0
      %v2078 = vadd.f32 0.0, %v2077
      %v2079 = vpop.f32.mrb[0].mxu0
      %2080 = vmatprep.mubr.f32.mxu0 %v1622
      %2081 = vmatmul.mubr.f32.gmra.mrb[0].mxu0 %v588
      %v2082 = vpop.f32.mrb[0].mxu0
      %v2083 = vadd.f32 0.0, %v2082
      %v2084 = vpop.f32.mrb[0].mxu0
      %2085 = vmatprep.mubr.f32.mxu0 %v1625
      %2086 = vmatmul.mubr.f32.gmra.mrb[0].mxu0 %v590
      %v2087 = vpop.f32.mrb[0].mxu0
      %v2088 = vadd.f32 0.0, %v2087
      %v2089 = vpop.f32.mrb[0].mxu0
      %2090 = vmatprep.mubr.f32.mxu0 %v1628
      %2091 = vmatmul.mubr.f32.gmra.mrb[0].mxu0 %v592
      %v2092 = vpop.f32.mrb[0].mxu0
      %v2093 = vadd.f32 0.0, %v2092
      %v2094 = vpop.f32.mrb[0].mxu0
      %2095 = vmatprep.mubr.f32.mxu0 %v1631
      %2096 = vmatmul.mubr.f32.gmra.mrb[0].mxu0 %v594
      %v2097 = vpop.f32.mrb[0].mxu0
      %v2098 = vadd.f32 0.0, %v2097
      %v2099 = vpop.f32.mrb[0].mxu0
      %2100 = vmatprep.mubr.f32.mxu0 %v1634
      %2101 = vmatmul.mubr.f32.gmra.mrb[0].mxu0 %v596
      %v2102 = vpop.f32.mrb[0].mxu0
      %v2103 = vadd.f32 0.0, %v2102
      %v2104 = vpop.f32.mrb[0].mxu0
      %2105 = vmatprep.mubr.f32.mxu0 %v1637
      %2106 = vmatmul.mubr.f32.gmra.mrb[0].mxu0 %v598
      %v2107 = vpop.f32.mrb[0].mxu0
      %v2108 = vadd.f32 0.0, %v2107
      %v2109 = vpop.f32.mrb[0].mxu0
      %2110 = vmatprep.mubr.f32.mxu0 %v1640
      %2111 = vmatmul.mubr.f32.gmra.mrb[0].mxu0 %v600
      %v2112 = vpop.f32.mrb[0].mxu0
      %v2113 = vadd.f32 0.0, %v2112
      %v2114 = vpop.f32.mrb[0].mxu0
      %2115 = vmatprep.mubr.f32.mxu0 %v1643
      %2116 = vmatmul.mubr.f32.gmra.mrb[0].mxu0 %v602
      %v2117 = vpop.f32.mrb[0].mxu0
      %v2118 = vadd.f32 0.0, %v2117
      %v2119 = vpop.f32.mrb[0].mxu0
      %2120 = vmatprep.mubr.f32.mxu0 %v1646
      %2121 = vmatmul.mubr.f32.gmra.mrb[0].mxu0 %v604
      %v2122 = vpop.f32.mrb[0].mxu0
      %v2123 = vadd.f32 0.0, %v2122
      %v2124 = vpop.f32.mrb[0].mxu0
      %2125 = vmatprep.mubr.f32.mxu0 %v1649
      %2126 = vmatmul.mubr.f32.gmra.mrb[0].mxu0 %v606
      %v2127 = vpop.f32.mrb[0].mxu0
      %v2128 = vadd.f32 0.0, %v2127
      %v2129 = vpop.f32.mrb[0].mxu0
      %2130 = vmatprep.mubr.f32.mxu0 %v1652
      %2131 = vmatmul.mubr.f32.gmra.mrb[0].mxu0 %v608
      %v2132 = vpop.f32.mrb[0].mxu0
      %v2133 = vadd.f32 0.0, %v2132
      %v2134 = vpop.f32.mrb[0].mxu0
      %2135 = vmatprep.mubr.f32.mxu0 %v1655
      %2136 = vmatmul.mubr.f32.gmra.mrb[0].mxu0 %v610
      %v2137 = vpop.f32.mrb[0].mxu0
      %v2138 = vadd.f32 0.0, %v2137
      %v2139 = vpop.f32.mrb[0].mxu0
      %2140 = vmatprep.mubr.f32.mxu0 %v1658
      %2141 = vmatmul.mubr.f32.gmra.mrb[0].mxu0 %v612
      %v2142 = vpop.f32.mrb[0].mxu0
      %v2143 = vadd.f32 0.0, %v2142
      %v2144 = vpop.f32.mrb[0].mxu0
      %2145 = vmatprep.mubr.f32.mxu0 %v1661
      %2146 = vmatmul.mubr.f32.gmra.mrb[0].mxu0 %v614
      %v2147 = vpop.f32.mrb[0].mxu0
      %v2148 = vadd.f32 0.0, %v2147
      %v2149 = vpop.f32.mrb[0].mxu0
      %2150 = vmatprep.mubr.f32.mxu0 %v1664
      %2151 = vmatmul.mubr.f32.gmra.mrb[0].mxu0 %v616
      %v2152 = vpop.f32.mrb[0].mxu0
      %v2153 = vadd.f32 0.0, %v2152
      %v2154 = vpop.f32.mrb[0].mxu0
      %2155 = vmatprep.mubr.f32.mxu0 %v1667
      %2156 = vmatmul.mubr.f32.gmra.mrb[0].mxu0 %v618
      %v2157 = vpop.f32.mrb[0].mxu0
      %v2158 = vadd.f32 0.0, %v2157
      %v2159 = vpop.f32.mrb[0].mxu0
      %2160 = vmatprep.mubr.f32.mxu0 %v1670
      %2161 = vmatmul.mubr.f32.gmra.mrb[0].mxu0 %v620
      %v2162 = vpop.f32.mrb[0].mxu0
      %v2163 = vadd.f32 0.0, %v2162
      %v2164 = vpop.f32.mrb[0].mxu0
      %2165 = vmatprep.mubr.f32.mxu0 %v1673
      %2166 = vmatmul.mubr.f32.gmra.mrb[0].mxu0 %v622
      %v2167 = vpop.f32.mrb[0].mxu0
      %v2168 = vadd.f32 0.0, %v2167
      %v2169 = vpop.f32.mrb[0].mxu0
      %2170 = vmatprep.mubr.f32.mxu0 %v1676
      %2171 = vmatmul.mubr.f32.gmra.mrb[0].mxu0 %v624
      %v2172 = vpop.f32.mrb[0].mxu0
      %v2173 = vadd.f32 0.0, %v2172
      %v2174 = vpop.f32.mrb[0].mxu0
      %2175 = vmatprep.mubr.f32.mxu0 %v1679
      %2176 = vmatmul.mubr.f32.gmra.mrb[0].mxu0 %v626
      %v2177 = vpop.f32.mrb[0].mxu0
      %v2178 = vadd.f32 0.0, %v2177
      %v2179 = vpop.f32.mrb[0].mxu0
      %2180 = vmatprep.mubr.f32.mxu0 %v1682
      %2181 = vmatmul.mubr.f32.gmra.mrb[0].mxu0 %v628
      %v2182 = vpop.f32.mrb[0].mxu0
      %v2183 = vadd.f32 0.0, %v2182
      %v2184 = vpop.f32.mrb[0].mxu0
      %2185 = vmatprep.mubr.f32.mxu0 %v1685
      %2186 = vmatmul.mubr.f32.gmra.mrb[0].mxu0 %v630
      %v2187 = vpop.f32.mrb[0].mxu0
      %v2188 = vadd.f32 0.0, %v2187
      %v2189 = vpop.f32.mrb[0].mxu0
      %2190 = vmatprep.mubr.f32.mxu0 %v1688
      %2191 = vmatmul.mubr.f32.gmra.mrb[0].mxu0 %v632
      %v2192 = vpop.f32.mrb[0].mxu0
      %v2193 = vadd.f32 0.0, %v2192
      %v2194 = vpop.f32.mrb[0].mxu0
      %2195 = vmatprep.mubr.f32.mxu0 %v1691
      %2196 = vmatmul.mubr.f32.gmra.mrb[0].mxu0 %v634
      %v2197 = vpop.f32.mrb[0].mxu0
      %v2198 = vadd.f32 0.0, %v2197
      %v2199 = vpop.f32.mrb[0].mxu0
      %2200 = vmatprep.mubr.f32.mxu0 %v1694
      %2201 = vmatmul.mubr.f32.gmra.mrb[0].mxu0 %v636
      %v2202 = vpop.f32.mrb[0].mxu0
      %v2203 = vadd.f32 0.0, %v2202
      %v2204 = vpop.f32.mrb[0].mxu0
      %2205 = vmatprep.mubr.f32.mxu0 %v1697
      %2206 = vmatmul.mubr.f32.gmra.mrb[0].mxu0 %v638
      %v2207 = vpop.f32.mrb[0].mxu0
      %v2208 = vadd.f32 0.0, %v2207
      %v2209 = vpop.f32.mrb[0].mxu0
      %2210 = vmatprep.mubr.f32.mxu0 %v1700
      %2211 = vmatmul.mubr.f32.gmra.mrb[0].mxu0 %v640
      %v2212 = vpop.f32.mrb[0].mxu0
      %v2213 = vadd.f32 0.0, %v2212
      %v2214 = vpop.f32.mrb[0].mxu0
      %2215 = vmatprep.mubr.f32.mxu0 %v1703
      %2216 = vmatmul.mubr.f32.gmra.mrb[0].mxu0 %v642
      %v2217 = vpop.f32.mrb[0].mxu0
      %v2218 = vadd.f32 0.0, %v2217
      %v2219 = vpop.f32.mrb[0].mxu0
      %2220 = vmatprep.mubr.f32.mxu0 %v1706
      %2221 = vmatmul.mubr.f32.gmra.mrb[0].mxu0 %v644
      %v2222 = vpop.f32.mrb[0].mxu0
      %v2223 = vadd.f32 0.0, %v2222
      %v2224 = vpop.f32.mrb[0].mxu0
      %2225 = vmatprep.mubr.f32.mxu0 %v1709
      %2226 = vmatmul.mubr.f32.gmra.mrb[0].mxu0 %v646
      %v2227 = vpop.f32.mrb[0].mxu0
      %v2228 = vadd.f32 0.0, %v2227
      %v2229 = vpop.f32.mrb[0].mxu0
      %2230 = vmatprep.mubr.f32.mxu0 %v1712
      %2231 = vmatmul.mubr.f32.gmra.mrb[0].mxu0 %v648
      %v2232 = vpop.f32.mrb[0].mxu0
      %v2233 = vadd.f32 0.0, %v2232
      %v2234 = vpop.f32.mrb[0].mxu0
      %2235 = vmatprep.mubr.f32.mxu0 %v1715
      %2236 = vmatmul.mubr.f32.gmra.mrb[0].mxu0 %v650
      %v2237 = vpop.f32.mrb[0].mxu0
      %v2238 = vadd.f32 0.0, %v2237
      %v2239 = vpop.f32.mrb[0].mxu0
      %2240 = vmatprep.mubr.f32.mxu0 %v1718
      %2241 = vmatmul.mubr.f32.gmra.mrb[0].mxu0 %v652
      %v2242 = vpop.f32.mrb[0].mxu0
      %v2243 = vadd.f32 0.0, %v2242
      %v2244 = vpop.f32.mrb[0].mxu0
      %2245 = vmatprep.mubr.f32.mxu0 %v1721
      %2246 = vmatmul.mubr.f32.gmra.mrb[0].mxu0 %v654
      %v2247 = vpop.f32.mrb[0].mxu0
      %v2248 = vadd.f32 0.0, %v2247
      %v2249 = vpop.f32.mrb[0].mxu0
      %2250 = vmatprep.mubr.f32.mxu0 %v1724
      %2251 = vmatmul.mubr.f32.gmra.mrb[0].mxu0 %v656
      %v2252 = vpop.f32.mrb[0].mxu0
      %v2253 = vadd.f32 0.0, %v2252
      %v2254 = vpop.f32.mrb[0].mxu0
      %2255 = vmatprep.mubr.f32.mxu0 %v1727
      %2256 = vmatmul.mubr.f32.gmra.mrb[0].mxu0 %v658
      %v2257 = vpop.f32.mrb[0].mxu0
      %v2258 = vadd.f32 0.0, %v2257
      %v2259 = vpop.f32.mrb[0].mxu0
      %2260 = vmatprep.mubr.f32.mxu0 %v1730
      %2261 = vmatmul.mubr.f32.gmra.mrb[0].mxu0 %v660
      %v2262 = vpop.f32.mrb[0].mxu0
      %v2263 = vadd.f32 0.0, %v2262
      %v2264 = vpop.f32.mrb[0].mxu0
      %2265 = vmatprep.mubr.f32.mxu0 %v1733
      %2266 = vmatmul.mubr.f32.gmra.mrb[0].mxu0 %v662
      %v2267 = vpop.f32.mrb[0].mxu0
      %v2268 = vadd.f32 0.0, %v2267
      %v2269 = vpop.f32.mrb[0].mxu0
      %2270 = vmatprep.mubr.f32.mxu0 %v1736
      %2271 = vmatmul.mubr.f32.gmra.mrb[0].mxu0 %v664
      %v2272 = vpop.f32.mrb[0].mxu0
      %v2273 = vadd.f32 0.0, %v2272
      %v2274 = vpop.f32.mrb[0].mxu0
      %2275 = vmatprep.mubr.f32.mxu0 %v1739
      %2276 = vmatmul.mubr.f32.gmra.mrb[0].mxu0 %v666
      %v2277 = vpop.f32.mrb[0].mxu0
      %v2278 = vadd.f32 0.0, %v2277
      %v2279 = vpop.f32.mrb[0].mxu0
      %2280 = vmatprep.mubr.f32.mxu0 %v1742
      %2281 = vmatmul.mubr.f32.gmra.mrb[0].mxu0 %v668
      %v2282 = vpop.f32.mrb[0].mxu0
      %v2283 = vadd.f32 0.0, %v2282
      %v2284 = vpop.f32.mrb[0].mxu0
      %2285 = vmatprep.mubr.f32.mxu0 %v1745
      %2286 = vmatmul.mubr.f32.gmra.mrb[0].mxu0 %v670
      %v2287 = vpop.f32.mrb[0].mxu0
      %v2288 = vadd.f32 0.0, %v2287
      %v2289 = vpop.f32.mrb[0].mxu0
      %2290 = vmatprep.mubr.f32.mxu0 %v1748
      %2291 = vmatmul.mubr.f32.gmra.mrb[0].mxu0 %v672
      %v2292 = vpop.f32.mrb[0].mxu0
      %v2293 = vadd.f32 0.0, %v2292
      %v2294 = vpop.f32.mrb[0].mxu0
      %2295 = vmatprep.mubr.f32.mxu0 %v1751
      %2296 = vmatmul.mubr.f32.gmra.mrb[0].mxu0 %v674
      %v2297 = vpop.f32.mrb[0].mxu0
      %v2298 = vadd.f32 0.0, %v2297
      %v2299 = vpop.f32.mrb[0].mxu0
      %2300 = vmatprep.mubr.f32.mxu0 %v1754
      %2301 = vmatmul.mubr.f32.gmra.mrb[0].mxu0 %v676
      %v2302 = vpop.f32.mrb[0].mxu0
      %v2303 = vadd.f32 0.0, %v2302
      %v2304 = vpop.f32.mrb[0].mxu0
      %2305 = vmatprep.mubr.f32.mxu0 %v1757
      %2306 = vmatmul.mubr.f32.gmra.mrb[0].mxu0 %v678
      %v2307 = vpop.f32.mrb[0].mxu0
      %v2308 = vadd.f32 0.0, %v2307
      %v2309 = vpop.f32.mrb[0].mxu0
      %2310 = vmatprep.mubr.f32.mxu0 %v1760
      %2311 = vmatmul.mubr.f32.gmra.mrb[0].mxu0 %v680
      %v2312 = vpop.f32.mrb[0].mxu0
      %v2313 = vadd.f32 0.0, %v2312
      %v2314 = vpop.f32.mrb[0].mxu0
      %2315 = vmatprep.mubr.f32.mxu0 %v1763
      %2316 = vmatmul.mubr.f32.gmra.mrb[0].mxu0 %v682
      %v2317 = vpop.f32.mrb[0].mxu0
      %v2318 = vadd.f32 0.0, %v2317
      %v2319 = vpop.f32.mrb[0].mxu0
      %2320 = vmatprep.mubr.f32.mxu0 %v1766
      %2321 = vmatmul.mubr.f32.gmra.mrb[0].mxu0 %v684
      %v2322 = vpop.f32.mrb[0].mxu0
      %v2323 = vadd.f32 0.0, %v2322
      %v2324 = vpop.f32.mrb[0].mxu0
      %2325 = vmatprep.mubr.f32.mxu0 %v1769
      %2326 = vmatmul.mubr.f32.gmra.mrb[0].mxu0 %v686
      %v2327 = vpop.f32.mrb[0].mxu0
      %v2328 = vadd.f32 0.0, %v2327
      %v2329 = vpop.f32.mrb[0].mxu0
      %2330 = vmatprep.mubr.f32.mxu0 %v1772
      %2331 = vmatmul.mubr.f32.gmra.mrb[0].mxu0 %v688
      %v2332 = vpop.f32.mrb[0].mxu0
      %v2333 = vadd.f32 0.0, %v2332
      %v2334 = vpop.f32.mrb[0].mxu0
      %2335 = vmatprep.mubr.f32.mxu0 %v1775
      %2336 = vmatmul.mubr.f32.gmra.mrb[0].mxu0 %v690
      %v2337 = vpop.f32.mrb[0].mxu0
      %v2338 = vadd.f32 0.0, %v2337
      %v2339 = vpop.f32.mrb[0].mxu0
      %2340 = vmatprep.mubr.f32.mxu0 %v1778
      %2341 = vmatmul.mubr.f32.gmra.mrb[0].mxu0 %v692
      %v2342 = vpop.f32.mrb[0].mxu0
      %v2343 = vadd.f32 0.0, %v2342
      %v2344 = vpop.f32.mrb[0].mxu0
      %2345 = vmatprep.mubr.f32.mxu0 %v1781
      %2346 = vmatmul.mubr.f32.gmra.mrb[0].mxu0 %v694
      %v2347 = vpop.f32.mrb[0].mxu0
      %v2348 = vadd.f32 0.0, %v2347
      %v2349 = vpop.f32.mrb[0].mxu0
      %2350 = vmatprep.mubr.f32.mxu0 %v1784
      %2351 = vmatmul.mubr.f32.gmra.mrb[0].mxu0 %v696
      %v2352 = vpop.f32.mrb[0].mxu0
      %v2353 = vadd.f32 0.0, %v2352
      %v2354 = vpop.f32.mrb[0].mxu0
      %2355 = vmatprep.mubr.f32.mxu0 %v1787
      %2356 = vmatmul.mubr.f32.gmra.mrb[0].mxu0 %v698
      %v2357 = vpop.f32.mrb[0].mxu0
      %v2358 = vadd.f32 0.0, %v2357
      %v2359 = vpop.f32.mrb[0].mxu0
      %2360 = vmatprep.mubr.f32.mxu0 %v1790
      %2361 = vmatmul.mubr.f32.gmra.mrb[0].mxu0 %v700
      %v2362 = vpop.f32.mrb[0].mxu0
      %v2363 = vadd.f32 0.0, %v2362
      %v2364 = vpop.f32.mrb[0].mxu0
      %2365 = vmatprep.mubr.f32.mxu0 %v1793
      %2366 = vmatmul.mubr.f32.gmra.mrb[0].mxu0 %v702
      %v2367 = vpop.f32.mrb[0].mxu0
      %v2368 = vadd.f32 0.0, %v2367
      %v2369 = vpop.f32.mrb[0].mxu0
      %2370 = vmatprep.mubr.f32.mxu0 %v1796
      %2371 = vmatmul.mubr.f32.gmra.mrb[0].mxu0 %v704
      %v2372 = vpop.f32.mrb[0].mxu0
      %v2373 = vadd.f32 0.0, %v2372
      %v2374 = vpop.f32.mrb[0].mxu0
      %2375 = vmatprep.mubr.f32.mxu0 %v1799
      %2376 = vmatmul.mubr.f32.gmra.mrb[0].mxu0 %v706
      %v2377 = vpop.f32.mrb[0].mxu0
      %v2378 = vadd.f32 0.0, %v2377
      %v2379 = vpop.f32.mrb[0].mxu0
      %2380 = vmatprep.mubr.f32.mxu0 %v1802
      %2381 = vmatmul.mubr.f32.gmra.mrb[0].mxu0 %v708
      %v2382 = vpop.f32.mrb[0].mxu0
      %v2383 = vadd.f32 0.0, %v2382
      %v2384 = vpop.f32.mrb[0].mxu0
      %2385 = vmatprep.mubr.f32.mxu0 %v1805
      %2386 = vmatmul.mubr.f32.gmra.mrb[0].mxu0 %v710
      %v2387 = vpop.f32.mrb[0].mxu0
      %v2388 = vadd.f32 0.0, %v2387
      %v2389 = vpop.f32.mrb[0].mxu0
      %2390 = vmatprep.mubr.f32.mxu0 %v1808
      %2391 = vmatmul.mubr.f32.gmra.mrb[0].mxu0 %v712
      %v2392 = vpop.f32.mrb[0].mxu0
      %v2393 = vadd.f32 0.0, %v2392
      %v2394 = vpop.f32.mrb[0].mxu0
      %2395 = vmatprep.mubr.f32.mxu0 %v1811
      %2396 = vmatmul.mubr.f32.gmra.mrb[0].mxu0 %v714
      %v2397 = vpop.f32.mrb[0].mxu0
      %v2398 = vadd.f32 0.0, %v2397
      %v2399 = vpop.f32.mrb[0].mxu0
      %2400 = vmatprep.mubr.f32.mxu0 %v1814
      %2401 = vmatmul.mubr.f32.gmra.mrb[0].mxu0 %v716
      %v2402 = vpop.f32.mrb[0].mxu0
      %v2403 = vadd.f32 0.0, %v2402
      %v2404 = vpop.f32.mrb[0].mxu0
      %2405 = vmatprep.mubr.f32.mxu0 %v1817
      %2406 = vmatmul.mubr.f32.gmra.mrb[0].mxu0 %v718
      %v2407 = vpop.f32.mrb[0].mxu0
      %v2408 = vadd.f32 0.0, %v2407
      %v2409 = vpop.f32.mrb[0].mxu0
      %2410 = vmatprep.mubr.f32.mxu0 %v1820
      %2411 = vmatmul.mubr.f32.gmra.mrb[0].mxu0 %v720
      %v2412 = vpop.f32.mrb[0].mxu0
      %v2413 = vadd.f32 0.0, %v2412
      %v2414 = vpop.f32.mrb[0].mxu0
      %2415 = vmatprep.mubr.f32.mxu0 %v1823
      %2416 = vmatmul.mubr.f32.gmra.mrb[0].mxu0 %v722
      %v2417 = vpop.f32.mrb[0].mxu0
      %v2418 = vadd.f32 0.0, %v2417
      %v2419 = vpop.f32.mrb[0].mxu0
      %2420 = vmatprep.mubr.f32.mxu0 %v1826
      %2421 = vmatmul.mubr.f32.gmra.mrb[0].mxu0 %v724
      %v2422 = vpop.f32.mrb[0].mxu0
      %v2423 = vadd.f32 0.0, %v2422
      %v2424 = vpop.f32.mrb[0].mxu0
      %2425 = vmatprep.mubr.f32.mxu0 %v1829
      %2426 = vmatmul.mubr.f32.gmra.mrb[0].mxu0 %v726
      %v2427 = vpop.f32.mrb[0].mxu0
      %v2428 = vadd.f32 0.0, %v2427
      %v2429 = vpop.f32.mrb[0].mxu0
      %2430 = vmatprep.mubr.f32.mxu0 %v1832
      %2431 = vmatmul.mubr.f32.gmra.mrb[0].mxu0 %v728
      %v2432 = vpop.f32.mrb[0].mxu0
      %v2433 = vadd.f32 0.0, %v2432
      %v2434 = vpop.f32.mrb[0].mxu0
      %2435 = vmatprep.mubr.f32.mxu0 %v1835
      %2436 = vmatmul.mubr.f32.gmra.mrb[0].mxu0 %v730
      %v2437 = vpop.f32.mrb[0].mxu0
      %v2438 = vadd.f32 0.0, %v2437
      %v2439 = vpop.f32.mrb[0].mxu0
      %2440 = vmatprep.mubr.f32.mxu0 %v1838
      %2441 = vmatmul.mubr.f32.gmra.mrb[0].mxu0 %v732
      %v2442 = vpop.f32.mrb[0].mxu0
      %v2443 = vadd.f32 0.0, %v2442
      %v2444 = vpop.f32.mrb[0].mxu0
      %2445 = vmatprep.mubr.f32.mxu0 %v1841
      %2446 = vmatmul.mubr.f32.gmra.mrb[0].mxu0 %v734
      %v2447 = vpop.f32.mrb[0].mxu0
      %v2448 = vadd.f32 0.0, %v2447
      %v2449 = vpop.f32.mrb[0].mxu0
      %2450 = vmatprep.mubr.f32.mxu0 %v1844
      %2451 = vmatmul.mubr.f32.gmra.mrb[0].mxu0 %v736
      %v2452 = vpop.f32.mrb[0].mxu0
      %v2453 = vadd.f32 0.0, %v2452
      %v2454 = vpop.f32.mrb[0].mxu0
      %2455 = vmatprep.mubr.f32.mxu0 %v1847
      %2456 = vmatmul.mubr.f32.gmra.mrb[0].mxu0 %v738
      %v2457 = vpop.f32.mrb[0].mxu0
      %v2458 = vadd.f32 0.0, %v2457
      %v2459 = vpop.f32.mrb[0].mxu0
      %2460 = vmatprep.mubr.f32.mxu0 %v1850
      %2461 = vmatmul.mubr.f32.gmra.mrb[0].mxu0 %v740
      %v2462 = vpop.f32.mrb[0].mxu0
      %v2463 = vadd.f32 0.0, %v2462
      %v2464 = vpop.f32.mrb[0].mxu0
      %2465 = vmatprep.mubr.f32.mxu0 %v1853
      %2466 = vmatmul.mubr.f32.gmra.mrb[0].mxu0 %v742
      %v2467 = vpop.f32.mrb[0].mxu0
      %v2468 = vadd.f32 0.0, %v2467
      %v2469 = vpop.f32.mrb[0].mxu0
      %2470 = vmatprep.mubr.f32.mxu0 %v1856
      %2471 = vmatmul.mubr.f32.gmra.mrb[0].mxu0 %v744
      %v2472 = vpop.f32.mrb[0].mxu0
      %v2473 = vadd.f32 0.0, %v2472
      %v2474 = vpop.f32.mrb[0].mxu0
      %2475 = vmatprep.mubr.f32.mxu0 %v1859
      %2476 = vmatmul.mubr.f32.gmra.mrb[0].mxu0 %v746
      %v2477 = vpop.f32.mrb[0].mxu0
      %v2478 = vadd.f32 0.0, %v2477
      %v2479 = vpop.f32.mrb[0].mxu0
      %2480 = vmatprep.mubr.f32.mxu0 %v1862
      %2481 = vmatmul.mubr.f32.gmra.mrb[0].mxu0 %v748
      %v2482 = vpop.f32.mrb[0].mxu0
      %v2483 = vadd.f32 0.0, %v2482
      %v2484 = vpop.f32.mrb[0].mxu0
      %2485 = vmatprep.mubr.f32.mxu0 %v1865
      %2486 = vmatmul.mubr.f32.gmra.mrb[0].mxu0 %v750
      %v2487 = vpop.f32.mrb[0].mxu0
      %v2488 = vadd.f32 0.0, %v2487
      %v2489 = vpop.f32.mrb[0].mxu0
      %2490 = vmatprep.mubr.f32.mxu0 %v1868
      %2491 = vmatmul.mubr.f32.gmra.mrb[0].mxu0 %v752
      %v2492 = vpop.f32.mrb[0].mxu0
      %v2493 = vadd.f32 0.0, %v2492
      %v2494 = vpop.f32.mrb[0].mxu0
      %2495 = vmatprep.mubr.f32.mxu0 %v1871
      %2496 = vmatmul.mubr.f32.gmra.mrb[0].mxu0 %v754
      %v2497 = vpop.f32.mrb[0].mxu0
      %v2498 = vadd.f32 0.0, %v2497
      %v2499 = vpop.f32.mrb[0].mxu0
      %2500 = vmatprep.mubr.f32.mxu0 %v1874
      %2501 = vmatmul.mubr.f32.gmra.mrb[0].mxu0 %v756
      %v2502 = vpop.f32.mrb[0].mxu0
      %v2503 = vadd.f32 0.0, %v2502
      %v2504 = vpop.f32.mrb[0].mxu0
      %2505 = vmatprep.mubr.f32.mxu0 %v1877
      %2506 = vmatmul.mubr.f32.gmra.mrb[0].mxu0 %v758
      %v2507 = vpop.f32.mrb[0].mxu0
      %v2508 = vadd.f32 0.0, %v2507
      %v2509 = vpop.f32.mrb[0].mxu0
      %2510 = vmatprep.mubr.f32.mxu0 %v1880
      %2511 = vmatmul.mubr.f32.gmra.mrb[0].mxu0 %v760
      %v2512 = vpop.f32.mrb[0].mxu0
      %v2513 = vadd.f32 0.0, %v2512
      %v2514 = vpop.f32.mrb[0].mxu0
      %2515 = vmatprep.mubr.f32.mxu0 %v1883
      %2516 = vmatmul.mubr.f32.gmra.mrb[0].mxu0 %v762
      %v2517 = vpop.f32.mrb[0].mxu0
      %v2518 = vadd.f32 0.0, %v2517
      %v2519 = vpop.f32.mrb[0].mxu0
      %2520 = vmatprep.mubr.f32.mxu0 %v1886
      %2521 = vmatmul.mubr.f32.gmra.mrb[0].mxu0 %v764
      %v2522 = vpop.f32.mrb[0].mxu0
      %v2523 = vadd.f32 0.0, %v2522
      %v2524 = vpop.f32.mrb[0].mxu0
      %2525 = vmatprep.mubr.f32.mxu0 %v1889
      %2526 = vmatmul.mubr.f32.gmra.mrb[0].mxu0 %v766
      %v2527 = vpop.f32.mrb[0].mxu0
      %v2528 = vadd.f32 0.0, %v2527
      %v2529 = vpop.f32.mrb[0].mxu0
      %2530 = vmatprep.mubr.f32.mxu0 %v1892
      %2531 = vmatmul.mubr.f32.gmra.mrb[0].mxu0 %v768
      %v2532 = vpop.f32.mrb[0].mxu0
      %v2533 = vadd.f32 0.0, %v2532
      %v2534 = vpop.f32.mrb[0].mxu0
      %2535 = vmatprep.mubr.f32.mxu0 %v1895
      %2536 = vmatmul.mubr.f32.gmra.mrb[0].mxu0 %v770
      %v2537 = vpop.f32.mrb[0].mxu0
      %v2538 = vadd.f32 0.0, %v2537
      %v2539 = vpop.f32.mrb[0].mxu0
      %2540 = vmatprep.mubr.f32.mxu0 %v1898
      %2541 = vmatmul.mubr.f32.gmra.mrb[0].mxu0 %v772
      %v2542 = vpop.f32.mrb[0].mxu0
      %v2543 = vadd.f32 0.0, %v2542
      %v2544 = vpop.f32.mrb[0].mxu0
      %2545 = vmatprep.mubr.f32.mxu0 %v1901
      %2546 = vmatmul.mubr.f32.gmra.mrb[0].mxu0 %v774
      %v2547 = vpop.f32.mrb[0].mxu0
      %v2548 = vadd.f32 0.0, %v2547
      %v2549 = vpop.f32.mrb[0].mxu0
      %2550 = vmatprep.mubr.f32.mxu0 %v1904
      %2551 = vmatmul.mubr.f32.gmra.mrb[0].mxu0 %v776
      %v2552 = vpop.f32.mrb[0].mxu0
      %v2553 = vadd.f32 0.0, %v2552
      %v2554 = vpop.f32.mrb[0].mxu0
      %2555 = vmatprep.mubr.f32.mxu0 %v1907
      %2556 = vmatmul.mubr.f32.gmra.mrb[0].mxu0 %v778
      %v2557 = vpop.f32.mrb[0].mxu0
      %v2558 = vadd.f32 0.0, %v2557
      %v2559 = vpop.f32.mrb[0].mxu0
      %2560 = vmatprep.mubr.f32.mxu0 %v1910
      %2561 = vmatmul.mubr.f32.gmra.mrb[0].mxu0 %v780
      %v2562 = vpop.f32.mrb[0].mxu0
      %v2563 = vadd.f32 0.0, %v2562
      %v2564 = vpop.f32.mrb[0].mxu0
      %2565 = vmatprep.mubr.f32.mxu0 %v1913
      %2566 = vmatmul.mubr.f32.gmra.mrb[0].mxu0 %v782
      %v2567 = vpop.f32.mrb[0].mxu0
      %v2568 = vadd.f32 0.0, %v2567
      %v2569 = vpop.f32.mrb[0].mxu0
      %2570 = vmatprep.mubr.f32.mxu0 %v1916
      %2571 = vmatmul.mubr.f32.gmra.mrb[0].mxu0 %v784
      %v2572 = vpop.f32.mrb[0].mxu0
      %v2573 = vadd.f32 0.0, %v2572
      %v2574 = vpop.f32.mrb[0].mxu0
      %2575 = vmatprep.mubr.f32.mxu0 %v1919
      %2576 = vmatmul.mubr.f32.gmra.mrb[0].mxu0 %v786
      %v2577 = vpop.f32.mrb[0].mxu0
      %v2578 = vadd.f32 0.0, %v2577
      %v2579 = vpop.f32.mrb[0].mxu0
      %2580 = vmatprep.mubr.f32.mxu0 %v1922
      %2581 = vmatmul.mubr.f32.gmra.mrb[0].mxu0 %v788
      %v2582 = vpop.f32.mrb[0].mxu0
      %v2583 = vadd.f32 0.0, %v2582
      %v2584 = vpop.f32.mrb[0].mxu0
      %2585 = vmatprep.mubr.f32.mxu0 %v1925
      %2586 = vmatmul.mubr.f32.gmra.mrb[0].mxu0 %v790
      %v2587 = vpop.f32.mrb[0].mxu0
      %v2588 = vadd.f32 0.0, %v2587
      %v2589 = vpop.f32.mrb[0].mxu0
      %2590 = vmatprep.mubr.f32.mxu0 %v1928
      %2591 = vmatmul.mubr.f32.gmra.mrb[0].mxu0 %v792
      %v2592 = vpop.f32.mrb[0].mxu0
      %v2593 = vadd.f32 0.0, %v2592
      %v2594 = vpop.f32.mrb[0].mxu0
      %2595 = vmatprep.mubr.f32.mxu0 %v1931
      %2596 = vmatmul.mubr.f32.gmra.mrb[0].mxu0 %v794
      %v2597 = vpop.f32.mrb[0].mxu0
      %v2598 = vadd.f32 0.0, %v2597
      %v2599 = vpop.f32.mrb[0].mxu0
      %2600 = vmatprep.mubr.f32.mxu0 %v1934
      %2601 = vmatmul.mubr.f32.gmra.mrb[0].mxu0 %v796
      %v2602 = vpop.f32.mrb[0].mxu0
      %v2603 = vadd.f32 0.0, %v2602
      %v2604 = vpop.f32.mrb[0].mxu0
      %2605 = vmatprep.mubr.f32.mxu0 %v1937
      %2606 = vmatmul.mubr.f32.gmra.mrb[0].mxu0 %v798
      %v2607 = vpop.f32.mrb[0].mxu0
      %v2608 = vadd.f32 0.0, %v2607
      %v2609 = vpop.f32.mrb[0].mxu0
      %2610 = vmatprep.mubr.f32.mxu0 %v1940
      %2611 = vmatmul.mubr.f32.gmra.mrb[0].mxu0 %v800
      %v2612 = vpop.f32.mrb[0].mxu0
      %v2613 = vadd.f32 0.0, %v2612
      %v2614 = vpop.f32.mrb[0].mxu0
      %2615 = vmatprep.mubr.f32.mxu0 %v1943
      %2616 = vmatmul.mubr.f32.gmra.mrb[0].mxu0 %v802
      %v2617 = vpop.f32.mrb[0].mxu0
      %v2618 = vadd.f32 0.0, %v2617
      %v2619 = vpop.f32.mrb[0].mxu0
      %2620 = vmatprep.mubr.f32.mxu0 %v1946
      %2621 = vmatmul.mubr.f32.gmra.mrb[0].mxu0 %v804
      %v2622 = vpop.f32.mrb[0].mxu0
      %v2623 = vadd.f32 0.0, %v2622
      %v2624 = vpop.f32.mrb[0].mxu0
      %2625 = vmatprep.mubr.f32.mxu0 %v1949
      %2626 = vmatmul.mubr.f32.gmra.mrb[0].mxu0 %v806
      %v2627 = vpop.f32.mrb[0].mxu0
      %v2628 = vadd.f32 0.0, %v2627
      %v2629 = vpop.f32.mrb[0].mxu0
      %2630 = vmatprep.mubr.f32.mxu0 %v1952
      %2631 = vmatmul.mubr.f32.gmra.mrb[0].mxu0 %v808
      %v2632 = vpop.f32.mrb[0].mxu0
      %v2633 = vadd.f32 0.0, %v2632
      %v2634 = vpop.f32.mrb[0].mxu0
      %2635 = vmatprep.mubr.f32.mxu0 %v1955
      %2636 = vmatmul.mubr.f32.gmra.mrb[0].mxu0 %v810
      %v2637 = vpop.f32.mrb[0].mxu0
      %v2638 = vadd.f32 0.0, %v2637
      %v2639 = vpop.f32.mrb[0].mxu0
      %2640 = vmatprep.mubr.f32.mxu0 %v1958
      %2641 = vmatmul.mubr.f32.gmra.mrb[0].mxu0 %v812
      %v2642 = vpop.f32.mrb[0].mxu0
      %v2643 = vadd.f32 0.0, %v2642
      %v2644 = vpop.f32.mrb[0].mxu0
      %2645 = vmatprep.mubr.f32.mxu0 %v1961
      %2646 = vmatmul.mubr.f32.gmra.mrb[0].mxu0 %v814
      %v2647 = vpop.f32.mrb[0].mxu0
      %v2648 = vadd.f32 0.0, %v2647
      %v2649 = vpop.f32.mrb[0].mxu0
      %2650 = vmatprep.mubr.f32.mxu0 %v1964
      %2651 = vmatmul.mubr.f32.gmra.mrb[0].mxu0 %v816
      %v2652 = vpop.f32.mrb[0].mxu0
      %v2653 = vadd.f32 0.0, %v2652
      %v2654 = vpop.f32.mrb[0].mxu0
      %2655 = vmatprep.mubr.f32.mxu0 %v1967
      %2656 = vmatmul.mubr.f32.gmra.mrb[0].mxu0 %v818
      %v2657 = vpop.f32.mrb[0].mxu0
      %v2658 = vadd.f32 0.0, %v2657
      %v2659 = vpop.f32.mrb[0].mxu0
      %2660 = vmatprep.mubr.f32.mxu0 %v1970
      %2661 = vmatmul.mubr.f32.gmra.mrb[0].mxu0 %v820
      %v2662 = vpop.f32.mrb[0].mxu0
      %v2663 = vadd.f32 0.0, %v2662
      %v2664 = vpop.f32.mrb[0].mxu0
      %2665 = vmatprep.mubr.f32.mxu0 %v1973
      %2666 = vmatmul.mubr.f32.gmra.mrb[0].mxu0 %v822
      %v2667 = vpop.f32.mrb[0].mxu0
      %v2668 = vadd.f32 0.0, %v2667
      %v2669 = vpop.f32.mrb[0].mxu0
      %2670 = vmatprep.mubr.f32.mxu0 %v1976
      %2671 = vmatmul.mubr.f32.gmra.mrb[0].mxu0 %v824
      %v2672 = vpop.f32.mrb[0].mxu0
      %v2673 = vadd.f32 0.0, %v2672
      %v2674 = vpop.f32.mrb[0].mxu0
      %2675 = vmatprep.mubr.f32.mxu0 %v1979
      %2676 = vmatmul.mubr.f32.gmra.mrb[0].mxu0 %v826
      %v2677 = vpop.f32.mrb[0].mxu0
      %v2678 = vadd.f32 0.0, %v2677
      %v2679 = vpop.f32.mrb[0].mxu0
      %2680 = vmatprep.mubr.f32.mxu0 %v1982
      %2681 = vmatmul.mubr.f32.gmra.mrb[0].mxu0 %v828
      %v2682 = vpop.f32.mrb[0].mxu0
      %v2683 = vadd.f32 0.0, %v2682
      %v2684 = vpop.f32.mrb[0].mxu0
      %2685 = vmatprep.mubr.f32.mxu0 %v1985
      %2686 = vmatmul.mubr.f32.gmra.mrb[0].mxu0 %v830
      %v2687 = vpop.f32.mrb[0].mxu0
      %v2688 = vadd.f32 0.0, %v2687
      %v2689 = vpop.f32.mrb[0].mxu0
      %2690 = vmatprep.mubr.f32.mxu0 %v1988
      %2691 = vmatmul.mubr.f32.gmra.mrb[0].mxu0 %v832
      %v2692 = vpop.f32.mrb[0].mxu0
      %v2693 = vadd.f32 0.0, %v2692
      %v2694 = vpop.f32.mrb[0].mxu0
      %2695 = vmatprep.mubr.f32.mxu0 %v1991
      %2696 = vmatmul.mubr.f32.gmra.mrb[0].mxu0 %v834
      %v2697 = vpop.f32.mrb[0].mxu0
      %v2698 = vadd.f32 0.0, %v2697
      %v2699 = vpop.f32.mrb[0].mxu0
      %2700 = vdwg.mxu0
      %v2701 = vld [vmem:[%s3] sm:$0xff]
      %v2702 = vld [vmem:[%s3 + $0x8] sm:$0xff]
      %v2703 = vld [vmem:[%s3 + $0x10] sm:$0xff]
      %v2704 = vld [vmem:[%s3 + $0x18] sm:$0xff]
      %v2705 = vld [vmem:[%s3 + $0x20] sm:$0xff]
      %v2706 = vld [vmem:[%s3 + $0x28] sm:$0xff]
      %v2707 = vld [vmem:[%s3 + $0x30] sm:$0xff]
      %v2708 = vld [vmem:[%s3 + $0x38] sm:$0xff]
      %v2709 = vld [vmem:[%s3 + $0x40] sm:$0xff]
      %v2710 = vld [vmem:[%s3 + $0x48] sm:$0xff]
      %v2711 = vld [vmem:[%s3 + $0x50] sm:$0xff]
      %v2712 = vld [vmem:[%s3 + $0x58] sm:$0xff]
      %v2713 = vld [vmem:[%s3 + $0x60] sm:$0xff]
      %v2714 = vld [vmem:[%s3 + $0x68] sm:$0xff]
      %v2715 = vld [vmem:[%s3 + $0x70] sm:$0xff]
      %v2716 = vld [vmem:[%s3 + $0x78] sm:$0xff]
      %v2717 = vld [vmem:[%s3 + $0x80] sm:$0xff]
      %v2718 = vld [vmem:[%s3 + $0x88] sm:$0xff]
      %v2719 = vld [vmem:[%s3 + $0x90] sm:$0xff]
      %v2720 = vld [vmem:[%s3 + $0x98] sm:$0xff]
      %v2721 = vld [vmem:[%s3 + $0xa0] sm:$0xff]
      %v2722 = vld [vmem:[%s3 + $0xa8] sm:$0xff]
      %v2723 = vld [vmem:[%s3 + $0xb0] sm:$0xff]
      %v2724 = vld [vmem:[%s3 + $0xb8] sm:$0xff]
      %v2725 = vld [vmem:[%s3 + $0xc0] sm:$0xff]
      %v2726 = vld [vmem:[%s3 + $0xc8] sm:$0xff]
      %v2727 = vld [vmem:[%s3 + $0xd0] sm:$0xff]
      %v2728 = vld [vmem:[%s3 + $0xd8] sm:$0xff]
      %v2729 = vld [vmem:[%s3 + $0xe0] sm:$0xff]
      %v2730 = vld [vmem:[%s3 + $0xe8] sm:$0xff]
      %v2731 = vld [vmem:[%s3 + $0xf0] sm:$0xff]
      %v2732 = vld [vmem:[%s3 + $0xf8] sm:$0xff]
      %v2733 = vld [vmem:[%s3 + $0x100] sm:$0xff]
      %v2734 = vld [vmem:[%s3 + $0x108] sm:$0xff]
      %v2735 = vld [vmem:[%s3 + $0x110] sm:$0xff]
      %v2736 = vld [vmem:[%s3 + $0x118] sm:$0xff]
      %v2737 = vld [vmem:[%s3 + $0x120] sm:$0xff]
      %v2738 = vld [vmem:[%s3 + $0x128] sm:$0xff]
      %v2739 = vld [vmem:[%s3 + $0x130] sm:$0xff]
      %v2740 = vld [vmem:[%s3 + $0x138] sm:$0xff]
      %v2741 = vld [vmem:[%s3 + $0x140] sm:$0xff]
      %v2742 = vld [vmem:[%s3 + $0x148] sm:$0xff]
      %v2743 = vld [vmem:[%s3 + $0x150] sm:$0xff]
      %v2744 = vld [vmem:[%s3 + $0x158] sm:$0xff]
      %v2745 = vld [vmem:[%s3 + $0x160] sm:$0xff]
      %v2746 = vld [vmem:[%s3 + $0x168] sm:$0xff]
      %v2747 = vld [vmem:[%s3 + $0x170] sm:$0xff]
      %v2748 = vld [vmem:[%s3 + $0x178] sm:$0xff]
      %v2749 = vld [vmem:[%s3 + $0x180] sm:$0xff]
      %v2750 = vld [vmem:[%s3 + $0x188] sm:$0xff]
      %v2751 = vld [vmem:[%s3 + $0x190] sm:$0xff]
      %v2752 = vld [vmem:[%s3 + $0x198] sm:$0xff]
      %v2753 = vld [vmem:[%s3 + $0x1a0] sm:$0xff]
      %v2754 = vld [vmem:[%s3 + $0x1a8] sm:$0xff]
      %v2755 = vld [vmem:[%s3 + $0x1b0] sm:$0xff]
      %v2756 = vld [vmem:[%s3 + $0x1b8] sm:$0xff]
      %v2757 = vld [vmem:[%s3 + $0x1c0] sm:$0xff]
      %v2758 = vld [vmem:[%s3 + $0x1c8] sm:$0xff]
      %v2759 = vld [vmem:[%s3 + $0x1d0] sm:$0xff]
      %v2760 = vld [vmem:[%s3 + $0x1d8] sm:$0xff]
      %v2761 = vld [vmem:[%s3 + $0x1e0] sm:$0xff]
      %v2762 = vld [vmem:[%s3 + $0x1e8] sm:$0xff]
      %v2763 = vld [vmem:[%s3 + $0x1f0] sm:$0xff]
      %v2764 = vld [vmem:[%s3 + $0x1f8] sm:$0xff]
      %v2765 = vld [vmem:[%s3 + $0x200] sm:$0xff]
      %v2766 = vld [vmem:[%s3 + $0x208] sm:$0xff]
      %v2767 = vld [vmem:[%s3 + $0x210] sm:$0xff]
      %v2768 = vld [vmem:[%s3 + $0x218] sm:$0xff]
      %v2769 = vld [vmem:[%s3 + $0x220] sm:$0xff]
      %v2770 = vld [vmem:[%s3 + $0x228] sm:$0xff]
      %v2771 = vld [vmem:[%s3 + $0x230] sm:$0xff]
      %v2772 = vld [vmem:[%s3 + $0x238] sm:$0xff]
      %v2773 = vld [vmem:[%s3 + $0x240] sm:$0xff]
      %v2774 = vld [vmem:[%s3 + $0x248] sm:$0xff]
      %v2775 = vld [vmem:[%s3 + $0x250] sm:$0xff]
      %v2776 = vld [vmem:[%s3 + $0x258] sm:$0xff]
      %v2777 = vld [vmem:[%s3 + $0x260] sm:$0xff]
      %v2778 = vld [vmem:[%s3 + $0x268] sm:$0xff]
      %v2779 = vld [vmem:[%s3 + $0x270] sm:$0xff]
      %v2780 = vld [vmem:[%s3 + $0x278] sm:$0xff]
      %v2781 = vld [vmem:[%s3 + $0x280] sm:$0xff]
      %v2782 = vld [vmem:[%s3 + $0x288] sm:$0xff]
      %v2783 = vld [vmem:[%s3 + $0x290] sm:$0xff]
      %v2784 = vld [vmem:[%s3 + $0x298] sm:$0xff]
      %v2785 = vld [vmem:[%s3 + $0x2a0] sm:$0xff]
      %v2786 = vld [vmem:[%s3 + $0x2a8] sm:$0xff]
      %v2787 = vld [vmem:[%s3 + $0x2b0] sm:$0xff]
      %v2788 = vld [vmem:[%s3 + $0x2b8] sm:$0xff]
      %v2789 = vld [vmem:[%s3 + $0x2c0] sm:$0xff]
      %v2790 = vld [vmem:[%s3 + $0x2c8] sm:$0xff]
      %v2791 = vld [vmem:[%s3 + $0x2d0] sm:$0xff]
      %v2792 = vld [vmem:[%s3 + $0x2d8] sm:$0xff]
      %v2793 = vld [vmem:[%s3 + $0x2e0] sm:$0xff]
      %v2794 = vld [vmem:[%s3 + $0x2e8] sm:$0xff]
      %v2795 = vld [vmem:[%s3 + $0x2f0] sm:$0xff]
      %v2796 = vld [vmem:[%s3 + $0x2f8] sm:$0xff]
      %v2797 = vld [vmem:[%s3 + $0x300] sm:$0xff]
      %v2798 = vld [vmem:[%s3 + $0x308] sm:$0xff]
      %v2799 = vld [vmem:[%s3 + $0x310] sm:$0xff]
      %v2800 = vld [vmem:[%s3 + $0x318] sm:$0xff]
      %v2801 = vld [vmem:[%s3 + $0x320] sm:$0xff]
      %v2802 = vld [vmem:[%s3 + $0x328] sm:$0xff]
      %v2803 = vld [vmem:[%s3 + $0x330] sm:$0xff]
      %v2804 = vld [vmem:[%s3 + $0x338] sm:$0xff]
      %v2805 = vld [vmem:[%s3 + $0x340] sm:$0xff]
      %v2806 = vld [vmem:[%s3 + $0x348] sm:$0xff]
      %v2807 = vld [vmem:[%s3 + $0x350] sm:$0xff]
      %v2808 = vld [vmem:[%s3 + $0x358] sm:$0xff]
      %v2809 = vld [vmem:[%s3 + $0x360] sm:$0xff]
      %v2810 = vld [vmem:[%s3 + $0x368] sm:$0xff]
      %v2811 = vld [vmem:[%s3 + $0x370] sm:$0xff]
      %v2812 = vld [vmem:[%s3 + $0x378] sm:$0xff]
      %v2813 = vld [vmem:[%s3 + $0x380] sm:$0xff]
      %v2814 = vld [vmem:[%s3 + $0x388] sm:$0xff]
      %v2815 = vld [vmem:[%s3 + $0x390] sm:$0xff]
      %v2816 = vld [vmem:[%s3 + $0x398] sm:$0xff]
      %v2817 = vld [vmem:[%s3 + $0x3a0] sm:$0xff]
      %v2818 = vld [vmem:[%s3 + $0x3a8] sm:$0xff]
      %v2819 = vld [vmem:[%s3 + $0x3b0] sm:$0xff]
      %v2820 = vld [vmem:[%s3 + $0x3b8] sm:$0xff]
      %v2821 = vld [vmem:[%s3 + $0x3c0] sm:$0xff]
      %v2822 = vld [vmem:[%s3 + $0x3c8] sm:$0xff]
      %v2823 = vld [vmem:[%s3 + $0x3d0] sm:$0xff]
      %v2824 = vld [vmem:[%s3 + $0x3d8] sm:$0xff]
      %v2825 = vld [vmem:[%s3 + $0x3e0] sm:$0xff]
      %v2826 = vld [vmem:[%s3 + $0x3e8] sm:$0xff]
      %v2827 = vld [vmem:[%s3 + $0x3f0] sm:$0xff]
      %v2828 = vld [vmem:[%s3 + $0x3f8] sm:$0xff]
      %v2829 = vmul.f32 %v2063, %v2701
      %v2830 = vmul.f32 %v2068, %v2702
      %v2831 = vmul.f32 %v2073, %v2703
      %v2832 = vmul.f32 %v2078, %v2704
      %v2833 = vmul.f32 %v2083, %v2705
      %v2834 = vmul.f32 %v2088, %v2706
      %v2835 = vmul.f32 %v2093, %v2707
      %v2836 = vmul.f32 %v2098, %v2708
      %v2837 = vmul.f32 %v2103, %v2709
      %v2838 = vmul.f32 %v2108, %v2710
      %v2839 = vmul.f32 %v2113, %v2711
      %v2840 = vmul.f32 %v2118, %v2712
      %v2841 = vmul.f32 %v2123, %v2713
      %v2842 = vmul.f32 %v2128, %v2714
      %v2843 = vmul.f32 %v2133, %v2715
      %v2844 = vmul.f32 %v2138, %v2716
      %v2845 = vmul.f32 %v2143, %v2717
      %v2846 = vmul.f32 %v2148, %v2718
      %v2847 = vmul.f32 %v2153, %v2719
      %v2848 = vmul.f32 %v2158, %v2720
      %v2849 = vmul.f32 %v2163, %v2721
      %v2850 = vmul.f32 %v2168, %v2722
      %v2851 = vmul.f32 %v2173, %v2723
      %v2852 = vmul.f32 %v2178, %v2724
      %v2853 = vmul.f32 %v2183, %v2725
      %v2854 = vmul.f32 %v2188, %v2726
      %v2855 = vmul.f32 %v2193, %v2727
      %v2856 = vmul.f32 %v2198, %v2728
      %v2857 = vmul.f32 %v2203, %v2729
      %v2858 = vmul.f32 %v2208, %v2730
      %v2859 = vmul.f32 %v2213, %v2731
      %v2860 = vmul.f32 %v2218, %v2732
      %v2861 = vmul.f32 %v2223, %v2733
      %v2862 = vmul.f32 %v2228, %v2734
      %v2863 = vmul.f32 %v2233, %v2735
      %v2864 = vmul.f32 %v2238, %v2736
      %v2865 = vmul.f32 %v2243, %v2737
      %v2866 = vmul.f32 %v2248, %v2738
      %v2867 = vmul.f32 %v2253, %v2739
      %v2868 = vmul.f32 %v2258, %v2740
      %v2869 = vmul.f32 %v2263, %v2741
      %v2870 = vmul.f32 %v2268, %v2742
      %v2871 = vmul.f32 %v2273, %v2743
      %v2872 = vmul.f32 %v2278, %v2744
      %v2873 = vmul.f32 %v2283, %v2745
      %v2874 = vmul.f32 %v2288, %v2746
      %v2875 = vmul.f32 %v2293, %v2747
      %v2876 = vmul.f32 %v2298, %v2748
      %v2877 = vmul.f32 %v2303, %v2749
      %v2878 = vmul.f32 %v2308, %v2750
      %v2879 = vmul.f32 %v2313, %v2751
      %v2880 = vmul.f32 %v2318, %v2752
      %v2881 = vmul.f32 %v2323, %v2753
      %v2882 = vmul.f32 %v2328, %v2754
      %v2883 = vmul.f32 %v2333, %v2755
      %v2884 = vmul.f32 %v2338, %v2756
      %v2885 = vmul.f32 %v2343, %v2757
      %v2886 = vmul.f32 %v2348, %v2758
      %v2887 = vmul.f32 %v2353, %v2759
      %v2888 = vmul.f32 %v2358, %v2760
      %v2889 = vmul.f32 %v2363, %v2761
      %v2890 = vmul.f32 %v2368, %v2762
      %v2891 = vmul.f32 %v2373, %v2763
      %v2892 = vmul.f32 %v2378, %v2764
      %v2893 = vmul.f32 %v2383, %v2765
      %v2894 = vmul.f32 %v2388, %v2766
      %v2895 = vmul.f32 %v2393, %v2767
      %v2896 = vmul.f32 %v2398, %v2768
      %v2897 = vmul.f32 %v2403, %v2769
      %v2898 = vmul.f32 %v2408, %v2770
      %v2899 = vmul.f32 %v2413, %v2771
      %v2900 = vmul.f32 %v2418, %v2772
      %v2901 = vmul.f32 %v2423, %v2773
      %v2902 = vmul.f32 %v2428, %v2774
      %v2903 = vmul.f32 %v2433, %v2775
      %v2904 = vmul.f32 %v2438, %v2776
      %v2905 = vmul.f32 %v2443, %v2777
      %v2906 = vmul.f32 %v2448, %v2778
      %v2907 = vmul.f32 %v2453, %v2779
      %v2908 = vmul.f32 %v2458, %v2780
      %v2909 = vmul.f32 %v2463, %v2781
      %v2910 = vmul.f32 %v2468, %v2782
      %v2911 = vmul.f32 %v2473, %v2783
      %v2912 = vmul.f32 %v2478, %v2784
      %v2913 = vmul.f32 %v2483, %v2785
      %v2914 = vmul.f32 %v2488, %v2786
      %v2915 = vmul.f32 %v2493, %v2787
      %v2916 = vmul.f32 %v2498, %v2788
      %v2917 = vmul.f32 %v2503, %v2789
      %v2918 = vmul.f32 %v2508, %v2790
      %v2919 = vmul.f32 %v2513, %v2791
      %v2920 = vmul.f32 %v2518, %v2792
      %v2921 = vmul.f32 %v2523, %v2793
      %v2922 = vmul.f32 %v2528, %v2794
      %v2923 = vmul.f32 %v2533, %v2795
      %v2924 = vmul.f32 %v2538, %v2796
      %v2925 = vmul.f32 %v2543, %v2797
      %v2926 = vmul.f32 %v2548, %v2798
      %v2927 = vmul.f32 %v2553, %v2799
      %v2928 = vmul.f32 %v2558, %v2800
      %v2929 = vmul.f32 %v2563, %v2801
      %v2930 = vmul.f32 %v2568, %v2802
      %v2931 = vmul.f32 %v2573, %v2803
      %v2932 = vmul.f32 %v2578, %v2804
      %v2933 = vmul.f32 %v2583, %v2805
      %v2934 = vmul.f32 %v2588, %v2806
      %v2935 = vmul.f32 %v2593, %v2807
      %v2936 = vmul.f32 %v2598, %v2808
      %v2937 = vmul.f32 %v2603, %v2809
      %v2938 = vmul.f32 %v2608, %v2810
      %v2939 = vmul.f32 %v2613, %v2811
      %v2940 = vmul.f32 %v2618, %v2812
      %v2941 = vmul.f32 %v2623, %v2813
      %v2942 = vmul.f32 %v2628, %v2814
      %v2943 = vmul.f32 %v2633, %v2815
      %v2944 = vmul.f32 %v2638, %v2816
      %v2945 = vmul.f32 %v2643, %v2817
      %v2946 = vmul.f32 %v2648, %v2818
      %v2947 = vmul.f32 %v2653, %v2819
      %v2948 = vmul.f32 %v2658, %v2820
      %v2949 = vmul.f32 %v2663, %v2821
      %v2950 = vmul.f32 %v2668, %v2822
      %v2951 = vmul.f32 %v2673, %v2823
      %v2952 = vmul.f32 %v2678, %v2824
      %v2953 = vmul.f32 %v2683, %v2825
      %v2954 = vmul.f32 %v2688, %v2826
      %v2955 = vmul.f32 %v2693, %v2827
      %v2956 = vmul.f32 %v2698, %v2828
      %vm2957 = vcmask 64512
      %v2959 = vsel %vm2957, %v2829, 0
      %v2962 = vsel %vm2957, %v2830, 0
      %v2965 = vsel %vm2957, %v2831, 0
      %v2968 = vsel %vm2957, %v2832, 0
      %v2971 = vsel %vm2957, %v2833, 0
      %v2974 = vsel %vm2957, %v2834, 0
      %v2977 = vsel %vm2957, %v2835, 0
      %v2980 = vsel %vm2957, %v2836, 0
      %v2983 = vsel %vm2957, %v2837, 0
      %v2986 = vsel %vm2957, %v2838, 0
      %v2989 = vsel %vm2957, %v2839, 0
      %v2992 = vsel %vm2957, %v2840, 0
      %v2995 = vsel %vm2957, %v2841, 0
      %v2998 = vsel %vm2957, %v2842, 0
      %v3001 = vsel %vm2957, %v2843, 0
      %v3004 = vsel %vm2957, %v2844, 0
      %v3007 = vsel %vm2957, %v2845, 0
      %v3010 = vsel %vm2957, %v2846, 0
      %v3013 = vsel %vm2957, %v2847, 0
      %v3016 = vsel %vm2957, %v2848, 0
      %v3019 = vsel %vm2957, %v2849, 0
      %v3022 = vsel %vm2957, %v2850, 0
      %v3025 = vsel %vm2957, %v2851, 0
      %v3028 = vsel %vm2957, %v2852, 0
      %v3031 = vsel %vm2957, %v2853, 0
      %v3034 = vsel %vm2957, %v2854, 0
      %v3037 = vsel %vm2957, %v2855, 0
      %v3040 = vsel %vm2957, %v2856, 0
      %v3043 = vsel %vm2957, %v2857, 0
      %v3046 = vsel %vm2957, %v2858, 0
      %v3049 = vsel %vm2957, %v2859, 0
      %v3052 = vsel %vm2957, %v2860, 0
      %v3055 = vsel %vm2957, %v2861, 0
      %v3058 = vsel %vm2957, %v2862, 0
      %v3061 = vsel %vm2957, %v2863, 0
      %v3064 = vsel %vm2957, %v2864, 0
      %v3067 = vsel %vm2957, %v2865, 0
      %v3070 = vsel %vm2957, %v2866, 0
      %v3073 = vsel %vm2957, %v2867, 0
      %v3076 = vsel %vm2957, %v2868, 0
      %v3079 = vsel %vm2957, %v2869, 0
      %v3082 = vsel %vm2957, %v2870, 0
      %v3085 = vsel %vm2957, %v2871, 0
      %v3088 = vsel %vm2957, %v2872, 0
      %v3091 = vsel %vm2957, %v2873, 0
      %v3094 = vsel %vm2957, %v2874, 0
      %v3097 = vsel %vm2957, %v2875, 0
      %v3100 = vsel %vm2957, %v2876, 0
      %v3103 = vsel %vm2957, %v2877, 0
      %v3106 = vsel %vm2957, %v2878, 0
      %v3109 = vsel %vm2957, %v2879, 0
      %v3112 = vsel %vm2957, %v2880, 0
      %v3115 = vsel %vm2957, %v2881, 0
      %v3118 = vsel %vm2957, %v2882, 0
      %v3121 = vsel %vm2957, %v2883, 0
      %v3124 = vsel %vm2957, %v2884, 0
      %v3127 = vsel %vm2957, %v2885, 0
      %v3130 = vsel %vm2957, %v2886, 0
      %v3133 = vsel %vm2957, %v2887, 0
      %v3136 = vsel %vm2957, %v2888, 0
      %v3139 = vsel %vm2957, %v2889, 0
      %v3142 = vsel %vm2957, %v2890, 0
      %v3145 = vsel %vm2957, %v2891, 0
      %v3148 = vsel %vm2957, %v2892, 0
      %v3151 = vsel %vm2957, %v2893, 0
      %v3154 = vsel %vm2957, %v2894, 0
      %v3157 = vsel %vm2957, %v2895, 0
      %v3160 = vsel %vm2957, %v2896, 0
      %v3163 = vsel %vm2957, %v2897, 0
      %v3166 = vsel %vm2957, %v2898, 0
      %v3169 = vsel %vm2957, %v2899, 0
      %v3172 = vsel %vm2957, %v2900, 0
      %v3175 = vsel %vm2957, %v2901, 0
      %v3178 = vsel %vm2957, %v2902, 0
      %v3181 = vsel %vm2957, %v2903, 0
      %v3184 = vsel %vm2957, %v2904, 0
      %v3187 = vsel %vm2957, %v2905, 0
      %v3190 = vsel %vm2957, %v2906, 0
      %v3193 = vsel %vm2957, %v2907, 0
      %v3196 = vsel %vm2957, %v2908, 0
      %v3199 = vsel %vm2957, %v2909, 0
      %v3202 = vsel %vm2957, %v2910, 0
      %v3205 = vsel %vm2957, %v2911, 0
      %v3208 = vsel %vm2957, %v2912, 0
      %v3211 = vsel %vm2957, %v2913, 0
      %v3214 = vsel %vm2957, %v2914, 0
      %v3217 = vsel %vm2957, %v2915, 0
      %v3220 = vsel %vm2957, %v2916, 0
      %v3223 = vsel %vm2957, %v2917, 0
      %v3226 = vsel %vm2957, %v2918, 0
      %v3229 = vsel %vm2957, %v2919, 0
      %v3232 = vsel %vm2957, %v2920, 0
      %v3235 = vsel %vm2957, %v2921, 0
      %v3238 = vsel %vm2957, %v2922, 0
      %v3241 = vsel %vm2957, %v2923, 0
      %v3244 = vsel %vm2957, %v2924, 0
      %v3247 = vsel %vm2957, %v2925, 0
      %v3250 = vsel %vm2957, %v2926, 0
      %v3253 = vsel %vm2957, %v2927, 0
      %v3256 = vsel %vm2957, %v2928, 0
      %v3259 = vsel %vm2957, %v2929, 0
      %v3262 = vsel %vm2957, %v2930, 0
      %v3265 = vsel %vm2957, %v2931, 0
      %v3268 = vsel %vm2957, %v2932, 0
      %v3271 = vsel %vm2957, %v2933, 0
      %v3274 = vsel %vm2957, %v2934, 0
      %v3277 = vsel %vm2957, %v2935, 0
      %v3280 = vsel %vm2957, %v2936, 0
      %v3283 = vsel %vm2957, %v2937, 0
      %v3286 = vsel %vm2957, %v2938, 0
      %v3289 = vsel %vm2957, %v2939, 0
      %v3292 = vsel %vm2957, %v2940, 0
      %v3295 = vsel %vm2957, %v2941, 0
      %v3298 = vsel %vm2957, %v2942, 0
      %v3301 = vsel %vm2957, %v2943, 0
      %v3304 = vsel %vm2957, %v2944, 0
      %v3307 = vsel %vm2957, %v2945, 0
      %v3310 = vsel %vm2957, %v2946, 0
      %v3313 = vsel %vm2957, %v2947, 0
      %v3316 = vsel %vm2957, %v2948, 0
      %v3319 = vsel %vm2957, %v2949, 0
      %v3322 = vsel %vm2957, %v2950, 0
      %v3325 = vsel %vm2957, %v2951, 0
      %v3328 = vsel %vm2957, %v2952, 0
      %v3331 = vsel %vm2957, %v2953, 0
      %v3334 = vsel %vm2957, %v2954, 0
      %v3337 = vsel %vm2957, %v2955, 0
      %v3340 = vsel %vm2957, %v2956, 0
      %3342 = vmatprep.subr.mxu0 0.0
      %3343 = vmatpush1.msra.mxu0 1.0
      %3344 = vmatprep.subr.mxu0 0.0
      %3345 = vmatpush1.msra.mxu0 0.0
      %3346 = vmatprep.subr.mxu0 0.0
      %3347 = vmatpush1.msra.mxu0 0.0
      %3348 = vmatprep.subr.mxu0 0.0
      %3349 = vmatpush1.msra.mxu0 0.0
      %3350 = vmatprep.subr.mxu0 0.0
      %3351 = vmatpush1.msra.mxu0 0.0
      %3352 = vmatprep.subr.mxu0 0.0
      %3353 = vmatpush1.msra.mxu0 0.0
      %3354 = vmatprep.subr.mxu0 0.0
      %3355 = vmatpush1.msra.mxu0 0.0
      %3356 = vmatprep.subr.mxu0 0.0
      %3357 = vmatpush1.msra.mxu0 0.0
      %3358 = vmatprep.subr.mxu0 0.0
      %3359 = vmatpush1.msra.mxu0 0.0
      %3360 = vmatprep.subr.mxu0 0.0
      %3361 = vmatpush1.msra.mxu0 0.0
      %3362 = vmatprep.subr.mxu0 0.0
      %3363 = vmatpush1.msra.mxu0 0.0
      %3364 = vmatprep.subr.mxu0 0.0
      %3365 = vmatpush1.msra.mxu0 0.0
      %3366 = vmatprep.subr.mxu0 0.0
      %3367 = vmatpush1.msra.mxu0 0.0
      %3368 = vmatprep.subr.mxu0 0.0
      %3369 = vmatpush1.msra.mxu0 0.0
      %3370 = vmatprep.subr.mxu0 0.0
      %3371 = vmatpush1.msra.mxu0 0.0
      %3372 = vmatprep.subr.mxu0 0.0
      %3373 = vmatpush1.msra.mxu0 0.0
      %3374 = vmatprep.subr.mxu0 0.0
      %3375 = vmatpush1.msra.mxu0 0.0
      %3376 = vmatprep.subr.mxu0 0.0
      %3377 = vmatpush1.msra.mxu0 0.0
      %3378 = vmatprep.subr.mxu0 0.0
      %3379 = vmatpush1.msra.mxu0 0.0
      %3380 = vmatprep.subr.mxu0 0.0
      %3381 = vmatpush1.msra.mxu0 0.0
      %3382 = vmatprep.subr.mxu0 0.0
      %3383 = vmatpush1.msra.mxu0 0.0
      %3384 = vmatprep.subr.mxu0 0.0
      %3385 = vmatpush1.msra.mxu0 0.0
      %3386 = vmatprep.subr.mxu0 0.0
      %3387 = vmatpush1.msra.mxu0 0.0
      %3388 = vmatprep.subr.mxu0 0.0
      %3389 = vmatpush1.msra.mxu0 0.0
      %3390 = vmatprep.subr.mxu0 0.0
      %3391 = vmatpush1.msra.mxu0 0.0
      %3392 = vmatprep.subr.mxu0 0.0
      %3393 = vmatpush1.msra.mxu0 0.0
      %3394 = vmatprep.subr.mxu0 0.0
      %3395 = vmatpush1.msra.mxu0 0.0
      %3396 = vmatprep.subr.mxu0 0.0
      %3397 = vmatpush1.msra.mxu0 0.0
      %3398 = vmatprep.subr.mxu0 0.0
      %3399 = vmatpush1.msra.mxu0 0.0
      %3400 = vmatprep.subr.mxu0 0.0
      %3401 = vmatpush1.msra.mxu0 0.0
      %3402 = vmatprep.subr.mxu0 0.0
      %3403 = vmatpush1.msra.mxu0 0.0
      %3404 = vmatprep.subr.mxu0 0.0
      %3405 = vmatpush1.msra.mxu0 0.0
      %3406 = vmatprep.mubr.f32.mxu0 0.0
      %3407 = vmatmul.mubr.f32.gmra.mrb[0].mxu0 %v2959
      %v3408 = vpop.f32.mrb[0].mxu0
      %v3409 = vadd.f32 0.0, %v3408
      %v3410 = vpop.f32.mrb[0].mxu0
      %3411 = vmatprep.mubr.f32.mxu0 0.0
      %3412 = vmatmul.mubr.f32.gmra.mrb[0].mxu0 %v2962
      %v3413 = vpop.f32.mrb[0].mxu0
      %v3414 = vadd.f32 0.0, %v3413
      %v3415 = vpop.f32.mrb[0].mxu0
      %3416 = vmatprep.mubr.f32.mxu0 0.0
      %3417 = vmatmul.mubr.f32.gmra.mrb[0].mxu0 %v2965
      %v3418 = vpop.f32.mrb[0].mxu0
      %v3419 = vadd.f32 0.0, %v3418
      %v3420 = vpop.f32.mrb[0].mxu0
      %3421 = vmatprep.mubr.f32.mxu0 0.0
      %3422 = vmatmul.mubr.f32.gmra.mrb[0].mxu0 %v2968
      %v3423 = vpop.f32.mrb[0].mxu0
      %v3424 = vadd.f32 0.0, %v3423
      %v3425 = vpop.f32.mrb[0].mxu0
      %3426 = vmatprep.mubr.f32.mxu0 0.0
      %3427 = vmatmul.mubr.f32.gmra.mrb[0].mxu0 %v2971
      %v3428 = vpop.f32.mrb[0].mxu0
      %v3429 = vadd.f32 0.0, %v3428
      %v3430 = vpop.f32.mrb[0].mxu0
      %3431 = vmatprep.mubr.f32.mxu0 0.0
      %3432 = vmatmul.mubr.f32.gmra.mrb[0].mxu0 %v2974
      %v3433 = vpop.f32.mrb[0].mxu0
      %v3434 = vadd.f32 0.0, %v3433
      %v3435 = vpop.f32.mrb[0].mxu0
      %3436 = vmatprep.mubr.f32.mxu0 0.0
      %3437 = vmatmul.mubr.f32.gmra.mrb[0].mxu0 %v2977
      %v3438 = vpop.f32.mrb[0].mxu0
      %v3439 = vadd.f32 0.0, %v3438
      %v3440 = vpop.f32.mrb[0].mxu0
      %3441 = vmatprep.mubr.f32.mxu0 0.0
      %3442 = vmatmul.mubr.f32.gmra.mrb[0].mxu0 %v2980
      %v3443 = vpop.f32.mrb[0].mxu0
      %v3444 = vadd.f32 0.0, %v3443
      %v3445 = vpop.f32.mrb[0].mxu0
      %3446 = vmatprep.mubr.f32.mxu0 0.0
      %3447 = vmatmul.mubr.f32.gmra.mrb[0].mxu0 %v2983
      %v3448 = vpop.f32.mrb[0].mxu0
      %v3449 = vadd.f32 0.0, %v3448
      %v3450 = vpop.f32.mrb[0].mxu0
      %3451 = vmatprep.mubr.f32.mxu0 0.0
      %3452 = vmatmul.mubr.f32.gmra.mrb[0].mxu0 %v2986
      %v3453 = vpop.f32.mrb[0].mxu0
      %v3454 = vadd.f32 0.0, %v3453
      %v3455 = vpop.f32.mrb[0].mxu0
      %3456 = vmatprep.mubr.f32.mxu0 0.0
      %3457 = vmatmul.mubr.f32.gmra.mrb[0].mxu0 %v2989
      %v3458 = vpop.f32.mrb[0].mxu0
      %v3459 = vadd.f32 0.0, %v3458
      %v3460 = vpop.f32.mrb[0].mxu0
      %3461 = vmatprep.mubr.f32.mxu0 0.0
      %3462 = vmatmul.mubr.f32.gmra.mrb[0].mxu0 %v2992
      %v3463 = vpop.f32.mrb[0].mxu0
      %v3464 = vadd.f32 0.0, %v3463
      %v3465 = vpop.f32.mrb[0].mxu0
      %3466 = vmatprep.mubr.f32.mxu0 0.0
      %3467 = vmatmul.mubr.f32.gmra.mrb[0].mxu0 %v2995
      %v3468 = vpop.f32.mrb[0].mxu0
      %v3469 = vadd.f32 0.0, %v3468
      %v3470 = vpop.f32.mrb[0].mxu0
      %3471 = vmatprep.mubr.f32.mxu0 0.0
      %3472 = vmatmul.mubr.f32.gmra.mrb[0].mxu0 %v2998
      %v3473 = vpop.f32.mrb[0].mxu0
      %v3474 = vadd.f32 0.0, %v3473
      %v3475 = vpop.f32.mrb[0].mxu0
      %3476 = vmatprep.mubr.f32.mxu0 0.0
      %3477 = vmatmul.mubr.f32.gmra.mrb[0].mxu0 %v3001
      %v3478 = vpop.f32.mrb[0].mxu0
      %v3479 = vadd.f32 0.0, %v3478
      %v3480 = vpop.f32.mrb[0].mxu0
      %3481 = vmatprep.mubr.f32.mxu0 0.0
      %3482 = vmatmul.mubr.f32.gmra.mrb[0].mxu0 %v3004
      %v3483 = vpop.f32.mrb[0].mxu0
      %v3484 = vadd.f32 0.0, %v3483
      %v3485 = vpop.f32.mrb[0].mxu0
      %3486 = vmatprep.mubr.f32.mxu0 0.0
      %3487 = vmatmul.mubr.f32.gmra.mrb[0].mxu0 %v3007
      %v3488 = vpop.f32.mrb[0].mxu0
      %v3489 = vadd.f32 0.0, %v3488
      %v3490 = vpop.f32.mrb[0].mxu0
      %3491 = vmatprep.mubr.f32.mxu0 0.0
      %3492 = vmatmul.mubr.f32.gmra.mrb[0].mxu0 %v3010
      %v3493 = vpop.f32.mrb[0].mxu0
      %v3494 = vadd.f32 0.0, %v3493
      %v3495 = vpop.f32.mrb[0].mxu0
      %3496 = vmatprep.mubr.f32.mxu0 0.0
      %3497 = vmatmul.mubr.f32.gmra.mrb[0].mxu0 %v3013
      %v3498 = vpop.f32.mrb[0].mxu0
      %v3499 = vadd.f32 0.0, %v3498
      %v3500 = vpop.f32.mrb[0].mxu0
      %3501 = vmatprep.mubr.f32.mxu0 0.0
      %3502 = vmatmul.mubr.f32.gmra.mrb[0].mxu0 %v3016
      %v3503 = vpop.f32.mrb[0].mxu0
      %v3504 = vadd.f32 0.0, %v3503
      %v3505 = vpop.f32.mrb[0].mxu0
      %3506 = vmatprep.mubr.f32.mxu0 0.0
      %3507 = vmatmul.mubr.f32.gmra.mrb[0].mxu0 %v3019
      %v3508 = vpop.f32.mrb[0].mxu0
      %v3509 = vadd.f32 0.0, %v3508
      %v3510 = vpop.f32.mrb[0].mxu0
      %3511 = vmatprep.mubr.f32.mxu0 0.0
      %3512 = vmatmul.mubr.f32.gmra.mrb[0].mxu0 %v3022
      %v3513 = vpop.f32.mrb[0].mxu0
      %v3514 = vadd.f32 0.0, %v3513
      %v3515 = vpop.f32.mrb[0].mxu0
      %3516 = vmatprep.mubr.f32.mxu0 0.0
      %3517 = vmatmul.mubr.f32.gmra.mrb[0].mxu0 %v3025
      %v3518 = vpop.f32.mrb[0].mxu0
      %v3519 = vadd.f32 0.0, %v3518
      %v3520 = vpop.f32.mrb[0].mxu0
      %3521 = vmatprep.mubr.f32.mxu0 0.0
      %3522 = vmatmul.mubr.f32.gmra.mrb[0].mxu0 %v3028
      %v3523 = vpop.f32.mrb[0].mxu0
      %v3524 = vadd.f32 0.0, %v3523
      %v3525 = vpop.f32.mrb[0].mxu0
      %3526 = vmatprep.mubr.f32.mxu0 0.0
      %3527 = vmatmul.mubr.f32.gmra.mrb[0].mxu0 %v3031
      %v3528 = vpop.f32.mrb[0].mxu0
      %v3529 = vadd.f32 0.0, %v3528
      %v3530 = vpop.f32.mrb[0].mxu0
      %3531 = vmatprep.mubr.f32.mxu0 0.0
      %3532 = vmatmul.mubr.f32.gmra.mrb[0].mxu0 %v3034
      %v3533 = vpop.f32.mrb[0].mxu0
      %v3534 = vadd.f32 0.0, %v3533
      %v3535 = vpop.f32.mrb[0].mxu0
      %3536 = vmatprep.mubr.f32.mxu0 0.0
      %3537 = vmatmul.mubr.f32.gmra.mrb[0].mxu0 %v3037
      %v3538 = vpop.f32.mrb[0].mxu0
      %v3539 = vadd.f32 0.0, %v3538
      %v3540 = vpop.f32.mrb[0].mxu0
      %3541 = vmatprep.mubr.f32.mxu0 0.0
      %3542 = vmatmul.mubr.f32.gmra.mrb[0].mxu0 %v3040
      %v3543 = vpop.f32.mrb[0].mxu0
      %v3544 = vadd.f32 0.0, %v3543
      %v3545 = vpop.f32.mrb[0].mxu0
      %3546 = vmatprep.mubr.f32.mxu0 0.0
      %3547 = vmatmul.mubr.f32.gmra.mrb[0].mxu0 %v3043
      %v3548 = vpop.f32.mrb[0].mxu0
      %v3549 = vadd.f32 0.0, %v3548
      %v3550 = vpop.f32.mrb[0].mxu0
      %3551 = vmatprep.mubr.f32.mxu0 0.0
      %3552 = vmatmul.mubr.f32.gmra.mrb[0].mxu0 %v3046
      %v3553 = vpop.f32.mrb[0].mxu0
      %v3554 = vadd.f32 0.0, %v3553
      %v3555 = vpop.f32.mrb[0].mxu0
      %3556 = vmatprep.mubr.f32.mxu0 0.0
      %3557 = vmatmul.mubr.f32.gmra.mrb[0].mxu0 %v3049
      %v3558 = vpop.f32.mrb[0].mxu0
      %v3559 = vadd.f32 0.0, %v3558
      %v3560 = vpop.f32.mrb[0].mxu0
      %3561 = vmatprep.mubr.f32.mxu0 0.0
      %3562 = vmatmul.mubr.f32.gmra.mrb[0].mxu0 %v3052
      %v3563 = vpop.f32.mrb[0].mxu0
      %v3564 = vadd.f32 0.0, %v3563
      %v3565 = vpop.f32.mrb[0].mxu0
      %3566 = vmatprep.mubr.f32.mxu0 0.0
      %3567 = vmatmul.mubr.f32.gmra.mrb[0].mxu0 %v3055
      %v3568 = vpop.f32.mrb[0].mxu0
      %v3569 = vadd.f32 0.0, %v3568
      %v3570 = vpop.f32.mrb[0].mxu0
      %3571 = vmatprep.mubr.f32.mxu0 0.0
      %3572 = vmatmul.mubr.f32.gmra.mrb[0].mxu0 %v3058
      %v3573 = vpop.f32.mrb[0].mxu0
      %v3574 = vadd.f32 0.0, %v3573
      %v3575 = vpop.f32.mrb[0].mxu0
      %3576 = vmatprep.mubr.f32.mxu0 0.0
      %3577 = vmatmul.mubr.f32.gmra.mrb[0].mxu0 %v3061
      %v3578 = vpop.f32.mrb[0].mxu0
      %v3579 = vadd.f32 0.0, %v3578
      %v3580 = vpop.f32.mrb[0].mxu0
      %3581 = vmatprep.mubr.f32.mxu0 0.0
      %3582 = vmatmul.mubr.f32.gmra.mrb[0].mxu0 %v3064
      %v3583 = vpop.f32.mrb[0].mxu0
      %v3584 = vadd.f32 0.0, %v3583
      %v3585 = vpop.f32.mrb[0].mxu0
      %3586 = vmatprep.mubr.f32.mxu0 0.0
      %3587 = vmatmul.mubr.f32.gmra.mrb[0].mxu0 %v3067
      %v3588 = vpop.f32.mrb[0].mxu0
      %v3589 = vadd.f32 0.0, %v3588
      %v3590 = vpop.f32.mrb[0].mxu0
      %3591 = vmatprep.mubr.f32.mxu0 0.0
      %3592 = vmatmul.mubr.f32.gmra.mrb[0].mxu0 %v3070
      %v3593 = vpop.f32.mrb[0].mxu0
      %v3594 = vadd.f32 0.0, %v3593
      %v3595 = vpop.f32.mrb[0].mxu0
      %3596 = vmatprep.mubr.f32.mxu0 0.0
      %3597 = vmatmul.mubr.f32.gmra.mrb[0].mxu0 %v3073
      %v3598 = vpop.f32.mrb[0].mxu0
      %v3599 = vadd.f32 0.0, %v3598
      %v3600 = vpop.f32.mrb[0].mxu0
      %3601 = vmatprep.mubr.f32.mxu0 0.0
      %3602 = vmatmul.mubr.f32.gmra.mrb[0].mxu0 %v3076
      %v3603 = vpop.f32.mrb[0].mxu0
      %v3604 = vadd.f32 0.0, %v3603
      %v3605 = vpop.f32.mrb[0].mxu0
      %3606 = vmatprep.mubr.f32.mxu0 0.0
      %3607 = vmatmul.mubr.f32.gmra.mrb[0].mxu0 %v3079
      %v3608 = vpop.f32.mrb[0].mxu0
      %v3609 = vadd.f32 0.0, %v3608
      %v3610 = vpop.f32.mrb[0].mxu0
      %3611 = vmatprep.mubr.f32.mxu0 0.0
      %3612 = vmatmul.mubr.f32.gmra.mrb[0].mxu0 %v3082
      %v3613 = vpop.f32.mrb[0].mxu0
      %v3614 = vadd.f32 0.0, %v3613
      %v3615 = vpop.f32.mrb[0].mxu0
      %3616 = vmatprep.mubr.f32.mxu0 0.0
      %3617 = vmatmul.mubr.f32.gmra.mrb[0].mxu0 %v3085
      %v3618 = vpop.f32.mrb[0].mxu0
      %v3619 = vadd.f32 0.0, %v3618
      %v3620 = vpop.f32.mrb[0].mxu0
      %3621 = vmatprep.mubr.f32.mxu0 0.0
      %3622 = vmatmul.mubr.f32.gmra.mrb[0].mxu0 %v3088
      %v3623 = vpop.f32.mrb[0].mxu0
      %v3624 = vadd.f32 0.0, %v3623
      %v3625 = vpop.f32.mrb[0].mxu0
      %3626 = vmatprep.mubr.f32.mxu0 0.0
      %3627 = vmatmul.mubr.f32.gmra.mrb[0].mxu0 %v3091
      %v3628 = vpop.f32.mrb[0].mxu0
      %v3629 = vadd.f32 0.0, %v3628
      %v3630 = vpop.f32.mrb[0].mxu0
      %3631 = vmatprep.mubr.f32.mxu0 0.0
      %3632 = vmatmul.mubr.f32.gmra.mrb[0].mxu0 %v3094
      %v3633 = vpop.f32.mrb[0].mxu0
      %v3634 = vadd.f32 0.0, %v3633
      %v3635 = vpop.f32.mrb[0].mxu0
      %3636 = vmatprep.mubr.f32.mxu0 0.0
      %3637 = vmatmul.mubr.f32.gmra.mrb[0].mxu0 %v3097
      %v3638 = vpop.f32.mrb[0].mxu0
      %v3639 = vadd.f32 0.0, %v3638
      %v3640 = vpop.f32.mrb[0].mxu0
      %3641 = vmatprep.mubr.f32.mxu0 0.0
      %3642 = vmatmul.mubr.f32.gmra.mrb[0].mxu0 %v3100
      %v3643 = vpop.f32.mrb[0].mxu0
      %v3644 = vadd.f32 0.0, %v3643
      %v3645 = vpop.f32.mrb[0].mxu0
      %3646 = vmatprep.mubr.f32.mxu0 0.0
      %3647 = vmatmul.mubr.f32.gmra.mrb[0].mxu0 %v3103
      %v3648 = vpop.f32.mrb[0].mxu0
      %v3649 = vadd.f32 0.0, %v3648
      %v3650 = vpop.f32.mrb[0].mxu0
      %3651 = vmatprep.mubr.f32.mxu0 0.0
      %3652 = vmatmul.mubr.f32.gmra.mrb[0].mxu0 %v3106
      %v3653 = vpop.f32.mrb[0].mxu0
      %v3654 = vadd.f32 0.0, %v3653
      %v3655 = vpop.f32.mrb[0].mxu0
      %3656 = vmatprep.mubr.f32.mxu0 0.0
      %3657 = vmatmul.mubr.f32.gmra.mrb[0].mxu0 %v3109
      %v3658 = vpop.f32.mrb[0].mxu0
      %v3659 = vadd.f32 0.0, %v3658
      %v3660 = vpop.f32.mrb[0].mxu0
      %3661 = vmatprep.mubr.f32.mxu0 0.0
      %3662 = vmatmul.mubr.f32.gmra.mrb[0].mxu0 %v3112
      %v3663 = vpop.f32.mrb[0].mxu0
      %v3664 = vadd.f32 0.0, %v3663
      %v3665 = vpop.f32.mrb[0].mxu0
      %3666 = vmatprep.mubr.f32.mxu0 0.0
      %3667 = vmatmul.mubr.f32.gmra.mrb[0].mxu0 %v3115
      %v3668 = vpop.f32.mrb[0].mxu0
      %v3669 = vadd.f32 0.0, %v3668
      %v3670 = vpop.f32.mrb[0].mxu0
      %3671 = vmatprep.mubr.f32.mxu0 0.0
      %3672 = vmatmul.mubr.f32.gmra.mrb[0].mxu0 %v3118
      %v3673 = vpop.f32.mrb[0].mxu0
      %v3674 = vadd.f32 0.0, %v3673
      %v3675 = vpop.f32.mrb[0].mxu0
      %3676 = vmatprep.mubr.f32.mxu0 0.0
      %3677 = vmatmul.mubr.f32.gmra.mrb[0].mxu0 %v3121
      %v3678 = vpop.f32.mrb[0].mxu0
      %v3679 = vadd.f32 0.0, %v3678
      %v3680 = vpop.f32.mrb[0].mxu0
      %3681 = vmatprep.mubr.f32.mxu0 0.0
      %3682 = vmatmul.mubr.f32.gmra.mrb[0].mxu0 %v3124
      %v3683 = vpop.f32.mrb[0].mxu0
      %v3684 = vadd.f32 0.0, %v3683
      %v3685 = vpop.f32.mrb[0].mxu0
      %3686 = vmatprep.mubr.f32.mxu0 0.0
      %3687 = vmatmul.mubr.f32.gmra.mrb[0].mxu0 %v3127
      %v3688 = vpop.f32.mrb[0].mxu0
      %v3689 = vadd.f32 0.0, %v3688
      %v3690 = vpop.f32.mrb[0].mxu0
      %3691 = vmatprep.mubr.f32.mxu0 0.0
      %3692 = vmatmul.mubr.f32.gmra.mrb[0].mxu0 %v3130
      %v3693 = vpop.f32.mrb[0].mxu0
      %v3694 = vadd.f32 0.0, %v3693
      %v3695 = vpop.f32.mrb[0].mxu0
      %3696 = vmatprep.mubr.f32.mxu0 0.0
      %3697 = vmatmul.mubr.f32.gmra.mrb[0].mxu0 %v3133
      %v3698 = vpop.f32.mrb[0].mxu0
      %v3699 = vadd.f32 0.0, %v3698
      %v3700 = vpop.f32.mrb[0].mxu0
      %3701 = vmatprep.mubr.f32.mxu0 0.0
      %3702 = vmatmul.mubr.f32.gmra.mrb[0].mxu0 %v3136
      %v3703 = vpop.f32.mrb[0].mxu0
      %v3704 = vadd.f32 0.0, %v3703
      %v3705 = vpop.f32.mrb[0].mxu0
      %3706 = vmatprep.mubr.f32.mxu0 0.0
      %3707 = vmatmul.mubr.f32.gmra.mrb[0].mxu0 %v3139
      %v3708 = vpop.f32.mrb[0].mxu0
      %v3709 = vadd.f32 0.0, %v3708
      %v3710 = vpop.f32.mrb[0].mxu0
      %3711 = vmatprep.mubr.f32.mxu0 0.0
      %3712 = vmatmul.mubr.f32.gmra.mrb[0].mxu0 %v3142
      %v3713 = vpop.f32.mrb[0].mxu0
      %v3714 = vadd.f32 0.0, %v3713
      %v3715 = vpop.f32.mrb[0].mxu0
      %3716 = vmatprep.mubr.f32.mxu0 0.0
      %3717 = vmatmul.mubr.f32.gmra.mrb[0].mxu0 %v3145
      %v3718 = vpop.f32.mrb[0].mxu0
      %v3719 = vadd.f32 0.0, %v3718
      %v3720 = vpop.f32.mrb[0].mxu0
      %3721 = vmatprep.mubr.f32.mxu0 0.0
      %3722 = vmatmul.mubr.f32.gmra.mrb[0].mxu0 %v3148
      %v3723 = vpop.f32.mrb[0].mxu0
      %v3724 = vadd.f32 0.0, %v3723
      %v3725 = vpop.f32.mrb[0].mxu0
      %3726 = vmatprep.mubr.f32.mxu0 0.0
      %3727 = vmatmul.mubr.f32.gmra.mrb[0].mxu0 %v3151
      %v3728 = vpop.f32.mrb[0].mxu0
      %v3729 = vadd.f32 0.0, %v3728
      %v3730 = vpop.f32.mrb[0].mxu0
      %3731 = vmatprep.mubr.f32.mxu0 0.0
      %3732 = vmatmul.mubr.f32.gmra.mrb[0].mxu0 %v3154
      %v3733 = vpop.f32.mrb[0].mxu0
      %v3734 = vadd.f32 0.0, %v3733
      %v3735 = vpop.f32.mrb[0].mxu0
      %3736 = vmatprep.mubr.f32.mxu0 0.0
      %3737 = vmatmul.mubr.f32.gmra.mrb[0].mxu0 %v3157
      %v3738 = vpop.f32.mrb[0].mxu0
      %v3739 = vadd.f32 0.0, %v3738
      %v3740 = vpop.f32.mrb[0].mxu0
      %3741 = vmatprep.mubr.f32.mxu0 0.0
      %3742 = vmatmul.mubr.f32.gmra.mrb[0].mxu0 %v3160
      %v3743 = vpop.f32.mrb[0].mxu0
      %v3744 = vadd.f32 0.0, %v3743
      %v3745 = vpop.f32.mrb[0].mxu0
      %3746 = vmatprep.mubr.f32.mxu0 0.0
      %3747 = vmatmul.mubr.f32.gmra.mrb[0].mxu0 %v3163
      %v3748 = vpop.f32.mrb[0].mxu0
      %v3749 = vadd.f32 0.0, %v3748
      %v3750 = vpop.f32.mrb[0].mxu0
      %3751 = vmatprep.mubr.f32.mxu0 0.0
      %3752 = vmatmul.mubr.f32.gmra.mrb[0].mxu0 %v3166
      %v3753 = vpop.f32.mrb[0].mxu0
      %v3754 = vadd.f32 0.0, %v3753
      %v3755 = vpop.f32.mrb[0].mxu0
      %3756 = vmatprep.mubr.f32.mxu0 0.0
      %3757 = vmatmul.mubr.f32.gmra.mrb[0].mxu0 %v3169
      %v3758 = vpop.f32.mrb[0].mxu0
      %v3759 = vadd.f32 0.0, %v3758
      %v3760 = vpop.f32.mrb[0].mxu0
      %3761 = vmatprep.mubr.f32.mxu0 0.0
      %3762 = vmatmul.mubr.f32.gmra.mrb[0].mxu0 %v3172
      %v3763 = vpop.f32.mrb[0].mxu0
      %v3764 = vadd.f32 0.0, %v3763
      %v3765 = vpop.f32.mrb[0].mxu0
      %3766 = vmatprep.mubr.f32.mxu0 0.0
      %3767 = vmatmul.mubr.f32.gmra.mrb[0].mxu0 %v3175
      %v3768 = vpop.f32.mrb[0].mxu0
      %v3769 = vadd.f32 0.0, %v3768
      %v3770 = vpop.f32.mrb[0].mxu0
      %3771 = vmatprep.mubr.f32.mxu0 0.0
      %3772 = vmatmul.mubr.f32.gmra.mrb[0].mxu0 %v3178
      %v3773 = vpop.f32.mrb[0].mxu0
      %v3774 = vadd.f32 0.0, %v3773
      %v3775 = vpop.f32.mrb[0].mxu0
      %3776 = vmatprep.mubr.f32.mxu0 0.0
      %3777 = vmatmul.mubr.f32.gmra.mrb[0].mxu0 %v3181
      %v3778 = vpop.f32.mrb[0].mxu0
      %v3779 = vadd.f32 0.0, %v3778
      %v3780 = vpop.f32.mrb[0].mxu0
      %3781 = vmatprep.mubr.f32.mxu0 0.0
      %3782 = vmatmul.mubr.f32.gmra.mrb[0].mxu0 %v3184
      %v3783 = vpop.f32.mrb[0].mxu0
      %v3784 = vadd.f32 0.0, %v3783
      %v3785 = vpop.f32.mrb[0].mxu0
      %3786 = vmatprep.mubr.f32.mxu0 0.0
      %3787 = vmatmul.mubr.f32.gmra.mrb[0].mxu0 %v3187
      %v3788 = vpop.f32.mrb[0].mxu0
      %v3789 = vadd.f32 0.0, %v3788
      %v3790 = vpop.f32.mrb[0].mxu0
      %3791 = vmatprep.mubr.f32.mxu0 0.0
      %3792 = vmatmul.mubr.f32.gmra.mrb[0].mxu0 %v3190
      %v3793 = vpop.f32.mrb[0].mxu0
      %v3794 = vadd.f32 0.0, %v3793
      %v3795 = vpop.f32.mrb[0].mxu0
      %3796 = vmatprep.mubr.f32.mxu0 0.0
      %3797 = vmatmul.mubr.f32.gmra.mrb[0].mxu0 %v3193
      %v3798 = vpop.f32.mrb[0].mxu0
      %v3799 = vadd.f32 0.0, %v3798
      %v3800 = vpop.f32.mrb[0].mxu0
      %3801 = vmatprep.mubr.f32.mxu0 0.0
      %3802 = vmatmul.mubr.f32.gmra.mrb[0].mxu0 %v3196
      %v3803 = vpop.f32.mrb[0].mxu0
      %v3804 = vadd.f32 0.0, %v3803
      %v3805 = vpop.f32.mrb[0].mxu0
      %3806 = vmatprep.mubr.f32.mxu0 0.0
      %3807 = vmatmul.mubr.f32.gmra.mrb[0].mxu0 %v3199
      %v3808 = vpop.f32.mrb[0].mxu0
      %v3809 = vadd.f32 0.0, %v3808
      %v3810 = vpop.f32.mrb[0].mxu0
      %3811 = vmatprep.mubr.f32.mxu0 0.0
      %3812 = vmatmul.mubr.f32.gmra.mrb[0].mxu0 %v3202
      %v3813 = vpop.f32.mrb[0].mxu0
      %v3814 = vadd.f32 0.0, %v3813
      %v3815 = vpop.f32.mrb[0].mxu0
      %3816 = vmatprep.mubr.f32.mxu0 0.0
      %3817 = vmatmul.mubr.f32.gmra.mrb[0].mxu0 %v3205
      %v3818 = vpop.f32.mrb[0].mxu0
      %v3819 = vadd.f32 0.0, %v3818
      %v3820 = vpop.f32.mrb[0].mxu0
      %3821 = vmatprep.mubr.f32.mxu0 0.0
      %3822 = vmatmul.mubr.f32.gmra.mrb[0].mxu0 %v3208
      %v3823 = vpop.f32.mrb[0].mxu0
      %v3824 = vadd.f32 0.0, %v3823
      %v3825 = vpop.f32.mrb[0].mxu0
      %3826 = vmatprep.mubr.f32.mxu0 0.0
      %3827 = vmatmul.mubr.f32.gmra.mrb[0].mxu0 %v3211
      %v3828 = vpop.f32.mrb[0].mxu0
      %v3829 = vadd.f32 0.0, %v3828
      %v3830 = vpop.f32.mrb[0].mxu0
      %3831 = vmatprep.mubr.f32.mxu0 0.0
      %3832 = vmatmul.mubr.f32.gmra.mrb[0].mxu0 %v3214
      %v3833 = vpop.f32.mrb[0].mxu0
      %v3834 = vadd.f32 0.0, %v3833
      %v3835 = vpop.f32.mrb[0].mxu0
      %3836 = vmatprep.mubr.f32.mxu0 0.0
      %3837 = vmatmul.mubr.f32.gmra.mrb[0].mxu0 %v3217
      %v3838 = vpop.f32.mrb[0].mxu0
      %v3839 = vadd.f32 0.0, %v3838
      %v3840 = vpop.f32.mrb[0].mxu0
      %3841 = vmatprep.mubr.f32.mxu0 0.0
      %3842 = vmatmul.mubr.f32.gmra.mrb[0].mxu0 %v3220
      %v3843 = vpop.f32.mrb[0].mxu0
      %v3844 = vadd.f32 0.0, %v3843
      %v3845 = vpop.f32.mrb[0].mxu0
      %3846 = vmatprep.mubr.f32.mxu0 0.0
      %3847 = vmatmul.mubr.f32.gmra.mrb[0].mxu0 %v3223
      %v3848 = vpop.f32.mrb[0].mxu0
      %v3849 = vadd.f32 0.0, %v3848
      %v3850 = vpop.f32.mrb[0].mxu0
      %3851 = vmatprep.mubr.f32.mxu0 0.0
      %3852 = vmatmul.mubr.f32.gmra.mrb[0].mxu0 %v3226
      %v3853 = vpop.f32.mrb[0].mxu0
      %v3854 = vadd.f32 0.0, %v3853
      %v3855 = vpop.f32.mrb[0].mxu0
      %3856 = vmatprep.mubr.f32.mxu0 0.0
      %3857 = vmatmul.mubr.f32.gmra.mrb[0].mxu0 %v3229
      %v3858 = vpop.f32.mrb[0].mxu0
      %v3859 = vadd.f32 0.0, %v3858
      %v3860 = vpop.f32.mrb[0].mxu0
      %3861 = vmatprep.mubr.f32.mxu0 0.0
      %3862 = vmatmul.mubr.f32.gmra.mrb[0].mxu0 %v3232
      %v3863 = vpop.f32.mrb[0].mxu0
      %v3864 = vadd.f32 0.0, %v3863
      %v3865 = vpop.f32.mrb[0].mxu0
      %3866 = vmatprep.mubr.f32.mxu0 0.0
      %3867 = vmatmul.mubr.f32.gmra.mrb[0].mxu0 %v3235
      %v3868 = vpop.f32.mrb[0].mxu0
      %v3869 = vadd.f32 0.0, %v3868
      %v3870 = vpop.f32.mrb[0].mxu0
      %3871 = vmatprep.mubr.f32.mxu0 0.0
      %3872 = vmatmul.mubr.f32.gmra.mrb[0].mxu0 %v3238
      %v3873 = vpop.f32.mrb[0].mxu0
      %v3874 = vadd.f32 0.0, %v3873
      %v3875 = vpop.f32.mrb[0].mxu0
      %3876 = vmatprep.mubr.f32.mxu0 0.0
      %3877 = vmatmul.mubr.f32.gmra.mrb[0].mxu0 %v3241
      %v3878 = vpop.f32.mrb[0].mxu0
      %v3879 = vadd.f32 0.0, %v3878
      %v3880 = vpop.f32.mrb[0].mxu0
      %3881 = vmatprep.mubr.f32.mxu0 0.0
      %3882 = vmatmul.mubr.f32.gmra.mrb[0].mxu0 %v3244
      %v3883 = vpop.f32.mrb[0].mxu0
      %v3884 = vadd.f32 0.0, %v3883
      %v3885 = vpop.f32.mrb[0].mxu0
      %3886 = vmatprep.mubr.f32.mxu0 0.0
      %3887 = vmatmul.mubr.f32.gmra.mrb[0].mxu0 %v3247
      %v3888 = vpop.f32.mrb[0].mxu0
      %v3889 = vadd.f32 0.0, %v3888
      %v3890 = vpop.f32.mrb[0].mxu0
      %3891 = vmatprep.mubr.f32.mxu0 0.0
      %3892 = vmatmul.mubr.f32.gmra.mrb[0].mxu0 %v3250
      %v3893 = vpop.f32.mrb[0].mxu0
      %v3894 = vadd.f32 0.0, %v3893
      %v3895 = vpop.f32.mrb[0].mxu0
      %3896 = vmatprep.mubr.f32.mxu0 0.0
      %3897 = vmatmul.mubr.f32.gmra.mrb[0].mxu0 %v3253
      %v3898 = vpop.f32.mrb[0].mxu0
      %v3899 = vadd.f32 0.0, %v3898
      %v3900 = vpop.f32.mrb[0].mxu0
      %3901 = vmatprep.mubr.f32.mxu0 0.0
      %3902 = vmatmul.mubr.f32.gmra.mrb[0].mxu0 %v3256
      %v3903 = vpop.f32.mrb[0].mxu0
      %v3904 = vadd.f32 0.0, %v3903
      %v3905 = vpop.f32.mrb[0].mxu0
      %3906 = vmatprep.mubr.f32.mxu0 0.0
      %3907 = vmatmul.mubr.f32.gmra.mrb[0].mxu0 %v3259
      %v3908 = vpop.f32.mrb[0].mxu0
      %v3909 = vadd.f32 0.0, %v3908
      %v3910 = vpop.f32.mrb[0].mxu0
      %3911 = vmatprep.mubr.f32.mxu0 0.0
      %3912 = vmatmul.mubr.f32.gmra.mrb[0].mxu0 %v3262
      %v3913 = vpop.f32.mrb[0].mxu0
      %v3914 = vadd.f32 0.0, %v3913
      %v3915 = vpop.f32.mrb[0].mxu0
      %3916 = vmatprep.mubr.f32.mxu0 0.0
      %3917 = vmatmul.mubr.f32.gmra.mrb[0].mxu0 %v3265
      %v3918 = vpop.f32.mrb[0].mxu0
      %v3919 = vadd.f32 0.0, %v3918
      %v3920 = vpop.f32.mrb[0].mxu0
      %3921 = vmatprep.mubr.f32.mxu0 0.0
      %3922 = vmatmul.mubr.f32.gmra.mrb[0].mxu0 %v3268
      %v3923 = vpop.f32.mrb[0].mxu0
      %v3924 = vadd.f32 0.0, %v3923
      %v3925 = vpop.f32.mrb[0].mxu0
      %3926 = vmatprep.mubr.f32.mxu0 0.0
      %3927 = vmatmul.mubr.f32.gmra.mrb[0].mxu0 %v3271
      %v3928 = vpop.f32.mrb[0].mxu0
      %v3929 = vadd.f32 0.0, %v3928
      %v3930 = vpop.f32.mrb[0].mxu0
      %3931 = vmatprep.mubr.f32.mxu0 0.0
      %3932 = vmatmul.mubr.f32.gmra.mrb[0].mxu0 %v3274
      %v3933 = vpop.f32.mrb[0].mxu0
      %v3934 = vadd.f32 0.0, %v3933
      %v3935 = vpop.f32.mrb[0].mxu0
      %3936 = vmatprep.mubr.f32.mxu0 0.0
      %3937 = vmatmul.mubr.f32.gmra.mrb[0].mxu0 %v3277
      %v3938 = vpop.f32.mrb[0].mxu0
      %v3939 = vadd.f32 0.0, %v3938
      %v3940 = vpop.f32.mrb[0].mxu0
      %3941 = vmatprep.mubr.f32.mxu0 0.0
      %3942 = vmatmul.mubr.f32.gmra.mrb[0].mxu0 %v3280
      %v3943 = vpop.f32.mrb[0].mxu0
      %v3944 = vadd.f32 0.0, %v3943
      %v3945 = vpop.f32.mrb[0].mxu0
      %3946 = vmatprep.mubr.f32.mxu0 0.0
      %3947 = vmatmul.mubr.f32.gmra.mrb[0].mxu0 %v3283
      %v3948 = vpop.f32.mrb[0].mxu0
      %v3949 = vadd.f32 0.0, %v3948
      %v3950 = vpop.f32.mrb[0].mxu0
      %3951 = vmatprep.mubr.f32.mxu0 0.0
      %3952 = vmatmul.mubr.f32.gmra.mrb[0].mxu0 %v3286
      %v3953 = vpop.f32.mrb[0].mxu0
      %v3954 = vadd.f32 0.0, %v3953
      %v3955 = vpop.f32.mrb[0].mxu0
      %3956 = vmatprep.mubr.f32.mxu0 0.0
      %3957 = vmatmul.mubr.f32.gmra.mrb[0].mxu0 %v3289
      %v3958 = vpop.f32.mrb[0].mxu0
      %v3959 = vadd.f32 0.0, %v3958
      %v3960 = vpop.f32.mrb[0].mxu0
      %3961 = vmatprep.mubr.f32.mxu0 0.0
      %3962 = vmatmul.mubr.f32.gmra.mrb[0].mxu0 %v3292
      %v3963 = vpop.f32.mrb[0].mxu0
      %v3964 = vadd.f32 0.0, %v3963
      %v3965 = vpop.f32.mrb[0].mxu0
      %3966 = vmatprep.mubr.f32.mxu0 0.0
      %3967 = vmatmul.mubr.f32.gmra.mrb[0].mxu0 %v3295
      %v3968 = vpop.f32.mrb[0].mxu0
      %v3969 = vadd.f32 0.0, %v3968
      %v3970 = vpop.f32.mrb[0].mxu0
      %3971 = vmatprep.mubr.f32.mxu0 0.0
      %3972 = vmatmul.mubr.f32.gmra.mrb[0].mxu0 %v3298
      %v3973 = vpop.f32.mrb[0].mxu0
      %v3974 = vadd.f32 0.0, %v3973
      %v3975 = vpop.f32.mrb[0].mxu0
      %3976 = vmatprep.mubr.f32.mxu0 0.0
      %3977 = vmatmul.mubr.f32.gmra.mrb[0].mxu0 %v3301
      %v3978 = vpop.f32.mrb[0].mxu0
      %v3979 = vadd.f32 0.0, %v3978
      %v3980 = vpop.f32.mrb[0].mxu0
      %3981 = vmatprep.mubr.f32.mxu0 0.0
      %3982 = vmatmul.mubr.f32.gmra.mrb[0].mxu0 %v3304
      %v3983 = vpop.f32.mrb[0].mxu0
      %v3984 = vadd.f32 0.0, %v3983
      %v3985 = vpop.f32.mrb[0].mxu0
      %3986 = vmatprep.mubr.f32.mxu0 0.0
      %3987 = vmatmul.mubr.f32.gmra.mrb[0].mxu0 %v3307
      %v3988 = vpop.f32.mrb[0].mxu0
      %v3989 = vadd.f32 0.0, %v3988
      %v3990 = vpop.f32.mrb[0].mxu0
      %3991 = vmatprep.mubr.f32.mxu0 0.0
      %3992 = vmatmul.mubr.f32.gmra.mrb[0].mxu0 %v3310
      %v3993 = vpop.f32.mrb[0].mxu0
      %v3994 = vadd.f32 0.0, %v3993
      %v3995 = vpop.f32.mrb[0].mxu0
      %3996 = vmatprep.mubr.f32.mxu0 0.0
      %3997 = vmatmul.mubr.f32.gmra.mrb[0].mxu0 %v3313
      %v3998 = vpop.f32.mrb[0].mxu0
      %v3999 = vadd.f32 0.0, %v3998
      %v4000 = vpop.f32.mrb[0].mxu0
      %4001 = vmatprep.mubr.f32.mxu0 0.0
      %4002 = vmatmul.mubr.f32.gmra.mrb[0].mxu0 %v3316
      %v4003 = vpop.f32.mrb[0].mxu0
      %v4004 = vadd.f32 0.0, %v4003
      %v4005 = vpop.f32.mrb[0].mxu0
      %4006 = vmatprep.mubr.f32.mxu0 0.0
      %4007 = vmatmul.mubr.f32.gmra.mrb[0].mxu0 %v3319
      %v4008 = vpop.f32.mrb[0].mxu0
      %v4009 = vadd.f32 0.0, %v4008
      %v4010 = vpop.f32.mrb[0].mxu0
      %4011 = vmatprep.mubr.f32.mxu0 0.0
      %4012 = vmatmul.mubr.f32.gmra.mrb[0].mxu0 %v3322
      %v4013 = vpop.f32.mrb[0].mxu0
      %v4014 = vadd.f32 0.0, %v4013
      %v4015 = vpop.f32.mrb[0].mxu0
      %4016 = vmatprep.mubr.f32.mxu0 0.0
      %4017 = vmatmul.mubr.f32.gmra.mrb[0].mxu0 %v3325
      %v4018 = vpop.f32.mrb[0].mxu0
      %v4019 = vadd.f32 0.0, %v4018
      %v4020 = vpop.f32.mrb[0].mxu0
      %4021 = vmatprep.mubr.f32.mxu0 0.0
      %4022 = vmatmul.mubr.f32.gmra.mrb[0].mxu0 %v3328
      %v4023 = vpop.f32.mrb[0].mxu0
      %v4024 = vadd.f32 0.0, %v4023
      %v4025 = vpop.f32.mrb[0].mxu0
      %4026 = vmatprep.mubr.f32.mxu0 0.0
      %4027 = vmatmul.mubr.f32.gmra.mrb[0].mxu0 %v3331
      %v4028 = vpop.f32.mrb[0].mxu0
      %v4029 = vadd.f32 0.0, %v4028
      %v4030 = vpop.f32.mrb[0].mxu0
      %4031 = vmatprep.mubr.f32.mxu0 0.0
      %4032 = vmatmul.mubr.f32.gmra.mrb[0].mxu0 %v3334
      %v4033 = vpop.f32.mrb[0].mxu0
      %v4034 = vadd.f32 0.0, %v4033
      %v4035 = vpop.f32.mrb[0].mxu0
      %4036 = vmatprep.mubr.f32.mxu0 0.0
      %4037 = vmatmul.mubr.f32.gmra.mrb[0].mxu0 %v3337
      %v4038 = vpop.f32.mrb[0].mxu0
      %v4039 = vadd.f32 0.0, %v4038
      %v4040 = vpop.f32.mrb[0].mxu0
      %4041 = vmatprep.mubr.f32.mxu0 0.0
      %4042 = vmatmul.mubr.f32.gmra.mrb[0].mxu0 %v3340
      %v4043 = vpop.f32.mrb[0].mxu0
      %v4044 = vadd.f32 0.0, %v4043
      %v4045 = vpop.f32.mrb[0].mxu0
      %4046 = vdwg.mxu0
      %v4047 = vsel %vm1125, %v836, 0.0
      %v4048 = vsel %vm1125, %v837, 0.0
      %v4049 = vadd.f32 %v4047, %v4048
      %v4050 = vsel %vm1125, %v838, 0.0
      %v4051 = vadd.f32 %v4049, %v4050
      %v4052 = vsel %vm1125, %v839, 0.0
      %v4053 = vadd.f32 %v4051, %v4052
      %v4054 = vsel %vm1125, %v840, 0.0
      %v4055 = vadd.f32 %v4053, %v4054
      %v4056 = vsel %vm1125, %v841, 0.0
      %v4057 = vadd.f32 %v4055, %v4056
      %v4058 = vsel %vm1125, %v842, 0.0
      %v4059 = vadd.f32 %v4057, %v4058
      %v4060 = vsel %vm1125, %v843, 0.0
      %v4061 = vadd.f32 %v4059, %v4060
      %v4062 = vsel %vm1125, %v844, 0.0
      %v4063 = vadd.f32 %v4061, %v4062
      %v4064 = vsel %vm1125, %v845, 0.0
      %v4065 = vadd.f32 %v4063, %v4064
      %v4066 = vsel %vm1125, %v846, 0.0
      %v4067 = vadd.f32 %v4065, %v4066
      %v4068 = vsel %vm1125, %v847, 0.0
      %v4069 = vadd.f32 %v4067, %v4068
      %v4070 = vsel %vm1125, %v848, 0.0
      %v4071 = vadd.f32 %v4069, %v4070
      %v4072 = vsel %vm1125, %v849, 0.0
      %v4073 = vadd.f32 %v4071, %v4072
      %v4074 = vsel %vm1125, %v850, 0.0
      %v4075 = vadd.f32 %v4073, %v4074
      %v4076 = vsel %vm1125, %v851, 0.0
      %v4077 = vadd.f32 %v4075, %v4076
      %v4078 = vsel %vm1125, %v852, 0.0
      %v4079 = vadd.f32 %v4077, %v4078
      %v4080 = vsel %vm1125, %v853, 0.0
      %v4081 = vadd.f32 %v4079, %v4080
      %v4082 = vsel %vm1125, %v854, 0.0
      %v4083 = vadd.f32 %v4081, %v4082
      %v4084 = vsel %vm1125, %v855, 0.0
      %v4085 = vadd.f32 %v4083, %v4084
      %v4086 = vsel %vm1125, %v856, 0.0
      %v4087 = vadd.f32 %v4085, %v4086
      %v4088 = vsel %vm1125, %v857, 0.0
      %v4089 = vadd.f32 %v4087, %v4088
      %v4090 = vsel %vm1125, %v858, 0.0
      %v4091 = vadd.f32 %v4089, %v4090
      %v4092 = vsel %vm1125, %v859, 0.0
      %v4093 = vadd.f32 %v4091, %v4092
      %vm4094 = vcmask 27648
      %v4095 = vsel %vm4094, %v860, 0.0
      %v4096 = vadd.f32 %v4093, %v4095
      %v4097 = vrot.slane %v4096, 4
      %v4098 = vadd.f32 %v4096, %v4097
      %v4099 = vrot.slane %v4098, 2
      %v4100 = vadd.f32 %v4098, %v4099
      %v4101 = vrot.slane %v4100, 1
      %v4102 = vadd.f32 %v4100, %v4101
      %v4103 = vrcp.pop 196.0
      %v4104 = vmul.f32 %v4102, %v4103
      %v4105 = vld [vmem:[%s6] sm:$0xf]
      %v4107 = vsel %vm1125, %v4104, 0
      %v4110 = vsel %vm1201, %v4105, 0
      %4112 = vmatprep.subr.mxu0 0.0
      %4113 = vmatpush1.msra.mxu0 %v4110
      %4114 = vmatprep.subr.mxu0 0.0
      %4115 = vmatpush1.msra.mxu0 0.0
      %4116 = vmatprep.subr.mxu0 0.0
      %4117 = vmatpush1.msra.mxu0 0.0
      %4118 = vmatprep.subr.mxu0 0.0
      %4119 = vmatpush1.msra.mxu0 0.0
      %4120 = vmatprep.subr.mxu0 0.0
      %4121 = vmatpush1.msra.mxu0 0.0
      %4122 = vmatprep.subr.mxu0 0.0
      %4123 = vmatpush1.msra.mxu0 0.0
      %4124 = vmatprep.subr.mxu0 0.0
      %4125 = vmatpush1.msra.mxu0 0.0
      %4126 = vmatprep.subr.mxu0 0.0
      %4127 = vmatpush1.msra.mxu0 0.0
      %4128 = vmatprep.subr.mxu0 0.0
      %4129 = vmatpush1.msra.mxu0 0.0
      %4130 = vmatprep.subr.mxu0 0.0
      %4131 = vmatpush1.msra.mxu0 0.0
      %4132 = vmatprep.subr.mxu0 0.0
      %4133 = vmatpush1.msra.mxu0 0.0
      %4134 = vmatprep.subr.mxu0 0.0
      %4135 = vmatpush1.msra.mxu0 0.0
      %4136 = vmatprep.subr.mxu0 0.0
      %4137 = vmatpush1.msra.mxu0 0.0
      %4138 = vmatprep.subr.mxu0 0.0
      %4139 = vmatpush1.msra.mxu0 0.0
      %4140 = vmatprep.subr.mxu0 0.0
      %4141 = vmatpush1.msra.mxu0 0.0
      %4142 = vmatprep.subr.mxu0 0.0
      %4143 = vmatpush1.msra.mxu0 0.0
      %4144 = vmatprep.subr.mxu0 0.0
      %4145 = vmatpush1.msra.mxu0 0.0
      %4146 = vmatprep.subr.mxu0 0.0
      %4147 = vmatpush1.msra.mxu0 0.0
      %4148 = vmatprep.subr.mxu0 0.0
      %4149 = vmatpush1.msra.mxu0 0.0
      %4150 = vmatprep.subr.mxu0 0.0
      %4151 = vmatpush1.msra.mxu0 0.0
      %4152 = vmatprep.subr.mxu0 0.0
      %4153 = vmatpush1.msra.mxu0 0.0
      %4154 = vmatprep.subr.mxu0 0.0
      %4155 = vmatpush1.msra.mxu0 0.0
      %4156 = vmatprep.subr.mxu0 0.0
      %4157 = vmatpush1.msra.mxu0 0.0
      %4158 = vmatprep.subr.mxu0 0.0
      %4159 = vmatpush1.msra.mxu0 0.0
      %4160 = vmatprep.subr.mxu0 0.0
      %4161 = vmatpush1.msra.mxu0 0.0
      %4162 = vmatprep.subr.mxu0 0.0
      %4163 = vmatpush1.msra.mxu0 0.0
      %4164 = vmatprep.subr.mxu0 0.0
      %4165 = vmatpush1.msra.mxu0 0.0
      %4166 = vmatprep.subr.mxu0 0.0
      %4167 = vmatpush1.msra.mxu0 0.0
      %4168 = vmatprep.subr.mxu0 0.0
      %4169 = vmatpush1.msra.mxu0 0.0
      %4170 = vmatprep.subr.mxu0 0.0
      %4171 = vmatpush1.msra.mxu0 0.0
      %4172 = vmatprep.subr.mxu0 0.0
      %4173 = vmatpush1.msra.mxu0 0.0
      %4174 = vmatprep.subr.mxu0 0.0
      %4175 = vmatpush1.msra.mxu0 0.0
      %4176 = vmatprep.mubr.f32.mxu0 0.0
      %4177 = vmatmul.mubr.f32.gmra.mrb[0].mxu0 %v4107
      %v4178 = vpop.f32.mrb[0].mxu0
      %v4179 = vadd.f32 0.0, %v4178
      %v4180 = vpop.f32.mrb[0].mxu0
      %4181 = vdwg.mxu0
      %v4182 = vmax.f32 %v4179, 0.0
      %v4183 = vld [vmem:[%s7] sm:$0xff]
      %v4184 = vld [vmem:[%s7 + $0x8] sm:$0xff]
      %v4185 = vld [vmem:[%s7 + $0x10] sm:$0xff]
      %v4186 = vld [vmem:[%s7 + $0x18] sm:$0xff]
      %v4187 = vld [vmem:[%s7 + $0x20] sm:$0xff]
      %v4188 = vld [vmem:[%s7 + $0x28] sm:$0xff]
      %v4189 = vld [vmem:[%s7 + $0x30] sm:$0xff]
      %v4190 = vld [vmem:[%s7 + $0x38] sm:$0xff]
      %v4191 = vld [vmem:[%s7 + $0x40] sm:$0xff]
      %v4192 = vld [vmem:[%s7 + $0x48] sm:$0xff]
      %v4193 = vld [vmem:[%s7 + $0x50] sm:$0xff]
      %v4194 = vld [vmem:[%s7 + $0x58] sm:$0xff]
      %v4195 = vld [vmem:[%s7 + $0x60] sm:$0xff]
      %v4196 = vld [vmem:[%s7 + $0x68] sm:$0xff]
      %v4197 = vld [vmem:[%s7 + $0x70] sm:$0xff]
      %v4198 = vld [vmem:[%s7 + $0x78] sm:$0xff]
      %v4199 = vld [vmem:[%s7 + $0x80] sm:$0xff]
      %v4200 = vld [vmem:[%s7 + $0x88] sm:$0xff]
      %v4201 = vld [vmem:[%s7 + $0x90] sm:$0xff]
      %v4202 = vld [vmem:[%s7 + $0x98] sm:$0xff]
      %v4203 = vld [vmem:[%s7 + $0xa0] sm:$0xff]
      %v4204 = vld [vmem:[%s7 + $0xa8] sm:$0xff]
      %v4205 = vld [vmem:[%s7 + $0xb0] sm:$0xff]
      %v4206 = vld [vmem:[%s7 + $0xb8] sm:$0xff]
      %v4207 = vld [vmem:[%s7 + $0xc0] sm:$0xff]
      %v4208 = vld [vmem:[%s7 + $0xc8] sm:$0xff]
      %v4209 = vld [vmem:[%s7 + $0xd0] sm:$0xff]
      %v4210 = vld [vmem:[%s7 + $0xd8] sm:$0xff]
      %v4211 = vld [vmem:[%s7 + $0xe0] sm:$0xff]
      %v4212 = vld [vmem:[%s7 + $0xe8] sm:$0xff]
      %v4213 = vld [vmem:[%s7 + $0xf0] sm:$0xff]
      %v4214 = vld [vmem:[%s7 + $0xf8] sm:$0xff]
      %v4215 = vld [vmem:[%s7 + $0x100] sm:$0xff]
      %v4216 = vld [vmem:[%s7 + $0x108] sm:$0xff]
      %v4217 = vld [vmem:[%s7 + $0x110] sm:$0xff]
      %v4218 = vld [vmem:[%s7 + $0x118] sm:$0xff]
      %v4219 = vld [vmem:[%s7 + $0x120] sm:$0xff]
      %v4220 = vld [vmem:[%s7 + $0x128] sm:$0xff]
      %v4221 = vld [vmem:[%s7 + $0x130] sm:$0xff]
      %v4222 = vld [vmem:[%s7 + $0x138] sm:$0xff]
      %v4223 = vld [vmem:[%s7 + $0x140] sm:$0xff]
      %v4224 = vld [vmem:[%s7 + $0x148] sm:$0xff]
      %v4225 = vld [vmem:[%s7 + $0x150] sm:$0xff]
      %v4226 = vld [vmem:[%s7 + $0x158] sm:$0xff]
      %v4227 = vld [vmem:[%s7 + $0x160] sm:$0xff]
      %v4228 = vld [vmem:[%s7 + $0x168] sm:$0xff]
      %v4229 = vld [vmem:[%s7 + $0x170] sm:$0xff]
      %v4230 = vld [vmem:[%s7 + $0x178] sm:$0xff]
      %v4231 = vld [vmem:[%s7 + $0x180] sm:$0xff]
      %v4232 = vld [vmem:[%s7 + $0x188] sm:$0xff]
      %v4233 = vld [vmem:[%s7 + $0x190] sm:$0xff]
      %v4234 = vld [vmem:[%s7 + $0x198] sm:$0xff]
      %v4235 = vld [vmem:[%s7 + $0x1a0] sm:$0xff]
      %v4236 = vld [vmem:[%s7 + $0x1a8] sm:$0xff]
      %v4237 = vld [vmem:[%s7 + $0x1b0] sm:$0xff]
      %v4238 = vld [vmem:[%s7 + $0x1b8] sm:$0xff]
      %v4239 = vld [vmem:[%s7 + $0x1c0] sm:$0xff]
      %v4240 = vld [vmem:[%s7 + $0x1c8] sm:$0xff]
      %v4241 = vld [vmem:[%s7 + $0x1d0] sm:$0xff]
      %v4242 = vld [vmem:[%s7 + $0x1d8] sm:$0xff]
      %v4243 = vld [vmem:[%s7 + $0x1e0] sm:$0xff]
      %v4244 = vld [vmem:[%s7 + $0x1e8] sm:$0xff]
      %v4245 = vld [vmem:[%s7 + $0x1f0] sm:$0xff]
      %v4246 = vld [vmem:[%s7 + $0x1f8] sm:$0xff]
      %v4247 = vld [vmem:[%s7 + $0x200] sm:$0xff]
      %v4248 = vld [vmem:[%s7 + $0x208] sm:$0xff]
      %v4249 = vld [vmem:[%s7 + $0x210] sm:$0xff]
      %v4250 = vld [vmem:[%s7 + $0x218] sm:$0xff]
      %v4251 = vld [vmem:[%s7 + $0x220] sm:$0xff]
      %v4252 = vld [vmem:[%s7 + $0x228] sm:$0xff]
      %v4253 = vld [vmem:[%s7 + $0x230] sm:$0xff]
      %v4254 = vld [vmem:[%s7 + $0x238] sm:$0xff]
      %v4255 = vld [vmem:[%s7 + $0x240] sm:$0xff]
      %v4256 = vld [vmem:[%s7 + $0x248] sm:$0xff]
      %v4257 = vld [vmem:[%s7 + $0x250] sm:$0xff]
      %v4258 = vld [vmem:[%s7 + $0x258] sm:$0xff]
      %v4259 = vld [vmem:[%s7 + $0x260] sm:$0xff]
      %v4260 = vld [vmem:[%s7 + $0x268] sm:$0xff]
      %v4261 = vld [vmem:[%s7 + $0x270] sm:$0xff]
      %v4262 = vld [vmem:[%s7 + $0x278] sm:$0xff]
      %v4263 = vld [vmem:[%s7 + $0x280] sm:$0xff]
      %v4264 = vld [vmem:[%s7 + $0x288] sm:$0xff]
      %v4265 = vld [vmem:[%s7 + $0x290] sm:$0xff]
      %v4266 = vld [vmem:[%s7 + $0x298] sm:$0xff]
      %v4267 = vld [vmem:[%s7 + $0x2a0] sm:$0xff]
      %v4268 = vld [vmem:[%s7 + $0x2a8] sm:$0xff]
      %v4269 = vld [vmem:[%s7 + $0x2b0] sm:$0xff]
      %v4270 = vld [vmem:[%s7 + $0x2b8] sm:$0xff]
      %v4271 = vld [vmem:[%s7 + $0x2c0] sm:$0xff]
      %v4272 = vld [vmem:[%s7 + $0x2c8] sm:$0xff]
      %v4273 = vld [vmem:[%s7 + $0x2d0] sm:$0xff]
      %v4274 = vld [vmem:[%s7 + $0x2d8] sm:$0xff]
      %v4275 = vld [vmem:[%s7 + $0x2e0] sm:$0xff]
      %v4276 = vld [vmem:[%s7 + $0x2e8] sm:$0xff]
      %v4277 = vld [vmem:[%s7 + $0x2f0] sm:$0xff]
      %v4278 = vld [vmem:[%s7 + $0x2f8] sm:$0xff]
      %v4279 = vld [vmem:[%s7 + $0x300] sm:$0xff]
      %v4280 = vld [vmem:[%s7 + $0x308] sm:$0xff]
      %v4281 = vld [vmem:[%s7 + $0x310] sm:$0xff]
      %v4282 = vld [vmem:[%s7 + $0x318] sm:$0xff]
      %v4283 = vld [vmem:[%s7 + $0x320] sm:$0xff]
      %v4284 = vld [vmem:[%s7 + $0x328] sm:$0xff]
      %v4285 = vld [vmem:[%s7 + $0x330] sm:$0xff]
      %v4286 = vld [vmem:[%s7 + $0x338] sm:$0xff]
      %v4287 = vld [vmem:[%s7 + $0x340] sm:$0xff]
      %v4288 = vld [vmem:[%s7 + $0x348] sm:$0xff]
      %v4289 = vld [vmem:[%s7 + $0x350] sm:$0xff]
      %v4290 = vld [vmem:[%s7 + $0x358] sm:$0xff]
      %v4291 = vld [vmem:[%s7 + $0x360] sm:$0xff]
      %v4292 = vld [vmem:[%s7 + $0x368] sm:$0xff]
      %v4293 = vld [vmem:[%s7 + $0x370] sm:$0xff]
      %v4294 = vld [vmem:[%s7 + $0x378] sm:$0xff]
      %v4295 = vld [vmem:[%s7 + $0x380] sm:$0xff]
      %v4296 = vld [vmem:[%s7 + $0x388] sm:$0xff]
      %v4297 = vld [vmem:[%s7 + $0x390] sm:$0xff]
      %v4298 = vld [vmem:[%s7 + $0x398] sm:$0xff]
      %v4299 = vld [vmem:[%s7 + $0x3a0] sm:$0xff]
      %v4300 = vld [vmem:[%s7 + $0x3a8] sm:$0xff]
      %v4301 = vld [vmem:[%s7 + $0x3b0] sm:$0xff]
      %v4302 = vld [vmem:[%s7 + $0x3b8] sm:$0xff]
      %v4303 = vld [vmem:[%s7 + $0x3c0] sm:$0xff]
      %v4304 = vld [vmem:[%s7 + $0x3c8] sm:$0xff]
      %v4305 = vld [vmem:[%s7 + $0x3d0] sm:$0xff]
      %v4306 = vld [vmem:[%s7 + $0x3d8] sm:$0xff]
      %v4307 = vld [vmem:[%s7 + $0x3e0] sm:$0xff]
      %v4308 = vld [vmem:[%s7 + $0x3e8] sm:$0xff]
      %v4309 = vld [vmem:[%s7 + $0x3f0] sm:$0xff]
      %v4310 = vld [vmem:[%s7 + $0x3f8] sm:$0xff]
      %4311 = vmatprep.subr.mxu0 %v4184
      %4312 = vmatpush1.msra.mxu0 %v4183
      %4313 = vmatprep.subr.mxu0 %v4192
      %4314 = vmatpush1.msra.mxu0 %v4191
      %4315 = vmatprep.subr.mxu0 %v4200
      %4316 = vmatpush1.msra.mxu0 %v4199
      %4317 = vmatprep.subr.mxu0 %v4208
      %4318 = vmatpush1.msra.mxu0 %v4207
      %4319 = vmatprep.subr.mxu0 %v4216
      %4320 = vmatpush1.msra.mxu0 %v4215
      %4321 = vmatprep.subr.mxu0 %v4224
      %4322 = vmatpush1.msra.mxu0 %v4223
      %4323 = vmatprep.subr.mxu0 %v4232
      %4324 = vmatpush1.msra.mxu0 %v4231
      %4325 = vmatprep.subr.mxu0 %v4240
      %4326 = vmatpush1.msra.mxu0 %v4239
      %4327 = vmatprep.subr.mxu0 %v4248
      %4328 = vmatpush1.msra.mxu0 %v4247
      %4329 = vmatprep.subr.mxu0 %v4256
      %4330 = vmatpush1.msra.mxu0 %v4255
      %4331 = vmatprep.subr.mxu0 %v4264
      %4332 = vmatpush1.msra.mxu0 %v4263
      %4333 = vmatprep.subr.mxu0 %v4272
      %4334 = vmatpush1.msra.mxu0 %v4271
      %4335 = vmatprep.subr.mxu0 %v4280
      %4336 = vmatpush1.msra.mxu0 %v4279
      %4337 = vmatprep.subr.mxu0 %v4288
      %4338 = vmatpush1.msra.mxu0 %v4287
      %4339 = vmatprep.subr.mxu0 %v4296
      %4340 = vmatpush1.msra.mxu0 %v4295
      %4341 = vmatprep.subr.mxu0 %v4304
      %4342 = vmatpush1.msra.mxu0 %v4303
      %4343 = vmatprep.subr.mxu0 0.0
      %4344 = vmatpush1.msra.mxu0 0.0
      %4345 = vmatprep.subr.mxu0 0.0
      %4346 = vmatpush1.msra.mxu0 0.0
      %4347 = vmatprep.subr.mxu0 0.0
      %4348 = vmatpush1.msra.mxu0 0.0
      %4349 = vmatprep.subr.mxu0 0.0
      %4350 = vmatpush1.msra.mxu0 0.0
      %4351 = vmatprep.subr.mxu0 0.0
      %4352 = vmatpush1.msra.mxu0 0.0
      %4353 = vmatprep.subr.mxu0 0.0
      %4354 = vmatpush1.msra.mxu0 0.0
      %4355 = vmatprep.subr.mxu0 0.0
      %4356 = vmatpush1.msra.mxu0 0.0
      %4357 = vmatprep.subr.mxu0 0.0
      %4358 = vmatpush1.msra.mxu0 0.0
      %4359 = vmatprep.subr.mxu0 0.0
      %4360 = vmatpush1.msra.mxu0 0.0
      %4361 = vmatprep.subr.mxu0 0.0
      %4362 = vmatpush1.msra.mxu0 0.0
      %4363 = vmatprep.subr.mxu0 0.0
      %4364 = vmatpush1.msra.mxu0 0.0
      %4365 = vmatprep.subr.mxu0 0.0
      %4366 = vmatpush1.msra.mxu0 0.0
      %4367 = vmatprep.subr.mxu0 0.0
      %4368 = vmatpush1.msra.mxu0 0.0
      %4369 = vmatprep.subr.mxu0 0.0
      %4370 = vmatpush1.msra.mxu0 0.0
      %4371 = vmatprep.subr.mxu0 0.0
      %4372 = vmatpush1.msra.mxu0 0.0
      %4373 = vmatprep.subr.mxu0 0.0
      %4374 = vmatpush1.msra.mxu0 0.0
      %4375 = vmatprep.mubr.f32.mxu0 0.0
      %4376 = vmatmul.mubr.f32.gmra.mrb[0].mxu0 %v4182
      %v4377 = vpop.f32.mrb[0].mxu0
      %v4378 = vadd.f32 0.0, %v4377
      %v4379 = vpop.f32.mrb[0].mxu0
      %v4380 = vadd.f32 0.0, %v4379
      %4381 = vdwg.mxu0
      %4382 = vmatprep.subr.mxu0 %v4186
      %4383 = vmatpush1.msra.mxu0 %v4185
      %4384 = vmatprep.subr.mxu0 %v4194
      %4385 = vmatpush1.msra.mxu0 %v4193
      %4386 = vmatprep.subr.mxu0 %v4202
      %4387 = vmatpush1.msra.mxu0 %v4201
      %4388 = vmatprep.subr.mxu0 %v4210
      %4389 = vmatpush1.msra.mxu0 %v4209
      %4390 = vmatprep.subr.mxu0 %v4218
      %4391 = vmatpush1.msra.mxu0 %v4217
      %4392 = vmatprep.subr.mxu0 %v4226
      %4393 = vmatpush1.msra.mxu0 %v4225
      %4394 = vmatprep.subr.mxu0 %v4234
      %4395 = vmatpush1.msra.mxu0 %v4233
      %4396 = vmatprep.subr.mxu0 %v4242
      %4397 = vmatpush1.msra.mxu0 %v4241
      %4398 = vmatprep.subr.mxu0 %v4250
      %4399 = vmatpush1.msra.mxu0 %v4249
      %4400 = vmatprep.subr.mxu0 %v4258
      %4401 = vmatpush1.msra.mxu0 %v4257
      %4402 = vmatprep.subr.mxu0 %v4266
      %4403 = vmatpush1.msra.mxu0 %v4265
      %4404 = vmatprep.subr.mxu0 %v4274
      %4405 = vmatpush1.msra.mxu0 %v4273
      %4406 = vmatprep.subr.mxu0 %v4282
      %4407 = vmatpush1.msra.mxu0 %v4281
      %4408 = vmatprep.subr.mxu0 %v4290
      %4409 = vmatpush1.msra.mxu0 %v4289
      %4410 = vmatprep.subr.mxu0 %v4298
      %4411 = vmatpush1.msra.mxu0 %v4297
      %4412 = vmatprep.subr.mxu0 %v4306
      %4413 = vmatpush1.msra.mxu0 %v4305
      %4414 = vmatprep.subr.mxu0 0.0
      %4415 = vmatpush1.msra.mxu0 0.0
      %4416 = vmatprep.subr.mxu0 0.0
      %4417 = vmatpush1.msra.mxu0 0.0
      %4418 = vmatprep.subr.mxu0 0.0
      %4419 = vmatpush1.msra.mxu0 0.0
      %4420 = vmatprep.subr.mxu0 0.0
      %4421 = vmatpush1.msra.mxu0 0.0
      %4422 = vmatprep.subr.mxu0 0.0
      %4423 = vmatpush1.msra.mxu0 0.0
      %4424 = vmatprep.subr.mxu0 0.0
      %4425 = vmatpush1.msra.mxu0 0.0
      %4426 = vmatprep.subr.mxu0 0.0
      %4427 = vmatpush1.msra.mxu0 0.0
      %4428 = vmatprep.subr.mxu0 0.0
      %4429 = vmatpush1.msra.mxu0 0.0
      %4430 = vmatprep.subr.mxu0 0.0
      %4431 = vmatpush1.msra.mxu0 0.0
      %4432 = vmatprep.subr.mxu0 0.0
      %4433 = vmatpush1.msra.mxu0 0.0
      %4434 = vmatprep.subr.mxu0 0.0
      %4435 = vmatpush1.msra.mxu0 0.0
      %4436 = vmatprep.subr.mxu0 0.0
      %4437 = vmatpush1.msra.mxu0 0.0
      %4438 = vmatprep.subr.mxu0 0.0
      %4439 = vmatpush1.msra.mxu0 0.0
      %4440 = vmatprep.subr.mxu0 0.0
      %4441 = vmatpush1.msra.mxu0 0.0
      %4442 = vmatprep.subr.mxu0 0.0
      %4443 = vmatpush1.msra.mxu0 0.0
      %4444 = vmatprep.subr.mxu0 0.0
      %4445 = vmatpush1.msra.mxu0 0.0
      %4446 = vmatprep.mubr.f32.mxu0 0.0
      %4447 = vmatmul.mubr.f32.gmra.mrb[0].mxu0 %v4182
      %v4448 = vpop.f32.mrb[0].mxu0
      %v4449 = vadd.f32 0.0, %v4448
      %v4450 = vpop.f32.mrb[0].mxu0
      %v4451 = vadd.f32 0.0, %v4450
      %4452 = vdwg.mxu0
      %4453 = vmatprep.subr.mxu0 %v4188
      %4454 = vmatpush1.msra.mxu0 %v4187
      %4455 = vmatprep.subr.mxu0 %v4196
      %4456 = vmatpush1.msra.mxu0 %v4195
      %4457 = vmatprep.subr.mxu0 %v4204
      %4458 = vmatpush1.msra.mxu0 %v4203
      %4459 = vmatprep.subr.mxu0 %v4212
      %4460 = vmatpush1.msra.mxu0 %v4211
      %4461 = vmatprep.subr.mxu0 %v4220
      %4462 = vmatpush1.msra.mxu0 %v4219
      %4463 = vmatprep.subr.mxu0 %v4228
      %4464 = vmatpush1.msra.mxu0 %v4227
      %4465 = vmatprep.subr.mxu0 %v4236
      %4466 = vmatpush1.msra.mxu0 %v4235
      %4467 = vmatprep.subr.mxu0 %v4244
      %4468 = vmatpush1.msra.mxu0 %v4243
      %4469 = vmatprep.subr.mxu0 %v4252
      %4470 = vmatpush1.msra.mxu0 %v4251
      %4471 = vmatprep.subr.mxu0 %v4260
      %4472 = vmatpush1.msra.mxu0 %v4259
      %4473 = vmatprep.subr.mxu0 %v4268
      %4474 = vmatpush1.msra.mxu0 %v4267
      %4475 = vmatprep.subr.mxu0 %v4276
      %4476 = vmatpush1.msra.mxu0 %v4275
      %4477 = vmatprep.subr.mxu0 %v4284
      %4478 = vmatpush1.msra.mxu0 %v4283
      %4479 = vmatprep.subr.mxu0 %v4292
      %4480 = vmatpush1.msra.mxu0 %v4291
      %4481 = vmatprep.subr.mxu0 %v4300
      %4482 = vmatpush1.msra.mxu0 %v4299
      %4483 = vmatprep.subr.mxu0 %v4308
      %4484 = vmatpush1.msra.mxu0 %v4307
      %4485 = vmatprep.subr.mxu0 0.0
      %4486 = vmatpush1.msra.mxu0 0.0
      %4487 = vmatprep.subr.mxu0 0.0
      %4488 = vmatpush1.msra.mxu0 0.0
      %4489 = vmatprep.subr.mxu0 0.0
      %4490 = vmatpush1.msra.mxu0 0.0
      %4491 = vmatprep.subr.mxu0 0.0
      %4492 = vmatpush1.msra.mxu0 0.0
      %4493 = vmatprep.subr.mxu0 0.0
      %4494 = vmatpush1.msra.mxu0 0.0
      %4495 = vmatprep.subr.mxu0 0.0
      %4496 = vmatpush1.msra.mxu0 0.0
      %4497 = vmatprep.subr.mxu0 0.0
      %4498 = vmatpush1.msra.mxu0 0.0
      %4499 = vmatprep.subr.mxu0 0.0
      %4500 = vmatpush1.msra.mxu0 0.0
      %4501 = vmatprep.subr.mxu0 0.0
      %4502 = vmatpush1.msra.mxu0 0.0
      %4503 = vmatprep.subr.mxu0 0.0
      %4504 = vmatpush1.msra.mxu0 0.0
      %4505 = vmatprep.subr.mxu0 0.0
      %4506 = vmatpush1.msra.mxu0 0.0
      %4507 = vmatprep.subr.mxu0 0.0
      %4508 = vmatpush1.msra.mxu0 0.0
      %4509 = vmatprep.subr.mxu0 0.0
      %4510 = vmatpush1.msra.mxu0 0.0
      %4511 = vmatprep.subr.mxu0 0.0
      %4512 = vmatpush1.msra.mxu0 0.0
      %4513 = vmatprep.subr.mxu0 0.0
      %4514 = vmatpush1.msra.mxu0 0.0
      %4515 = vmatprep.subr.mxu0 0.0
      %4516 = vmatpush1.msra.mxu0 0.0
      %4517 = vmatprep.mubr.f32.mxu0 0.0
      %4518 = vmatmul.mubr.f32.gmra.mrb[0].mxu0 %v4182
      %v4519 = vpop.f32.mrb[0].mxu0
      %v4520 = vadd.f32 0.0, %v4519
      %v4521 = vpop.f32.mrb[0].mxu0
      %v4522 = vadd.f32 0.0, %v4521
      %4523 = vdwg.mxu0
      %4524 = vmatprep.subr.mxu0 %v4190
      %4525 = vmatpush1.msra.mxu0 %v4189
      %4526 = vmatprep.subr.mxu0 %v4198
      %4527 = vmatpush1.msra.mxu0 %v4197
      %4528 = vmatprep.subr.mxu0 %v4206
      %4529 = vmatpush1.msra.mxu0 %v4205
      %4530 = vmatprep.subr.mxu0 %v4214
      %4531 = vmatpush1.msra.mxu0 %v4213
      %4532 = vmatprep.subr.mxu0 %v4222
      %4533 = vmatpush1.msra.mxu0 %v4221
      %4534 = vmatprep.subr.mxu0 %v4230
      %4535 = vmatpush1.msra.mxu0 %v4229
      %4536 = vmatprep.subr.mxu0 %v4238
      %4537 = vmatpush1.msra.mxu0 %v4237
      %4538 = vmatprep.subr.mxu0 %v4246
      %4539 = vmatpush1.msra.mxu0 %v4245
      %4540 = vmatprep.subr.mxu0 %v4254
      %4541 = vmatpush1.msra.mxu0 %v4253
      %4542 = vmatprep.subr.mxu0 %v4262
      %4543 = vmatpush1.msra.mxu0 %v4261
      %4544 = vmatprep.subr.mxu0 %v4270
      %4545 = vmatpush1.msra.mxu0 %v4269
      %4546 = vmatprep.subr.mxu0 %v4278
      %4547 = vmatpush1.msra.mxu0 %v4277
      %4548 = vmatprep.subr.mxu0 %v4286
      %4549 = vmatpush1.msra.mxu0 %v4285
      %4550 = vmatprep.subr.mxu0 %v4294
      %4551 = vmatpush1.msra.mxu0 %v4293
      %4552 = vmatprep.subr.mxu0 %v4302
      %4553 = vmatpush1.msra.mxu0 %v4301
      %4554 = vmatprep.subr.mxu0 %v4310
      %4555 = vmatpush1.msra.mxu0 %v4309
      %4556 = vmatprep.subr.mxu0 0.0
      %4557 = vmatpush1.msra.mxu0 0.0
      %4558 = vmatprep.subr.mxu0 0.0
      %4559 = vmatpush1.msra.mxu0 0.0
      %4560 = vmatprep.subr.mxu0 0.0
      %4561 = vmatpush1.msra.mxu0 0.0
      %4562 = vmatprep.subr.mxu0 0.0
      %4563 = vmatpush1.msra.mxu0 0.0
      %4564 = vmatprep.subr.mxu0 0.0
      %4565 = vmatpush1.msra.mxu0 0.0
      %4566 = vmatprep.subr.mxu0 0.0
      %4567 = vmatpush1.msra.mxu0 0.0
      %4568 = vmatprep.subr.mxu0 0.0
      %4569 = vmatpush1.msra.mxu0 0.0
      %4570 = vmatprep.subr.mxu0 0.0
      %4571 = vmatpush1.msra.mxu0 0.0
      %4572 = vmatprep.subr.mxu0 0.0
      %4573 = vmatpush1.msra.mxu0 0.0
      %4574 = vmatprep.subr.mxu0 0.0
      %4575 = vmatpush1.msra.mxu0 0.0
      %4576 = vmatprep.subr.mxu0 0.0
      %4577 = vmatpush1.msra.mxu0 0.0
      %4578 = vmatprep.subr.mxu0 0.0
      %4579 = vmatpush1.msra.mxu0 0.0
      %4580 = vmatprep.subr.mxu0 0.0
      %4581 = vmatpush1.msra.mxu0 0.0
      %4582 = vmatprep.subr.mxu0 0.0
      %4583 = vmatpush1.msra.mxu0 0.0
      %4584 = vmatprep.subr.mxu0 0.0
      %4585 = vmatpush1.msra.mxu0 0.0
      %4586 = vmatprep.subr.mxu0 0.0
      %4587 = vmatpush1.msra.mxu0 0.0
      %4588 = vmatprep.mubr.f32.mxu0 0.0
      %4589 = vmatmul.mubr.f32.gmra.mrb[0].mxu0 %v4182
      %v4590 = vpop.f32.mrb[0].mxu0
      %v4591 = vadd.f32 0.0, %v4590
      %v4592 = vpop.f32.mrb[0].mxu0
      %v4593 = vadd.f32 0.0, %v4592
      %4594 = vdwg.mxu0
      %v4595 = vsub.f32 0.0, %v4378
      %v4596 = vsub.f32 0.0, %v4380
      %v4597 = vsub.f32 0.0, %v4449
      %v4598 = vsub.f32 0.0, %v4451
      %v4599 = vsub.f32 0.0, %v4520
      %v4600 = vsub.f32 0.0, %v4522
      %v4601 = vsub.f32 0.0, %v4591
      %v4602 = vsub.f32 0.0, %v4593
      %v4603 = vmul.f32 %v4595, 1.442695
      %v4604 = vpow.pop %v4603
      %v4605 = vmul.f32 %v4596, 1.442695
      %v4606 = vpow.pop %v4605
      %v4607 = vmul.f32 %v4597, 1.442695
      %v4608 = vpow.pop %v4607
      %v4609 = vmul.f32 %v4598, 1.442695
      %v4610 = vpow.pop %v4609
      %v4611 = vmul.f32 %v4599, 1.442695
      %v4612 = vpow.pop %v4611
      %v4613 = vmul.f32 %v4600, 1.442695
      %v4614 = vpow.pop %v4613
      %v4615 = vmul.f32 %v4601, 1.442695
      %v4616 = vpow.pop %v4615
      %v4617 = vmul.f32 %v4602, 1.442695
      %v4618 = vpow.pop %v4617
      %v4619 = vadd.f32 %v4604, 1.0
      %v4620 = vadd.f32 %v4606, 1.0
      %v4621 = vadd.f32 %v4608, 1.0
      %v4622 = vadd.f32 %v4610, 1.0
      %v4623 = vadd.f32 %v4612, 1.0
      %v4624 = vadd.f32 %v4614, 1.0
      %v4625 = vadd.f32 %v4616, 1.0
      %v4626 = vadd.f32 %v4618, 1.0
      %v4627 = vrcp.pop %v4619
      %v4628 = vmul.f32 1.0, %v4627
      %v4629 = vrcp.pop %v4620
      %v4630 = vmul.f32 1.0, %v4629
      %v4631 = vrcp.pop %v4621
      %v4632 = vmul.f32 1.0, %v4631
      %v4633 = vrcp.pop %v4622
      %v4634 = vmul.f32 1.0, %v4633
      %v4635 = vrcp.pop %v4623
      %v4636 = vmul.f32 1.0, %v4635
      %v4637 = vrcp.pop %v4624
      %v4638 = vmul.f32 1.0, %v4637
      %v4639 = vrcp.pop %v4625
      %v4640 = vmul.f32 1.0, %v4639
      %v4641 = vrcp.pop %v4626
      %v4642 = vmul.f32 1.0, %v4641
      %v4643 = vld [vmem:[%s8] sm:$0xff]
      %v4644 = vld [vmem:[%s8 + $0x8] sm:$0xff]
      %v4645 = vld [vmem:[%s9] sm:$0xff]
      %v4646 = vld [vmem:[%s9 + $0x8] sm:$0xff]
      %v4649 = vcombine.high %v4645, %v4645
      %v4651 = vunpack.c.l.s4 1983009808
      %v4652 = vunpack.c.0.s8 %v4651
      %v4653 = vlaneseq
      %v4654 = vshrl.u32 %v4653, 7
      %v4655 = vsub.s32 %v4652, %v4654
      %v4656 = vrot.slane %v4645, %v4655
      %v4658 = vunpack.c.l.s4 1983009808
      %v4659 = vunpack.c.0.s8 %v4658
      %v4660 = vlaneseq
      %v4661 = vshrl.u32 %v4660, 7
      %v4662 = vsub.s32 %v4659, %v4661
      %v4663 = vrot.slane %v4649, %v4662
      %v4664 = vcombine.high %v4656, %v4656
      %v4665 = vcombine.high %v4663, %v4663
      %v4666 = vcombine.high %v4646, %v4646
      %v4668 = vunpack.c.l.s4 1983009808
      %v4669 = vunpack.c.0.s8 %v4668
      %v4670 = vlaneseq
      %v4671 = vshrl.u32 %v4670, 7
      %v4672 = vsub.s32 %v4669, %v4671
      %v4673 = vrot.slane %v4646, %v4672
      %v4675 = vunpack.c.l.s4 1983009808
      %v4676 = vunpack.c.0.s8 %v4675
      %v4677 = vlaneseq
      %v4678 = vshrl.u32 %v4677, 7
      %v4679 = vsub.s32 %v4676, %v4678
      %v4680 = vrot.slane %v4666, %v4679
      %v4681 = vcombine.high %v4673, %v4673
      %v4682 = vcombine.high %v4680, %v4680
      %4691 = vmatprep.subr.mxu0 0.0
      %4692 = vmatpush1.msra.mxu0 %v3409
      %4693 = vmatprep.subr.mxu0 0.0
      %4694 = vmatpush1.msra.mxu0 %v3414
      %4695 = vmatprep.subr.mxu0 0.0
      %4696 = vmatpush1.msra.mxu0 %v3419
      %4697 = vmatprep.subr.mxu0 0.0
      %4698 = vmatpush1.msra.mxu0 %v3424
      %4699 = vmatprep.subr.mxu0 0.0
      %4700 = vmatpush1.msra.mxu0 %v3429
      %4701 = vmatprep.subr.mxu0 0.0
      %4702 = vmatpush1.msra.mxu0 %v3434
      %4703 = vmatprep.subr.mxu0 0.0
      %4704 = vmatpush1.msra.mxu0 %v3439
      %4705 = vmatprep.subr.mxu0 0.0
      %4706 = vmatpush1.msra.mxu0 %v3444
      %4707 = vmatprep.subr.mxu0 0.0
      %4708 = vmatpush1.msra.mxu0 %v3449
      %4709 = vmatprep.subr.mxu0 0.0
      %4710 = vmatpush1.msra.mxu0 %v3454
      %4711 = vmatprep.subr.mxu0 0.0
      %4712 = vmatpush1.msra.mxu0 %v3459
      %4713 = vmatprep.subr.mxu0 0.0
      %4714 = vmatpush1.msra.mxu0 %v3464
      %4715 = vmatprep.subr.mxu0 0.0
      %4716 = vmatpush1.msra.mxu0 %v3469
      %4717 = vmatprep.subr.mxu0 0.0
      %4718 = vmatpush1.msra.mxu0 %v3474
      %4719 = vmatprep.subr.mxu0 0.0
      %4720 = vmatpush1.msra.mxu0 %v3479
      %4721 = vmatprep.subr.mxu0 0.0
      %4722 = vmatpush1.msra.mxu0 %v3484
      %4723 = vmatprep.subr.mxu0 0.0
      %4724 = vmatpush1.msra.mxu0 %v3489
      %4725 = vmatprep.subr.mxu0 0.0
      %4726 = vmatpush1.msra.mxu0 %v3494
      %4727 = vmatprep.subr.mxu0 0.0
      %4728 = vmatpush1.msra.mxu0 %v3499
      %4729 = vmatprep.subr.mxu0 0.0
      %4730 = vmatpush1.msra.mxu0 %v3504
      %4731 = vmatprep.subr.mxu0 0.0
      %4732 = vmatpush1.msra.mxu0 %v3509
      %4733 = vmatprep.subr.mxu0 0.0
      %4734 = vmatpush1.msra.mxu0 %v3514
      %4735 = vmatprep.subr.mxu0 0.0
      %4736 = vmatpush1.msra.mxu0 %v3519
      %4737 = vmatprep.subr.mxu0 0.0
      %4738 = vmatpush1.msra.mxu0 %v3524
      %4739 = vmatprep.subr.mxu0 0.0
      %4740 = vmatpush1.msra.mxu0 %v3529
      %4741 = vmatprep.subr.mxu0 0.0
      %4742 = vmatpush1.msra.mxu0 %v3534
      %4743 = vmatprep.subr.mxu0 0.0
      %4744 = vmatpush1.msra.mxu0 %v3539
      %4745 = vmatprep.subr.mxu0 0.0
      %4746 = vmatpush1.msra.mxu0 %v3544
      %4747 = vmatprep.subr.mxu0 0.0
      %4748 = vmatpush1.msra.mxu0 %v3549
      %4749 = vmatprep.subr.mxu0 0.0
      %4750 = vmatpush1.msra.mxu0 %v3554
      %4751 = vmatprep.subr.mxu0 0.0
      %4752 = vmatpush1.msra.mxu0 %v3559
      %4753 = vmatprep.subr.mxu0 0.0
      %4754 = vmatpush1.msra.mxu0 %v3564
      %4755 = vmatprep.mubr.f32.mxu0 %v4664
      %4756 = vmatmul.mubr.f32.gmra.mrb[0].mxu0 %v4656
      %v4757 = vpop.f32.mrb[0].mxu0
      %v4758 = vadd.f32 0.0, %v4757
      %v4759 = vpop.f32.mrb[0].mxu0
      %4760 = vdwg.mxu0
      %4761 = vmatprep.subr.mxu0 0.0
      %4762 = vmatpush1.msra.mxu0 %v3569
      %4763 = vmatprep.subr.mxu0 0.0
      %4764 = vmatpush1.msra.mxu0 %v3574
      %4765 = vmatprep.subr.mxu0 0.0
      %4766 = vmatpush1.msra.mxu0 %v3579
      %4767 = vmatprep.subr.mxu0 0.0
      %4768 = vmatpush1.msra.mxu0 %v3584
      %4769 = vmatprep.subr.mxu0 0.0
      %4770 = vmatpush1.msra.mxu0 %v3589
      %4771 = vmatprep.subr.mxu0 0.0
      %4772 = vmatpush1.msra.mxu0 %v3594
      %4773 = vmatprep.subr.mxu0 0.0
      %4774 = vmatpush1.msra.mxu0 %v3599
      %4775 = vmatprep.subr.mxu0 0.0
      %4776 = vmatpush1.msra.mxu0 %v3604
      %4777 = vmatprep.subr.mxu0 0.0
      %4778 = vmatpush1.msra.mxu0 %v3609
      %4779 = vmatprep.subr.mxu0 0.0
      %4780 = vmatpush1.msra.mxu0 %v3614
      %4781 = vmatprep.subr.mxu0 0.0
      %4782 = vmatpush1.msra.mxu0 %v3619
      %4783 = vmatprep.subr.mxu0 0.0
      %4784 = vmatpush1.msra.mxu0 %v3624
      %4785 = vmatprep.subr.mxu0 0.0
      %4786 = vmatpush1.msra.mxu0 %v3629
      %4787 = vmatprep.subr.mxu0 0.0
      %4788 = vmatpush1.msra.mxu0 %v3634
      %4789 = vmatprep.subr.mxu0 0.0
      %4790 = vmatpush1.msra.mxu0 %v3639
      %4791 = vmatprep.subr.mxu0 0.0
      %4792 = vmatpush1.msra.mxu0 %v3644
      %4793 = vmatprep.subr.mxu0 0.0
      %4794 = vmatpush1.msra.mxu0 %v3649
      %4795 = vmatprep.subr.mxu0 0.0
      %4796 = vmatpush1.msra.mxu0 %v3654
      %4797 = vmatprep.subr.mxu0 0.0
      %4798 = vmatpush1.msra.mxu0 %v3659
      %4799 = vmatprep.subr.mxu0 0.0
      %4800 = vmatpush1.msra.mxu0 %v3664
      %4801 = vmatprep.subr.mxu0 0.0
      %4802 = vmatpush1.msra.mxu0 %v3669
      %4803 = vmatprep.subr.mxu0 0.0
      %4804 = vmatpush1.msra.mxu0 %v3674
      %4805 = vmatprep.subr.mxu0 0.0
      %4806 = vmatpush1.msra.mxu0 %v3679
      %4807 = vmatprep.subr.mxu0 0.0
      %4808 = vmatpush1.msra.mxu0 %v3684
      %4809 = vmatprep.subr.mxu0 0.0
      %4810 = vmatpush1.msra.mxu0 %v3689
      %4811 = vmatprep.subr.mxu0 0.0
      %4812 = vmatpush1.msra.mxu0 %v3694
      %4813 = vmatprep.subr.mxu0 0.0
      %4814 = vmatpush1.msra.mxu0 %v3699
      %4815 = vmatprep.subr.mxu0 0.0
      %4816 = vmatpush1.msra.mxu0 %v3704
      %4817 = vmatprep.subr.mxu0 0.0
      %4818 = vmatpush1.msra.mxu0 %v3709
      %4819 = vmatprep.subr.mxu0 0.0
      %4820 = vmatpush1.msra.mxu0 %v3714
      %4821 = vmatprep.subr.mxu0 0.0
      %4822 = vmatpush1.msra.mxu0 %v3719
      %4823 = vmatprep.subr.mxu0 0.0
      %4824 = vmatpush1.msra.mxu0 %v3724
      %4825 = vmatprep.mubr.f32.mxu0 %v4665
      %4826 = vmatmul.mubr.f32.gmra.mrb[0].mxu0 %v4663
      %v4827 = vpop.f32.mrb[0].mxu0
      %v4828 = vadd.f32 %v4758, %v4827
      %v4829 = vpop.f32.mrb[0].mxu0
      %4830 = vdwg.mxu0
      %4831 = vmatprep.subr.mxu0 0.0
      %4832 = vmatpush1.msra.mxu0 %v3729
      %4833 = vmatprep.subr.mxu0 0.0
      %4834 = vmatpush1.msra.mxu0 %v3734
      %4835 = vmatprep.subr.mxu0 0.0
      %4836 = vmatpush1.msra.mxu0 %v3739
      %4837 = vmatprep.subr.mxu0 0.0
      %4838 = vmatpush1.msra.mxu0 %v3744
      %4839 = vmatprep.subr.mxu0 0.0
      %4840 = vmatpush1.msra.mxu0 %v3749
      %4841 = vmatprep.subr.mxu0 0.0
      %4842 = vmatpush1.msra.mxu0 %v3754
      %4843 = vmatprep.subr.mxu0 0.0
      %4844 = vmatpush1.msra.mxu0 %v3759
      %4845 = vmatprep.subr.mxu0 0.0
      %4846 = vmatpush1.msra.mxu0 %v3764
      %4847 = vmatprep.subr.mxu0 0.0
      %4848 = vmatpush1.msra.mxu0 %v3769
      %4849 = vmatprep.subr.mxu0 0.0
      %4850 = vmatpush1.msra.mxu0 %v3774
      %4851 = vmatprep.subr.mxu0 0.0
      %4852 = vmatpush1.msra.mxu0 %v3779
      %4853 = vmatprep.subr.mxu0 0.0
      %4854 = vmatpush1.msra.mxu0 %v3784
      %4855 = vmatprep.subr.mxu0 0.0
      %4856 = vmatpush1.msra.mxu0 %v3789
      %4857 = vmatprep.subr.mxu0 0.0
      %4858 = vmatpush1.msra.mxu0 %v3794
      %4859 = vmatprep.subr.mxu0 0.0
      %4860 = vmatpush1.msra.mxu0 %v3799
      %4861 = vmatprep.subr.mxu0 0.0
      %4862 = vmatpush1.msra.mxu0 %v3804
      %4863 = vmatprep.subr.mxu0 0.0
      %4864 = vmatpush1.msra.mxu0 %v3809
      %4865 = vmatprep.subr.mxu0 0.0
      %4866 = vmatpush1.msra.mxu0 %v3814
      %4867 = vmatprep.subr.mxu0 0.0
      %4868 = vmatpush1.msra.mxu0 %v3819
      %4869 = vmatprep.subr.mxu0 0.0
      %4870 = vmatpush1.msra.mxu0 %v3824
      %4871 = vmatprep.subr.mxu0 0.0
      %4872 = vmatpush1.msra.mxu0 %v3829
      %4873 = vmatprep.subr.mxu0 0.0
      %4874 = vmatpush1.msra.mxu0 %v3834
      %4875 = vmatprep.subr.mxu0 0.0
      %4876 = vmatpush1.msra.mxu0 %v3839
      %4877 = vmatprep.subr.mxu0 0.0
      %4878 = vmatpush1.msra.mxu0 %v3844
      %4879 = vmatprep.subr.mxu0 0.0
      %4880 = vmatpush1.msra.mxu0 %v3849
      %4881 = vmatprep.subr.mxu0 0.0
      %4882 = vmatpush1.msra.mxu0 %v3854
      %4883 = vmatprep.subr.mxu0 0.0
      %4884 = vmatpush1.msra.mxu0 %v3859
      %4885 = vmatprep.subr.mxu0 0.0
      %4886 = vmatpush1.msra.mxu0 %v3864
      %4887 = vmatprep.subr.mxu0 0.0
      %4888 = vmatpush1.msra.mxu0 %v3869
      %4889 = vmatprep.subr.mxu0 0.0
      %4890 = vmatpush1.msra.mxu0 %v3874
      %4891 = vmatprep.subr.mxu0 0.0
      %4892 = vmatpush1.msra.mxu0 %v3879
      %4893 = vmatprep.subr.mxu0 0.0
      %4894 = vmatpush1.msra.mxu0 %v3884
      %4895 = vmatprep.mubr.f32.mxu0 %v4681
      %4896 = vmatmul.mubr.f32.gmra.mrb[0].mxu0 %v4673
      %v4897 = vpop.f32.mrb[0].mxu0
      %v4898 = vadd.f32 %v4828, %v4897
      %v4899 = vpop.f32.mrb[0].mxu0
      %4900 = vdwg.mxu0
      %4901 = vmatprep.subr.mxu0 0.0
      %4902 = vmatpush1.msra.mxu0 %v3889
      %4903 = vmatprep.subr.mxu0 0.0
      %4904 = vmatpush1.msra.mxu0 %v3894
      %4905 = vmatprep.subr.mxu0 0.0
      %4906 = vmatpush1.msra.mxu0 %v3899
      %4907 = vmatprep.subr.mxu0 0.0
      %4908 = vmatpush1.msra.mxu0 %v3904
      %4909 = vmatprep.subr.mxu0 0.0
      %4910 = vmatpush1.msra.mxu0 %v3909
      %4911 = vmatprep.subr.mxu0 0.0
      %4912 = vmatpush1.msra.mxu0 %v3914
      %4913 = vmatprep.subr.mxu0 0.0
      %4914 = vmatpush1.msra.mxu0 %v3919
      %4915 = vmatprep.subr.mxu0 0.0
      %4916 = vmatpush1.msra.mxu0 %v3924
      %4917 = vmatprep.subr.mxu0 0.0
      %4918 = vmatpush1.msra.mxu0 %v3929
      %4919 = vmatprep.subr.mxu0 0.0
      %4920 = vmatpush1.msra.mxu0 %v3934
      %4921 = vmatprep.subr.mxu0 0.0
      %4922 = vmatpush1.msra.mxu0 %v3939
      %4923 = vmatprep.subr.mxu0 0.0
      %4924 = vmatpush1.msra.mxu0 %v3944
      %4925 = vmatprep.subr.mxu0 0.0
      %4926 = vmatpush1.msra.mxu0 %v3949
      %4927 = vmatprep.subr.mxu0 0.0
      %4928 = vmatpush1.msra.mxu0 %v3954
      %4929 = vmatprep.subr.mxu0 0.0
      %4930 = vmatpush1.msra.mxu0 %v3959
      %4931 = vmatprep.subr.mxu0 0.0
      %4932 = vmatpush1.msra.mxu0 %v3964
      %4933 = vmatprep.subr.mxu0 0.0
      %4934 = vmatpush1.msra.mxu0 %v3969
      %4935 = vmatprep.subr.mxu0 0.0
      %4936 = vmatpush1.msra.mxu0 %v3974
      %4937 = vmatprep.subr.mxu0 0.0
      %4938 = vmatpush1.msra.mxu0 %v3979
      %4939 = vmatprep.subr.mxu0 0.0
      %4940 = vmatpush1.msra.mxu0 %v3984
      %4941 = vmatprep.subr.mxu0 0.0
      %4942 = vmatpush1.msra.mxu0 %v3989
      %4943 = vmatprep.subr.mxu0 0.0
      %4944 = vmatpush1.msra.mxu0 %v3994
      %4945 = vmatprep.subr.mxu0 0.0
      %4946 = vmatpush1.msra.mxu0 %v3999
      %4947 = vmatprep.subr.mxu0 0.0
      %4948 = vmatpush1.msra.mxu0 %v4004
      %4949 = vmatprep.subr.mxu0 0.0
      %4950 = vmatpush1.msra.mxu0 %v4009
      %4951 = vmatprep.subr.mxu0 0.0
      %4952 = vmatpush1.msra.mxu0 %v4014
      %4953 = vmatprep.subr.mxu0 0.0
      %4954 = vmatpush1.msra.mxu0 %v4019
      %4955 = vmatprep.subr.mxu0 0.0
      %4956 = vmatpush1.msra.mxu0 %v4024
      %4957 = vmatprep.subr.mxu0 0.0
      %4958 = vmatpush1.msra.mxu0 %v4029
      %4959 = vmatprep.subr.mxu0 0.0
      %4960 = vmatpush1.msra.mxu0 %v4034
      %4961 = vmatprep.subr.mxu0 0.0
      %4962 = vmatpush1.msra.mxu0 %v4039
      %4963 = vmatprep.subr.mxu0 0.0
      %4964 = vmatpush1.msra.mxu0 %v4044
      %4965 = vmatprep.mubr.f32.mxu0 %v4682
      %4966 = vmatmul.mubr.f32.gmra.mrb[0].mxu0 %v4680
      %v4967 = vpop.f32.mrb[0].mxu0
      %v4968 = vadd.f32 %v4898, %v4967
      %v4969 = vpop.f32.mrb[0].mxu0
      %4970 = vdwg.mxu0
      %v4973 = vcombine.high %v4643, %v4643
      %v4975 = vunpack.c.l.s4 1983009808
      %v4976 = vunpack.c.0.s8 %v4975
      %v4977 = vlaneseq
      %v4978 = vshrl.u32 %v4977, 7
      %v4979 = vsub.s32 %v4976, %v4978
      %v4980 = vrot.slane %v4643, %v4979
      %v4982 = vunpack.c.l.s4 1983009808
      %v4983 = vunpack.c.0.s8 %v4982
      %v4984 = vlaneseq
      %v4985 = vshrl.u32 %v4984, 7
      %v4986 = vsub.s32 %v4983, %v4985
      %v4987 = vrot.slane %v4973, %v4986
      %v4988 = vcombine.high %v4980, %v4980
      %v4989 = vcombine.high %v4987, %v4987
      %v4990 = vcombine.high %v4644, %v4644
      %v4992 = vunpack.c.l.s4 1983009808
      %v4993 = vunpack.c.0.s8 %v4992
      %v4994 = vlaneseq
      %v4995 = vshrl.u32 %v4994, 7
      %v4996 = vsub.s32 %v4993, %v4995
      %v4997 = vrot.slane %v4644, %v4996
      %v4999 = vunpack.c.l.s4 1983009808
      %v5000 = vunpack.c.0.s8 %v4999
      %v5001 = vlaneseq
      %v5002 = vshrl.u32 %v5001, 7
      %v5003 = vsub.s32 %v5000, %v5002
      %v5004 = vrot.slane %v4990, %v5003
      %v5005 = vcombine.high %v4997, %v4997
      %v5006 = vcombine.high %v5004, %v5004
      %5015 = vmatprep.subr.mxu0 0.0
      %5016 = vmatpush1.msra.mxu0 %v989
      %5017 = vmatprep.subr.mxu0 0.0
      %5018 = vmatpush1.msra.mxu0 %v990
      %5019 = vmatprep.subr.mxu0 0.0
      %5020 = vmatpush1.msra.mxu0 %v991
      %5021 = vmatprep.subr.mxu0 0.0
      %5022 = vmatpush1.msra.mxu0 %v992
      %5023 = vmatprep.subr.mxu0 0.0
      %5024 = vmatpush1.msra.mxu0 %v993
      %5025 = vmatprep.subr.mxu0 0.0
      %5026 = vmatpush1.msra.mxu0 %v994
      %5027 = vmatprep.subr.mxu0 0.0
      %5028 = vmatpush1.msra.mxu0 %v995
      %5029 = vmatprep.subr.mxu0 0.0
      %5030 = vmatpush1.msra.mxu0 %v996
      %5031 = vmatprep.subr.mxu0 0.0
      %5032 = vmatpush1.msra.mxu0 %v997
      %5033 = vmatprep.subr.mxu0 0.0
      %5034 = vmatpush1.msra.mxu0 %v998
      %5035 = vmatprep.subr.mxu0 0.0
      %5036 = vmatpush1.msra.mxu0 %v999
      %5037 = vmatprep.subr.mxu0 0.0
      %5038 = vmatpush1.msra.mxu0 %v1000
      %5039 = vmatprep.subr.mxu0 0.0
      %5040 = vmatpush1.msra.mxu0 %v1001
      %5041 = vmatprep.subr.mxu0 0.0
      %5042 = vmatpush1.msra.mxu0 %v1002
      %5043 = vmatprep.subr.mxu0 0.0
      %5044 = vmatpush1.msra.mxu0 %v1003
      %5045 = vmatprep.subr.mxu0 0.0
      %5046 = vmatpush1.msra.mxu0 %v1004
      %5047 = vmatprep.subr.mxu0 0.0
      %5048 = vmatpush1.msra.mxu0 %v1005
      %5049 = vmatprep.subr.mxu0 0.0
      %5050 = vmatpush1.msra.mxu0 %v1006
      %5051 = vmatprep.subr.mxu0 0.0
      %5052 = vmatpush1.msra.mxu0 %v1007
      %5053 = vmatprep.subr.mxu0 0.0
      %5054 = vmatpush1.msra.mxu0 %v1008
      %5055 = vmatprep.subr.mxu0 0.0
      %5056 = vmatpush1.msra.mxu0 %v1009
      %5057 = vmatprep.subr.mxu0 0.0
      %5058 = vmatpush1.msra.mxu0 %v1010
      %5059 = vmatprep.subr.mxu0 0.0
      %5060 = vmatpush1.msra.mxu0 %v1011
      %5061 = vmatprep.subr.mxu0 0.0
      %5062 = vmatpush1.msra.mxu0 %v1012
      %5063 = vmatprep.subr.mxu0 0.0
      %5064 = vmatpush1.msra.mxu0 %v1013
      %5065 = vmatprep.subr.mxu0 0.0
      %5066 = vmatpush1.msra.mxu0 %v1014
      %5067 = vmatprep.subr.mxu0 0.0
      %5068 = vmatpush1.msra.mxu0 %v1015
      %5069 = vmatprep.subr.mxu0 0.0
      %5070 = vmatpush1.msra.mxu0 %v1016
      %5071 = vmatprep.subr.mxu0 0.0
      %5072 = vmatpush1.msra.mxu0 %v1017
      %5073 = vmatprep.subr.mxu0 0.0
      %5074 = vmatpush1.msra.mxu0 %v1018
      %5075 = vmatprep.subr.mxu0 0.0
      %5076 = vmatpush1.msra.mxu0 %v1019
      %5077 = vmatprep.subr.mxu0 0.0
      %5078 = vmatpush1.msra.mxu0 %v1020
      %5079 = vmatprep.mubr.f32.mxu0 %v4988
      %5080 = vmatmul.mubr.f32.gmra.mrb[0].mxu0 %v4980
      %v5081 = vpop.f32.mrb[0].mxu0
      %v5082 = vadd.f32 %v4968, %v5081
      %v5083 = vpop.f32.mrb[0].mxu0
      %5084 = vdwg.mxu0
      %5085 = vmatprep.subr.mxu0 0.0
      %5086 = vmatpush1.msra.mxu0 %v1021
      %5087 = vmatprep.subr.mxu0 0.0
      %5088 = vmatpush1.msra.mxu0 %v1022
      %5089 = vmatprep.subr.mxu0 0.0
      %5090 = vmatpush1.msra.mxu0 %v1023
      %5091 = vmatprep.subr.mxu0 0.0
      %5092 = vmatpush1.msra.mxu0 %v1024
      %5093 = vmatprep.subr.mxu0 0.0
      %5094 = vmatpush1.msra.mxu0 %v1025
      %5095 = vmatprep.subr.mxu0 0.0
      %5096 = vmatpush1.msra.mxu0 %v1026
      %5097 = vmatprep.subr.mxu0 0.0
      %5098 = vmatpush1.msra.mxu0 %v1027
      %5099 = vmatprep.subr.mxu0 0.0
      %5100 = vmatpush1.msra.mxu0 %v1028
      %5101 = vmatprep.subr.mxu0 0.0
      %5102 = vmatpush1.msra.mxu0 %v1029
      %5103 = vmatprep.subr.mxu0 0.0
      %5104 = vmatpush1.msra.mxu0 %v1030
      %5105 = vmatprep.subr.mxu0 0.0
      %5106 = vmatpush1.msra.mxu0 %v1031
      %5107 = vmatprep.subr.mxu0 0.0
      %5108 = vmatpush1.msra.mxu0 %v1032
      %5109 = vmatprep.subr.mxu0 0.0
      %5110 = vmatpush1.msra.mxu0 %v1033
      %5111 = vmatprep.subr.mxu0 0.0
      %5112 = vmatpush1.msra.mxu0 %v1034
      %5113 = vmatprep.subr.mxu0 0.0
      %5114 = vmatpush1.msra.mxu0 %v1035
      %5115 = vmatprep.subr.mxu0 0.0
      %5116 = vmatpush1.msra.mxu0 %v1036
      %5117 = vmatprep.subr.mxu0 0.0
      %5118 = vmatpush1.msra.mxu0 %v1037
      %5119 = vmatprep.subr.mxu0 0.0
      %5120 = vmatpush1.msra.mxu0 %v1038
      %5121 = vmatprep.subr.mxu0 0.0
      %5122 = vmatpush1.msra.mxu0 %v1039
      %5123 = vmatprep.subr.mxu0 0.0
      %5124 = vmatpush1.msra.mxu0 %v1040
      %5125 = vmatprep.subr.mxu0 0.0
      %5126 = vmatpush1.msra.mxu0 %v1041
      %5127 = vmatprep.subr.mxu0 0.0
      %5128 = vmatpush1.msra.mxu0 %v1042
      %5129 = vmatprep.subr.mxu0 0.0
      %5130 = vmatpush1.msra.mxu0 %v1043
      %5131 = vmatprep.subr.mxu0 0.0
      %5132 = vmatpush1.msra.mxu0 %v1044
      %5133 = vmatprep.subr.mxu0 0.0
      %5134 = vmatpush1.msra.mxu0 %v1045
      %5135 = vmatprep.subr.mxu0 0.0
      %5136 = vmatpush1.msra.mxu0 %v1046
      %5137 = vmatprep.subr.mxu0 0.0
      %5138 = vmatpush1.msra.mxu0 %v1047
      %5139 = vmatprep.subr.mxu0 0.0
      %5140 = vmatpush1.msra.mxu0 %v1048
      %5141 = vmatprep.subr.mxu0 0.0
      %5142 = vmatpush1.msra.mxu0 %v1049
      %5143 = vmatprep.subr.mxu0 0.0
      %5144 = vmatpush1.msra.mxu0 %v1050
      %5145 = vmatprep.subr.mxu0 0.0
      %5146 = vmatpush1.msra.mxu0 %v1051
      %5147 = vmatprep.subr.mxu0 0.0
      %5148 = vmatpush1.msra.mxu0 %v1052
      %5149 = vmatprep.mubr.f32.mxu0 %v4989
      %5150 = vmatmul.mubr.f32.gmra.mrb[0].mxu0 %v4987
      %v5151 = vpop.f32.mrb[0].mxu0
      %v5152 = vadd.f32 %v5082, %v5151
      %v5153 = vpop.f32.mrb[0].mxu0
      %5154 = vdwg.mxu0
      %5155 = vmatprep.subr.mxu0 0.0
      %5156 = vmatpush1.msra.mxu0 %v1053
      %5157 = vmatprep.subr.mxu0 0.0
      %5158 = vmatpush1.msra.mxu0 %v1054
      %5159 = vmatprep.subr.mxu0 0.0
      %5160 = vmatpush1.msra.mxu0 %v1055
      %5161 = vmatprep.subr.mxu0 0.0
      %5162 = vmatpush1.msra.mxu0 %v1056
      %5163 = vmatprep.subr.mxu0 0.0
      %5164 = vmatpush1.msra.mxu0 %v1057
      %5165 = vmatprep.subr.mxu0 0.0
      %5166 = vmatpush1.msra.mxu0 %v1058
      %5167 = vmatprep.subr.mxu0 0.0
      %5168 = vmatpush1.msra.mxu0 %v1059
      %5169 = vmatprep.subr.mxu0 0.0
      %5170 = vmatpush1.msra.mxu0 %v1060
      %5171 = vmatprep.subr.mxu0 0.0
      %5172 = vmatpush1.msra.mxu0 %v1061
      %5173 = vmatprep.subr.mxu0 0.0
      %5174 = vmatpush1.msra.mxu0 %v1062
      %5175 = vmatprep.subr.mxu0 0.0
      %5176 = vmatpush1.msra.mxu0 %v1063
      %5177 = vmatprep.subr.mxu0 0.0
      %5178 = vmatpush1.msra.mxu0 %v1064
      %5179 = vmatprep.subr.mxu0 0.0
      %5180 = vmatpush1.msra.mxu0 %v1065
      %5181 = vmatprep.subr.mxu0 0.0
      %5182 = vmatpush1.msra.mxu0 %v1066
      %5183 = vmatprep.subr.mxu0 0.0
      %5184 = vmatpush1.msra.mxu0 %v1067
      %5185 = vmatprep.subr.mxu0 0.0
      %5186 = vmatpush1.msra.mxu0 %v1068
      %5187 = vmatprep.subr.mxu0 0.0
      %5188 = vmatpush1.msra.mxu0 %v1069
      %5189 = vmatprep.subr.mxu0 0.0
      %5190 = vmatpush1.msra.mxu0 %v1070
      %5191 = vmatprep.subr.mxu0 0.0
      %5192 = vmatpush1.msra.mxu0 %v1071
      %5193 = vmatprep.subr.mxu0 0.0
      %5194 = vmatpush1.msra.mxu0 %v1072
      %5195 = vmatprep.subr.mxu0 0.0
      %5196 = vmatpush1.msra.mxu0 %v1073
      %5197 = vmatprep.subr.mxu0 0.0
      %5198 = vmatpush1.msra.mxu0 %v1074
      %5199 = vmatprep.subr.mxu0 0.0
      %5200 = vmatpush1.msra.mxu0 %v1075
      %5201 = vmatprep.subr.mxu0 0.0
      %5202 = vmatpush1.msra.mxu0 %v1076
      %5203 = vmatprep.subr.mxu0 0.0
      %5204 = vmatpush1.msra.mxu0 %v1077
      %5205 = vmatprep.subr.mxu0 0.0
      %5206 = vmatpush1.msra.mxu0 %v1078
      %5207 = vmatprep.subr.mxu0 0.0
      %5208 = vmatpush1.msra.mxu0 %v1079
      %5209 = vmatprep.subr.mxu0 0.0
      %5210 = vmatpush1.msra.mxu0 %v1080
      %5211 = vmatprep.subr.mxu0 0.0
      %5212 = vmatpush1.msra.mxu0 %v1081
      %5213 = vmatprep.subr.mxu0 0.0
      %5214 = vmatpush1.msra.mxu0 %v1082
      %5215 = vmatprep.subr.mxu0 0.0
      %5216 = vmatpush1.msra.mxu0 %v1083
      %5217 = vmatprep.subr.mxu0 0.0
      %5218 = vmatpush1.msra.mxu0 %v1084
      %5219 = vmatprep.mubr.f32.mxu0 %v5005
      %5220 = vmatmul.mubr.f32.gmra.mrb[0].mxu0 %v4997
      %v5221 = vpop.f32.mrb[0].mxu0
      %v5222 = vadd.f32 %v5152, %v5221
      %v5223 = vpop.f32.mrb[0].mxu0
      %5224 = vdwg.mxu0
      %5225 = vmatprep.subr.mxu0 0.0
      %5226 = vmatpush1.msra.mxu0 %v1085
      %5227 = vmatprep.subr.mxu0 0.0
      %5228 = vmatpush1.msra.mxu0 %v1086
      %5229 = vmatprep.subr.mxu0 0.0
      %5230 = vmatpush1.msra.mxu0 %v1087
      %5231 = vmatprep.subr.mxu0 0.0
      %5232 = vmatpush1.msra.mxu0 %v1088
      %5233 = vmatprep.subr.mxu0 0.0
      %5234 = vmatpush1.msra.mxu0 %v1089
      %5235 = vmatprep.subr.mxu0 0.0
      %5236 = vmatpush1.msra.mxu0 %v1090
      %5237 = vmatprep.subr.mxu0 0.0
      %5238 = vmatpush1.msra.mxu0 %v1091
      %5239 = vmatprep.subr.mxu0 0.0
      %5240 = vmatpush1.msra.mxu0 %v1092
      %5241 = vmatprep.subr.mxu0 0.0
      %5242 = vmatpush1.msra.mxu0 %v1093
      %5243 = vmatprep.subr.mxu0 0.0
      %5244 = vmatpush1.msra.mxu0 %v1094
      %5245 = vmatprep.subr.mxu0 0.0
      %5246 = vmatpush1.msra.mxu0 %v1095
      %5247 = vmatprep.subr.mxu0 0.0
      %5248 = vmatpush1.msra.mxu0 %v1096
      %5249 = vmatprep.subr.mxu0 0.0
      %5250 = vmatpush1.msra.mxu0 %v1097
      %5251 = vmatprep.subr.mxu0 0.0
      %5252 = vmatpush1.msra.mxu0 %v1098
      %5253 = vmatprep.subr.mxu0 0.0
      %5254 = vmatpush1.msra.mxu0 %v1099
      %5255 = vmatprep.subr.mxu0 0.0
      %5256 = vmatpush1.msra.mxu0 %v1100
      %5257 = vmatprep.subr.mxu0 0.0
      %5258 = vmatpush1.msra.mxu0 %v1101
      %5259 = vmatprep.subr.mxu0 0.0
      %5260 = vmatpush1.msra.mxu0 %v1102
      %5261 = vmatprep.subr.mxu0 0.0
      %5262 = vmatpush1.msra.mxu0 %v1103
      %5263 = vmatprep.subr.mxu0 0.0
      %5264 = vmatpush1.msra.mxu0 %v1104
      %5265 = vmatprep.subr.mxu0 0.0
      %5266 = vmatpush1.msra.mxu0 %v1105
      %5267 = vmatprep.subr.mxu0 0.0
      %5268 = vmatpush1.msra.mxu0 %v1106
      %5269 = vmatprep.subr.mxu0 0.0
      %5270 = vmatpush1.msra.mxu0 %v1107
      %5271 = vmatprep.subr.mxu0 0.0
      %5272 = vmatpush1.msra.mxu0 %v1108
      %5273 = vmatprep.subr.mxu0 0.0
      %5274 = vmatpush1.msra.mxu0 %v1109
      %5275 = vmatprep.subr.mxu0 0.0
      %5276 = vmatpush1.msra.mxu0 %v1110
      %5277 = vmatprep.subr.mxu0 0.0
      %5278 = vmatpush1.msra.mxu0 %v1111
      %5279 = vmatprep.subr.mxu0 0.0
      %5280 = vmatpush1.msra.mxu0 %v1112
      %5281 = vmatprep.subr.mxu0 0.0
      %5282 = vmatpush1.msra.mxu0 %v1113
      %5283 = vmatprep.subr.mxu0 0.0
      %5284 = vmatpush1.msra.mxu0 %v1114
      %5285 = vmatprep.subr.mxu0 0.0
      %5286 = vmatpush1.msra.mxu0 %v1115
      %5287 = vmatprep.subr.mxu0 0.0
      %5288 = vmatpush1.msra.mxu0 %v1116
      %5289 = vmatprep.mubr.f32.mxu0 %v5006
      %5290 = vmatmul.mubr.f32.gmra.mrb[0].mxu0 %v5004
      %v5291 = vpop.f32.mrb[0].mxu0
      %v5292 = vadd.f32 %v5222, %v5291
      %v5293 = vpop.f32.mrb[0].mxu0
      %5294 = vdwg.mxu0
      %v5295 = vld [vmem:[%s10] sm:$0xff]
      %v5296 = vld [vmem:[%s10 + $0x8] sm:$0xff]
      %v5297 = vlaneseq
      %v5298 = vshrl.u32 %v5297, 7
      %v5299 = vsub.s32 0, %v5298
      %v5300 = vrot.slane %v4628, %v5299
      %v5301 = vlaneseq
      %v5302 = vshrl.u32 %v5301, 7
      %v5303 = vsub.s32 0, %v5302
      %v5304 = vrot.slane %v4630, %v5303
      %v5305 = vlaneseq
      %v5306 = vshrl.u32 %v5305, 7
      %v5307 = vsub.s32 0, %v5306
      %v5308 = vrot.slane %v4632, %v5307
      %v5309 = vlaneseq
      %v5310 = vshrl.u32 %v5309, 7
      %v5311 = vsub.s32 0, %v5310
      %v5312 = vrot.slane %v4634, %v5311
      %v5313 = vlaneseq
      %v5314 = vshrl.u32 %v5313, 7
      %v5315 = vsub.s32 0, %v5314
      %v5316 = vrot.slane %v4636, %v5315
      %v5317 = vlaneseq
      %v5318 = vshrl.u32 %v5317, 7
      %v5319 = vsub.s32 0, %v5318
      %v5320 = vrot.slane %v4638, %v5319
      %v5321 = vlaneseq
      %v5322 = vshrl.u32 %v5321, 7
      %v5323 = vsub.s32 0, %v5322
      %v5324 = vrot.slane %v4640, %v5323
      %v5325 = vlaneseq
      %v5326 = vshrl.u32 %v5325, 7
      %v5327 = vsub.s32 0, %v5326
      %v5328 = vrot.slane %v4642, %v5327
      %v5337 = vcombine.low %v5300, %v5304
      %v5338 = vcombine.low %v5308, %v5312
      %v5340 = vunpack.c.l.s4 1983009808
      %v5341 = vunpack.c.0.s8 %v5340
      %v5342 = vlaneseq
      %v5343 = vshrl.u32 %v5342, 7
      %v5344 = vsub.s32 %v5341, %v5343
      %v5345 = vrot.slane %v5337, %v5344
      %v5347 = vunpack.c.l.s4 1983009808
      %v5348 = vunpack.c.0.s8 %v5347
      %v5349 = vlaneseq
      %v5350 = vshrl.u32 %v5349, 7
      %v5351 = vsub.s32 %v5348, %v5350
      %v5352 = vrot.slane %v5338, %v5351
      %v5353 = vcombine.low %v5345, %v5352
      %v5354 = vcombine.low %v5316, %v5320
      %v5355 = vcombine.low %v5324, %v5328
      %v5357 = vunpack.c.l.s4 1983009808
      %v5358 = vunpack.c.0.s8 %v5357
      %v5359 = vlaneseq
      %v5360 = vshrl.u32 %v5359, 7
      %v5361 = vsub.s32 %v5358, %v5360
      %v5362 = vrot.slane %v5354, %v5361
      %v5364 = vunpack.c.l.s4 1983009808
      %v5365 = vunpack.c.0.s8 %v5364
      %v5366 = vlaneseq
      %v5367 = vshrl.u32 %v5366, 7
      %v5368 = vsub.s32 %v5365, %v5367
      %v5369 = vrot.slane %v5355, %v5368
      %v5370 = vcombine.low %v5362, %v5369
      %v5373 = vmul.f32 %v5295, %v5353
      %v5374 = vmul.f32 %v5296, %v5370
      %v5377 = vcombine.high %v5373, %v5373
      %v5379 = vunpack.c.l.s4 1983009808
      %v5380 = vunpack.c.0.s8 %v5379
      %v5381 = vlaneseq
      %v5382 = vshrl.u32 %v5381, 7
      %v5383 = vsub.s32 %v5380, %v5382
      %v5384 = vrot.slane %v5373, %v5383
      %v5386 = vunpack.c.l.s4 1983009808
      %v5387 = vunpack.c.0.s8 %v5386
      %v5388 = vlaneseq
      %v5389 = vshrl.u32 %v5388, 7
      %v5390 = vsub.s32 %v5387, %v5389
      %v5391 = vrot.slane %v5377, %v5390
      %v5392 = vcombine.high %v5384, %v5384
      %v5393 = vcombine.high %v5391, %v5391
      %v5394 = vcombine.high %v5374, %v5374
      %v5396 = vunpack.c.l.s4 1983009808
      %v5397 = vunpack.c.0.s8 %v5396
      %v5398 = vlaneseq
      %v5399 = vshrl.u32 %v5398, 7
      %v5400 = vsub.s32 %v5397, %v5399
      %v5401 = vrot.slane %v5374, %v5400
      %v5403 = vunpack.c.l.s4 1983009808
      %v5404 = vunpack.c.0.s8 %v5403
      %v5405 = vlaneseq
      %v5406 = vshrl.u32 %v5405, 7
      %v5407 = vsub.s32 %v5404, %v5406
      %v5408 = vrot.slane %v5394, %v5407
      %v5409 = vcombine.high %v5401, %v5401
      %v5410 = vcombine.high %v5408, %v5408
      %5547 = vrot.lane.b32.xlu0 %v2063, 120
      %v5548 = vpop.permute.xlu0 %5547
      %5549 = vrot.lane.b32.xlu0 %v2068, 120
      %v5550 = vpop.permute.xlu0 %5549
      %5551 = vrot.lane.b32.xlu0 %v2073, 120
      %v5552 = vpop.permute.xlu0 %5551
      %5553 = vrot.lane.b32.xlu0 %v2078, 120
      %v5554 = vpop.permute.xlu0 %5553
      %5555 = vrot.lane.b32.xlu0 %v2083, 120
      %v5556 = vpop.permute.xlu0 %5555
      %5557 = vrot.lane.b32.xlu0 %v2088, 120
      %v5558 = vpop.permute.xlu0 %5557
      %5559 = vrot.lane.b32.xlu0 %v2093, 120
      %v5560 = vpop.permute.xlu0 %5559
      %5561 = vrot.lane.b32.xlu0 %v2098, 120
      %v5562 = vpop.permute.xlu0 %5561
      %5563 = vrot.lane.b32.xlu0 %v2103, 120
      %v5564 = vpop.permute.xlu0 %5563
      %5565 = vrot.lane.b32.xlu0 %v2108, 120
      %v5566 = vpop.permute.xlu0 %5565
      %5567 = vrot.lane.b32.xlu0 %v2113, 120
      %v5568 = vpop.permute.xlu0 %5567
      %5569 = vrot.lane.b32.xlu0 %v2118, 120
      %v5570 = vpop.permute.xlu0 %5569
      %5571 = vrot.lane.b32.xlu0 %v2123, 120
      %v5572 = vpop.permute.xlu0 %5571
      %5573 = vrot.lane.b32.xlu0 %v2128, 120
      %v5574 = vpop.permute.xlu0 %5573
      %5575 = vrot.lane.b32.xlu0 %v2133, 120
      %v5576 = vpop.permute.xlu0 %5575
      %5577 = vrot.lane.b32.xlu0 %v2138, 120
      %v5578 = vpop.permute.xlu0 %5577
      %5579 = vrot.lane.b32.xlu0 %v2143, 120
      %v5580 = vpop.permute.xlu0 %5579
      %5581 = vrot.lane.b32.xlu0 %v2148, 120
      %v5582 = vpop.permute.xlu0 %5581
      %5583 = vrot.lane.b32.xlu0 %v2153, 120
      %v5584 = vpop.permute.xlu0 %5583
      %5585 = vrot.lane.b32.xlu0 %v2158, 120
      %v5586 = vpop.permute.xlu0 %5585
      %5587 = vrot.lane.b32.xlu0 %v2163, 120
      %v5588 = vpop.permute.xlu0 %5587
      %5589 = vrot.lane.b32.xlu0 %v2168, 120
      %v5590 = vpop.permute.xlu0 %5589
      %5591 = vrot.lane.b32.xlu0 %v2173, 120
      %v5592 = vpop.permute.xlu0 %5591
      %5593 = vrot.lane.b32.xlu0 %v2178, 120
      %v5594 = vpop.permute.xlu0 %5593
      %5595 = vrot.lane.b32.xlu0 %v2183, 120
      %v5596 = vpop.permute.xlu0 %5595
      %5597 = vrot.lane.b32.xlu0 %v2188, 120
      %v5598 = vpop.permute.xlu0 %5597
      %5599 = vrot.lane.b32.xlu0 %v2193, 120
      %v5600 = vpop.permute.xlu0 %5599
      %5601 = vrot.lane.b32.xlu0 %v2198, 120
      %v5602 = vpop.permute.xlu0 %5601
      %5603 = vrot.lane.b32.xlu0 %v2203, 120
      %v5604 = vpop.permute.xlu0 %5603
      %5605 = vrot.lane.b32.xlu0 %v2208, 120
      %v5606 = vpop.permute.xlu0 %5605
      %5607 = vrot.lane.b32.xlu0 %v2213, 120
      %v5608 = vpop.permute.xlu0 %5607
      %5609 = vrot.lane.b32.xlu0 %v2218, 120
      %v5610 = vpop.permute.xlu0 %5609
      %5611 = vrot.lane.b32.xlu0 %v2223, 120
      %v5612 = vpop.permute.xlu0 %5611
      %5613 = vrot.lane.b32.xlu0 %v2228, 120
      %v5614 = vpop.permute.xlu0 %5613
      %5615 = vrot.lane.b32.xlu0 %v2233, 120
      %v5616 = vpop.permute.xlu0 %5615
      %5617 = vrot.lane.b32.xlu0 %v2238, 120
      %v5618 = vpop.permute.xlu0 %5617
      %5619 = vrot.lane.b32.xlu0 %v2243, 120
      %v5620 = vpop.permute.xlu0 %5619
      %5621 = vrot.lane.b32.xlu0 %v2248, 120
      %v5622 = vpop.permute.xlu0 %5621
      %5623 = vrot.lane.b32.xlu0 %v2253, 120
      %v5624 = vpop.permute.xlu0 %5623
      %5625 = vrot.lane.b32.xlu0 %v2258, 120
      %v5626 = vpop.permute.xlu0 %5625
      %5627 = vrot.lane.b32.xlu0 %v2263, 120
      %v5628 = vpop.permute.xlu0 %5627
      %5629 = vrot.lane.b32.xlu0 %v2268, 120
      %v5630 = vpop.permute.xlu0 %5629
      %5631 = vrot.lane.b32.xlu0 %v2273, 120
      %v5632 = vpop.permute.xlu0 %5631
      %5633 = vrot.lane.b32.xlu0 %v2278, 120
      %v5634 = vpop.permute.xlu0 %5633
      %5635 = vrot.lane.b32.xlu0 %v2283, 120
      %v5636 = vpop.permute.xlu0 %5635
      %5637 = vrot.lane.b32.xlu0 %v2288, 120
      %v5638 = vpop.permute.xlu0 %5637
      %5639 = vrot.lane.b32.xlu0 %v2293, 120
      %v5640 = vpop.permute.xlu0 %5639
      %5641 = vrot.lane.b32.xlu0 %v2298, 120
      %v5642 = vpop.permute.xlu0 %5641
      %5643 = vrot.lane.b32.xlu0 %v2303, 120
      %v5644 = vpop.permute.xlu0 %5643
      %5645 = vrot.lane.b32.xlu0 %v2308, 120
      %v5646 = vpop.permute.xlu0 %5645
      %5647 = vrot.lane.b32.xlu0 %v2313, 120
      %v5648 = vpop.permute.xlu0 %5647
      %5649 = vrot.lane.b32.xlu0 %v2318, 120
      %v5650 = vpop.permute.xlu0 %5649
      %5651 = vrot.lane.b32.xlu0 %v2323, 120
      %v5652 = vpop.permute.xlu0 %5651
      %5653 = vrot.lane.b32.xlu0 %v2328, 120
      %v5654 = vpop.permute.xlu0 %5653
      %5655 = vrot.lane.b32.xlu0 %v2333, 120
      %v5656 = vpop.permute.xlu0 %5655
      %5657 = vrot.lane.b32.xlu0 %v2338, 120
      %v5658 = vpop.permute.xlu0 %5657
      %5659 = vrot.lane.b32.xlu0 %v2343, 120
      %v5660 = vpop.permute.xlu0 %5659
      %5661 = vrot.lane.b32.xlu0 %v2348, 120
      %v5662 = vpop.permute.xlu0 %5661
      %5663 = vrot.lane.b32.xlu0 %v2353, 120
      %v5664 = vpop.permute.xlu0 %5663
      %5665 = vrot.lane.b32.xlu0 %v2358, 120
      %v5666 = vpop.permute.xlu0 %5665
      %5667 = vrot.lane.b32.xlu0 %v2363, 120
      %v5668 = vpop.permute.xlu0 %5667
      %5669 = vrot.lane.b32.xlu0 %v2368, 120
      %v5670 = vpop.permute.xlu0 %5669
      %5671 = vrot.lane.b32.xlu0 %v2373, 120
      %v5672 = vpop.permute.xlu0 %5671
      %5673 = vrot.lane.b32.xlu0 %v2378, 120
      %v5674 = vpop.permute.xlu0 %5673
      %5675 = vrot.lane.b32.xlu0 %v2383, 120
      %v5676 = vpop.permute.xlu0 %5675
      %5677 = vrot.lane.b32.xlu0 %v2388, 120
      %v5678 = vpop.permute.xlu0 %5677
      %5679 = vrot.lane.b32.xlu0 %v2393, 120
      %v5680 = vpop.permute.xlu0 %5679
      %5681 = vrot.lane.b32.xlu0 %v2398, 120
      %v5682 = vpop.permute.xlu0 %5681
      %5683 = vrot.lane.b32.xlu0 %v2403, 120
      %v5684 = vpop.permute.xlu0 %5683
      %5685 = vrot.lane.b32.xlu0 %v2408, 120
      %v5686 = vpop.permute.xlu0 %5685
      %5687 = vrot.lane.b32.xlu0 %v2413, 120
      %v5688 = vpop.permute.xlu0 %5687
      %5689 = vrot.lane.b32.xlu0 %v2418, 120
      %v5690 = vpop.permute.xlu0 %5689
      %5691 = vrot.lane.b32.xlu0 %v2423, 120
      %v5692 = vpop.permute.xlu0 %5691
      %5693 = vrot.lane.b32.xlu0 %v2428, 120
      %v5694 = vpop.permute.xlu0 %5693
      %5695 = vrot.lane.b32.xlu0 %v2433, 120
      %v5696 = vpop.permute.xlu0 %5695
      %5697 = vrot.lane.b32.xlu0 %v2438, 120
      %v5698 = vpop.permute.xlu0 %5697
      %5699 = vrot.lane.b32.xlu0 %v2443, 120
      %v5700 = vpop.permute.xlu0 %5699
      %5701 = vrot.lane.b32.xlu0 %v2448, 120
      %v5702 = vpop.permute.xlu0 %5701
      %5703 = vrot.lane.b32.xlu0 %v2453, 120
      %v5704 = vpop.permute.xlu0 %5703
      %5705 = vrot.lane.b32.xlu0 %v2458, 120
      %v5706 = vpop.permute.xlu0 %5705
      %5707 = vrot.lane.b32.xlu0 %v2463, 120
      %v5708 = vpop.permute.xlu0 %5707
      %5709 = vrot.lane.b32.xlu0 %v2468, 120
      %v5710 = vpop.permute.xlu0 %5709
      %5711 = vrot.lane.b32.xlu0 %v2473, 120
      %v5712 = vpop.permute.xlu0 %5711
      %5713 = vrot.lane.b32.xlu0 %v2478, 120
      %v5714 = vpop.permute.xlu0 %5713
      %5715 = vrot.lane.b32.xlu0 %v2483, 120
      %v5716 = vpop.permute.xlu0 %5715
      %5717 = vrot.lane.b32.xlu0 %v2488, 120
      %v5718 = vpop.permute.xlu0 %5717
      %5719 = vrot.lane.b32.xlu0 %v2493, 120
      %v5720 = vpop.permute.xlu0 %5719
      %5721 = vrot.lane.b32.xlu0 %v2498, 120
      %v5722 = vpop.permute.xlu0 %5721
      %5723 = vrot.lane.b32.xlu0 %v2503, 120
      %v5724 = vpop.permute.xlu0 %5723
      %5725 = vrot.lane.b32.xlu0 %v2508, 120
      %v5726 = vpop.permute.xlu0 %5725
      %5727 = vrot.lane.b32.xlu0 %v2513, 120
      %v5728 = vpop.permute.xlu0 %5727
      %5729 = vrot.lane.b32.xlu0 %v2518, 120
      %v5730 = vpop.permute.xlu0 %5729
      %5731 = vrot.lane.b32.xlu0 %v2523, 120
      %v5732 = vpop.permute.xlu0 %5731
      %5733 = vrot.lane.b32.xlu0 %v2528, 120
      %v5734 = vpop.permute.xlu0 %5733
      %5735 = vrot.lane.b32.xlu0 %v2533, 120
      %v5736 = vpop.permute.xlu0 %5735
      %5737 = vrot.lane.b32.xlu0 %v2538, 120
      %v5738 = vpop.permute.xlu0 %5737
      %5739 = vrot.lane.b32.xlu0 %v2543, 120
      %v5740 = vpop.permute.xlu0 %5739
      %5741 = vrot.lane.b32.xlu0 %v2548, 120
      %v5742 = vpop.permute.xlu0 %5741
      %5743 = vrot.lane.b32.xlu0 %v2553, 120
      %v5744 = vpop.permute.xlu0 %5743
      %5745 = vrot.lane.b32.xlu0 %v2558, 120
      %v5746 = vpop.permute.xlu0 %5745
      %5747 = vrot.lane.b32.xlu0 %v2563, 120
      %v5748 = vpop.permute.xlu0 %5747
      %5749 = vrot.lane.b32.xlu0 %v2568, 120
      %v5750 = vpop.permute.xlu0 %5749
      %5751 = vrot.lane.b32.xlu0 %v2573, 120
      %v5752 = vpop.permute.xlu0 %5751
      %5753 = vrot.lane.b32.xlu0 %v2578, 120
      %v5754 = vpop.permute.xlu0 %5753
      %5755 = vrot.lane.b32.xlu0 %v2583, 120
      %v5756 = vpop.permute.xlu0 %5755
      %5757 = vrot.lane.b32.xlu0 %v2588, 120
      %v5758 = vpop.permute.xlu0 %5757
      %5759 = vrot.lane.b32.xlu0 %v2593, 120
      %v5760 = vpop.permute.xlu0 %5759
      %5761 = vrot.lane.b32.xlu0 %v2598, 120
      %v5762 = vpop.permute.xlu0 %5761
      %5763 = vrot.lane.b32.xlu0 %v2603, 120
      %v5764 = vpop.permute.xlu0 %5763
      %5765 = vrot.lane.b32.xlu0 %v2608, 120
      %v5766 = vpop.permute.xlu0 %5765
      %5767 = vrot.lane.b32.xlu0 %v2613, 120
      %v5768 = vpop.permute.xlu0 %5767
      %5769 = vrot.lane.b32.xlu0 %v2618, 120
      %v5770 = vpop.permute.xlu0 %5769
      %5771 = vrot.lane.b32.xlu0 %v2623, 120
      %v5772 = vpop.permute.xlu0 %5771
      %5773 = vrot.lane.b32.xlu0 %v2628, 120
      %v5774 = vpop.permute.xlu0 %5773
      %5775 = vrot.lane.b32.xlu0 %v2633, 120
      %v5776 = vpop.permute.xlu0 %5775
      %5777 = vrot.lane.b32.xlu0 %v2638, 120
      %v5778 = vpop.permute.xlu0 %5777
      %5779 = vrot.lane.b32.xlu0 %v2643, 120
      %v5780 = vpop.permute.xlu0 %5779
      %5781 = vrot.lane.b32.xlu0 %v2648, 120
      %v5782 = vpop.permute.xlu0 %5781
      %5783 = vrot.lane.b32.xlu0 %v2653, 120
      %v5784 = vpop.permute.xlu0 %5783
      %5785 = vrot.lane.b32.xlu0 %v2658, 120
      %v5786 = vpop.permute.xlu0 %5785
      %5787 = vrot.lane.b32.xlu0 %v2663, 120
      %v5788 = vpop.permute.xlu0 %5787
      %5789 = vrot.lane.b32.xlu0 %v2668, 120
      %v5790 = vpop.permute.xlu0 %5789
      %5791 = vrot.lane.b32.xlu0 %v2673, 120
      %v5792 = vpop.permute.xlu0 %5791
      %5793 = vrot.lane.b32.xlu0 %v2678, 120
      %v5794 = vpop.permute.xlu0 %5793
      %5795 = vrot.lane.b32.xlu0 %v2683, 120
      %v5796 = vpop.permute.xlu0 %5795
      %5797 = vrot.lane.b32.xlu0 %v2688, 120
      %v5798 = vpop.permute.xlu0 %5797
      %5799 = vrot.lane.b32.xlu0 %v2693, 120
      %v5800 = vpop.permute.xlu0 %5799
      %5801 = vrot.lane.b32.xlu0 %v2698, 120
      %v5802 = vpop.permute.xlu0 %5801
      %5931 = vmatprep.subr.mxu0 0.0
      %5932 = vmatpush1.msra.mxu0 %v5548
      %5933 = vmatprep.subr.mxu0 0.0
      %5934 = vmatpush1.msra.mxu0 %v5550
      %5935 = vmatprep.subr.mxu0 0.0
      %5936 = vmatpush1.msra.mxu0 %v5552
      %5937 = vmatprep.subr.mxu0 0.0
      %5938 = vmatpush1.msra.mxu0 %v5554
      %5939 = vmatprep.subr.mxu0 0.0
      %5940 = vmatpush1.msra.mxu0 %v5556
      %5941 = vmatprep.subr.mxu0 0.0
      %5942 = vmatpush1.msra.mxu0 %v5558
      %5943 = vmatprep.subr.mxu0 0.0
      %5944 = vmatpush1.msra.mxu0 %v5560
      %5945 = vmatprep.subr.mxu0 0.0
      %5946 = vmatpush1.msra.mxu0 %v5562
      %5947 = vmatprep.subr.mxu0 0.0
      %5948 = vmatpush1.msra.mxu0 %v5564
      %5949 = vmatprep.subr.mxu0 0.0
      %5950 = vmatpush1.msra.mxu0 %v5566
      %5951 = vmatprep.subr.mxu0 0.0
      %5952 = vmatpush1.msra.mxu0 %v5568
      %5953 = vmatprep.subr.mxu0 0.0
      %5954 = vmatpush1.msra.mxu0 %v5570
      %5955 = vmatprep.subr.mxu0 0.0
      %5956 = vmatpush1.msra.mxu0 %v5572
      %5957 = vmatprep.subr.mxu0 0.0
      %5958 = vmatpush1.msra.mxu0 %v5574
      %5959 = vmatprep.subr.mxu0 0.0
      %5960 = vmatpush1.msra.mxu0 %v5576
      %5961 = vmatprep.subr.mxu0 0.0
      %5962 = vmatpush1.msra.mxu0 %v5578
      %5963 = vmatprep.subr.mxu0 0.0
      %5964 = vmatpush1.msra.mxu0 %v5580
      %5965 = vmatprep.subr.mxu0 0.0
      %5966 = vmatpush1.msra.mxu0 %v5582
      %5967 = vmatprep.subr.mxu0 0.0
      %5968 = vmatpush1.msra.mxu0 %v5584
      %5969 = vmatprep.subr.mxu0 0.0
      %5970 = vmatpush1.msra.mxu0 %v5586
      %5971 = vmatprep.subr.mxu0 0.0
      %5972 = vmatpush1.msra.mxu0 %v5588
      %5973 = vmatprep.subr.mxu0 0.0
      %5974 = vmatpush1.msra.mxu0 %v5590
      %5975 = vmatprep.subr.mxu0 0.0
      %5976 = vmatpush1.msra.mxu0 %v5592
      %5977 = vmatprep.subr.mxu0 0.0
      %5978 = vmatpush1.msra.mxu0 %v5594
      %5979 = vmatprep.subr.mxu0 0.0
      %5980 = vmatpush1.msra.mxu0 %v5596
      %5981 = vmatprep.subr.mxu0 0.0
      %5982 = vmatpush1.msra.mxu0 %v5598
      %5983 = vmatprep.subr.mxu0 0.0
      %5984 = vmatpush1.msra.mxu0 %v5600
      %5985 = vmatprep.subr.mxu0 0.0
      %5986 = vmatpush1.msra.mxu0 %v5602
      %5987 = vmatprep.subr.mxu0 0.0
      %5988 = vmatpush1.msra.mxu0 %v5604
      %5989 = vmatprep.subr.mxu0 0.0
      %5990 = vmatpush1.msra.mxu0 %v5606
      %5991 = vmatprep.subr.mxu0 0.0
      %5992 = vmatpush1.msra.mxu0 %v5608
      %5993 = vmatprep.subr.mxu0 0.0
      %5994 = vmatpush1.msra.mxu0 %v5610
      %5995 = vmatprep.mubr.f32.mxu0 %v5392
      %5996 = vmatmul.mubr.f32.gmra.mrb[0].mxu0 %v5384
      %v5997 = vpop.f32.mrb[0].mxu0
      %v5998 = vadd.f32 0.0, %v5997
      %v5999 = vpop.f32.mrb[0].mxu0
      %6000 = vdwg.mxu0
      %6001 = vmatprep.subr.mxu0 0.0
      %6002 = vmatpush1.msra.mxu0 %v5612
      %6003 = vmatprep.subr.mxu0 0.0
      %6004 = vmatpush1.msra.mxu0 %v5614
      %6005 = vmatprep.subr.mxu0 0.0
      %6006 = vmatpush1.msra.mxu0 %v5616
      %6007 = vmatprep.subr.mxu0 0.0
      %6008 = vmatpush1.msra.mxu0 %v5618
      %6009 = vmatprep.subr.mxu0 0.0
      %6010 = vmatpush1.msra.mxu0 %v5620
      %6011 = vmatprep.subr.mxu0 0.0
      %6012 = vmatpush1.msra.mxu0 %v5622
      %6013 = vmatprep.subr.mxu0 0.0
      %6014 = vmatpush1.msra.mxu0 %v5624
      %6015 = vmatprep.subr.mxu0 0.0
      %6016 = vmatpush1.msra.mxu0 %v5626
      %6017 = vmatprep.subr.mxu0 0.0
      %6018 = vmatpush1.msra.mxu0 %v5628
      %6019 = vmatprep.subr.mxu0 0.0
      %6020 = vmatpush1.msra.mxu0 %v5630
      %6021 = vmatprep.subr.mxu0 0.0
      %6022 = vmatpush1.msra.mxu0 %v5632
      %6023 = vmatprep.subr.mxu0 0.0
      %6024 = vmatpush1.msra.mxu0 %v5634
      %6025 = vmatprep.subr.mxu0 0.0
      %6026 = vmatpush1.msra.mxu0 %v5636
      %6027 = vmatprep.subr.mxu0 0.0
      %6028 = vmatpush1.msra.mxu0 %v5638
      %6029 = vmatprep.subr.mxu0 0.0
      %6030 = vmatpush1.msra.mxu0 %v5640
      %6031 = vmatprep.subr.mxu0 0.0
      %6032 = vmatpush1.msra.mxu0 %v5642
      %6033 = vmatprep.subr.mxu0 0.0
      %6034 = vmatpush1.msra.mxu0 %v5644
      %6035 = vmatprep.subr.mxu0 0.0
      %6036 = vmatpush1.msra.mxu0 %v5646
      %6037 = vmatprep.subr.mxu0 0.0
      %6038 = vmatpush1.msra.mxu0 %v5648
      %6039 = vmatprep.subr.mxu0 0.0
      %6040 = vmatpush1.msra.mxu0 %v5650
      %6041 = vmatprep.subr.mxu0 0.0
      %6042 = vmatpush1.msra.mxu0 %v5652
      %6043 = vmatprep.subr.mxu0 0.0
      %6044 = vmatpush1.msra.mxu0 %v5654
      %6045 = vmatprep.subr.mxu0 0.0
      %6046 = vmatpush1.msra.mxu0 %v5656
      %6047 = vmatprep.subr.mxu0 0.0
      %6048 = vmatpush1.msra.mxu0 %v5658
      %6049 = vmatprep.subr.mxu0 0.0
      %6050 = vmatpush1.msra.mxu0 %v5660
      %6051 = vmatprep.subr.mxu0 0.0
      %6052 = vmatpush1.msra.mxu0 %v5662
      %6053 = vmatprep.subr.mxu0 0.0
      %6054 = vmatpush1.msra.mxu0 %v5664
      %6055 = vmatprep.subr.mxu0 0.0
      %6056 = vmatpush1.msra.mxu0 %v5666
      %6057 = vmatprep.subr.mxu0 0.0
      %6058 = vmatpush1.msra.mxu0 %v5668
      %6059 = vmatprep.subr.mxu0 0.0
      %6060 = vmatpush1.msra.mxu0 %v5670
      %6061 = vmatprep.subr.mxu0 0.0
      %6062 = vmatpush1.msra.mxu0 %v5672
      %6063 = vmatprep.subr.mxu0 0.0
      %6064 = vmatpush1.msra.mxu0 %v5674
      %6065 = vmatprep.mubr.f32.mxu0 %v5393
      %6066 = vmatmul.mubr.f32.gmra.mrb[0].mxu0 %v5391
      %v6067 = vpop.f32.mrb[0].mxu0
      %v6068 = vadd.f32 %v5998, %v6067
      %v6069 = vpop.f32.mrb[0].mxu0
      %6070 = vdwg.mxu0
      %6071 = vmatprep.subr.mxu0 0.0
      %6072 = vmatpush1.msra.mxu0 %v5676
      %6073 = vmatprep.subr.mxu0 0.0
      %6074 = vmatpush1.msra.mxu0 %v5678
      %6075 = vmatprep.subr.mxu0 0.0
      %6076 = vmatpush1.msra.mxu0 %v5680
      %6077 = vmatprep.subr.mxu0 0.0
      %6078 = vmatpush1.msra.mxu0 %v5682
      %6079 = vmatprep.subr.mxu0 0.0
      %6080 = vmatpush1.msra.mxu0 %v5684
      %6081 = vmatprep.subr.mxu0 0.0
      %6082 = vmatpush1.msra.mxu0 %v5686
      %6083 = vmatprep.subr.mxu0 0.0
      %6084 = vmatpush1.msra.mxu0 %v5688
      %6085 = vmatprep.subr.mxu0 0.0
      %6086 = vmatpush1.msra.mxu0 %v5690
      %6087 = vmatprep.subr.mxu0 0.0
      %6088 = vmatpush1.msra.mxu0 %v5692
      %6089 = vmatprep.subr.mxu0 0.0
      %6090 = vmatpush1.msra.mxu0 %v5694
      %6091 = vmatprep.subr.mxu0 0.0
      %6092 = vmatpush1.msra.mxu0 %v5696
      %6093 = vmatprep.subr.mxu0 0.0
      %6094 = vmatpush1.msra.mxu0 %v5698
      %6095 = vmatprep.subr.mxu0 0.0
      %6096 = vmatpush1.msra.mxu0 %v5700
      %6097 = vmatprep.subr.mxu0 0.0
      %6098 = vmatpush1.msra.mxu0 %v5702
      %6099 = vmatprep.subr.mxu0 0.0
      %6100 = vmatpush1.msra.mxu0 %v5704
      %6101 = vmatprep.subr.mxu0 0.0
      %6102 = vmatpush1.msra.mxu0 %v5706
      %6103 = vmatprep.subr.mxu0 0.0
      %6104 = vmatpush1.msra.mxu0 %v5708
      %6105 = vmatprep.subr.mxu0 0.0
      %6106 = vmatpush1.msra.mxu0 %v5710
      %6107 = vmatprep.subr.mxu0 0.0
      %6108 = vmatpush1.msra.mxu0 %v5712
      %6109 = vmatprep.subr.mxu0 0.0
      %6110 = vmatpush1.msra.mxu0 %v5714
      %6111 = vmatprep.subr.mxu0 0.0
      %6112 = vmatpush1.msra.mxu0 %v5716
      %6113 = vmatprep.subr.mxu0 0.0
      %6114 = vmatpush1.msra.mxu0 %v5718
      %6115 = vmatprep.subr.mxu0 0.0
      %6116 = vmatpush1.msra.mxu0 %v5720
      %6117 = vmatprep.subr.mxu0 0.0
      %6118 = vmatpush1.msra.mxu0 %v5722
      %6119 = vmatprep.subr.mxu0 0.0
      %6120 = vmatpush1.msra.mxu0 %v5724
      %6121 = vmatprep.subr.mxu0 0.0
      %6122 = vmatpush1.msra.mxu0 %v5726
      %6123 = vmatprep.subr.mxu0 0.0
      %6124 = vmatpush1.msra.mxu0 %v5728
      %6125 = vmatprep.subr.mxu0 0.0
      %6126 = vmatpush1.msra.mxu0 %v5730
      %6127 = vmatprep.subr.mxu0 0.0
      %6128 = vmatpush1.msra.mxu0 %v5732
      %6129 = vmatprep.subr.mxu0 0.0
      %6130 = vmatpush1.msra.mxu0 %v5734
      %6131 = vmatprep.subr.mxu0 0.0
      %6132 = vmatpush1.msra.mxu0 %v5736
      %6133 = vmatprep.subr.mxu0 0.0
      %6134 = vmatpush1.msra.mxu0 %v5738
      %6135 = vmatprep.mubr.f32.mxu0 %v5409
      %6136 = vmatmul.mubr.f32.gmra.mrb[0].mxu0 %v5401
      %v6137 = vpop.f32.mrb[0].mxu0
      %v6138 = vadd.f32 %v6068, %v6137
      %v6139 = vpop.f32.mrb[0].mxu0
      %6140 = vdwg.mxu0
      %6141 = vmatprep.subr.mxu0 0.0
      %6142 = vmatpush1.msra.mxu0 %v5740
      %6143 = vmatprep.subr.mxu0 0.0
      %6144 = vmatpush1.msra.mxu0 %v5742
      %6145 = vmatprep.subr.mxu0 0.0
      %6146 = vmatpush1.msra.mxu0 %v5744
      %6147 = vmatprep.subr.mxu0 0.0
      %6148 = vmatpush1.msra.mxu0 %v5746
      %6149 = vmatprep.subr.mxu0 0.0
      %6150 = vmatpush1.msra.mxu0 %v5748
      %6151 = vmatprep.subr.mxu0 0.0
      %6152 = vmatpush1.msra.mxu0 %v5750
      %6153 = vmatprep.subr.mxu0 0.0
      %6154 = vmatpush1.msra.mxu0 %v5752
      %6155 = vmatprep.subr.mxu0 0.0
      %6156 = vmatpush1.msra.mxu0 %v5754
      %6157 = vmatprep.subr.mxu0 0.0
      %6158 = vmatpush1.msra.mxu0 %v5756
      %6159 = vmatprep.subr.mxu0 0.0
      %6160 = vmatpush1.msra.mxu0 %v5758
      %6161 = vmatprep.subr.mxu0 0.0
      %6162 = vmatpush1.msra.mxu0 %v5760
      %6163 = vmatprep.subr.mxu0 0.0
      %6164 = vmatpush1.msra.mxu0 %v5762
      %6165 = vmatprep.subr.mxu0 0.0
      %6166 = vmatpush1.msra.mxu0 %v5764
      %6167 = vmatprep.subr.mxu0 0.0
      %6168 = vmatpush1.msra.mxu0 %v5766
      %6169 = vmatprep.subr.mxu0 0.0
      %6170 = vmatpush1.msra.mxu0 %v5768
      %6171 = vmatprep.subr.mxu0 0.0
      %6172 = vmatpush1.msra.mxu0 %v5770
      %6173 = vmatprep.subr.mxu0 0.0
      %6174 = vmatpush1.msra.mxu0 %v5772
      %6175 = vmatprep.subr.mxu0 0.0
      %6176 = vmatpush1.msra.mxu0 %v5774
      %6177 = vmatprep.subr.mxu0 0.0
      %6178 = vmatpush1.msra.mxu0 %v5776
      %6179 = vmatprep.subr.mxu0 0.0
      %6180 = vmatpush1.msra.mxu0 %v5778
      %6181 = vmatprep.subr.mxu0 0.0
      %6182 = vmatpush1.msra.mxu0 %v5780
      %6183 = vmatprep.subr.mxu0 0.0
      %6184 = vmatpush1.msra.mxu0 %v5782
      %6185 = vmatprep.subr.mxu0 0.0
      %6186 = vmatpush1.msra.mxu0 %v5784
      %6187 = vmatprep.subr.mxu0 0.0
      %6188 = vmatpush1.msra.mxu0 %v5786
      %6189 = vmatprep.subr.mxu0 0.0
      %6190 = vmatpush1.msra.mxu0 %v5788
      %6191 = vmatprep.subr.mxu0 0.0
      %6192 = vmatpush1.msra.mxu0 %v5790
      %6193 = vmatprep.subr.mxu0 0.0
      %6194 = vmatpush1.msra.mxu0 %v5792
      %6195 = vmatprep.subr.mxu0 0.0
      %6196 = vmatpush1.msra.mxu0 %v5794
      %6197 = vmatprep.subr.mxu0 0.0
      %6198 = vmatpush1.msra.mxu0 %v5796
      %6199 = vmatprep.subr.mxu0 0.0
      %6200 = vmatpush1.msra.mxu0 %v5798
      %6201 = vmatprep.subr.mxu0 0.0
      %6202 = vmatpush1.msra.mxu0 %v5800
      %6203 = vmatprep.subr.mxu0 0.0
      %6204 = vmatpush1.msra.mxu0 %v5802
      %6205 = vmatprep.mubr.f32.mxu0 %v5410
      %6206 = vmatmul.mubr.f32.gmra.mrb[0].mxu0 %v5408
      %v6207 = vpop.f32.mrb[0].mxu0
      %v6208 = vadd.f32 %v6138, %v6207
      %v6209 = vpop.f32.mrb[0].mxu0
      %6210 = vdwg.mxu0
      %v6211 = vadd.f32 %v5292, %v6208
      %v6212 = vld [vmem:[%s11] sm:$0x3]
      %v6213 = vadd.f32 %v6211, %v6212
      %vm6214 = vcmask 1024
      %6215 = vst.msk [vmem:[%s451] sm:$0x3] %vm6214, %v6213
      %p6216 = scmp.lt.s32.totalorder %s23, 1
      %s6217 = scalar_select %p6216, %s23, 1
      %s6218 = smul.addr %s6217, 2
      %s6219 = scalar_lea.vmem %s12, %s6218
      // Predicated region
      $region69: #{clip_classifier_wmap_v6.1} parent=67 // pred_check
        %p6220 = pneg %p308
      $region70: #{clip_classifier_wmap_v6.1} parent=67 // pred_check_branch
        %6222 = sbr.rel (%p6220) target = $region72
      $region71: #{clip_classifier_wmap_v6.1} parent=67 // pred_region
        _
      $region72: #{clip_classifier_wmap_v6.1} parent=67 // pred_fallthru
        _
    $region68: #{clip_classifier_wmap_v6.1} parent=5 // pred_fallthru
      _
    %p6223 = scmp.le.s32.totalorder 2, %s18
    // Predicated region
    $region73: #{clip_classifier_wmap_v6.1} parent=5 // pred_check
      %p6224 = pneg %p6223
    $region74: #{clip_classifier_wmap_v6.1} parent=5 // pred_check_branch
      %6226 = sbr.rel (%p6224) target = $region76
    $region75: #{clip_classifier_wmap_v6.1} parent=5 // pred_region
      %s6227 = ssub.s32 %s18, 2
      // Predicated region
      $region77: #{clip_classifier_wmap_v6.1} parent=75 // pred_check
        %p6228 = pneg %p314
      $region78: #{clip_classifier_wmap_v6.1} parent=75 // pred_check_branch
        %6230 = sbr.rel (%p6228) target = $region80
      $region79: #{clip_classifier_wmap_v6.1} parent=75 // pred_region
        %p6231 = scmp.lt.s32.totalorder %s24, 1
        %s6232 = scalar_select %p6231, %s24, 1
        %s6233 = smul.addr %s6232, 2
        %s6234 = scalar_lea.vmem %s12, %s6233
      $region80: #{clip_classifier_wmap_v6.1} parent=75 // pred_fallthru
        _
    $region76: #{clip_classifier_wmap_v6.1} parent=5 // pred_fallthru
      _
  $region6: #{clip_classifier_wmap_v6.1} parent=0 // loop_footer
    %s22 = sadd.s32 1, %s18
  $region7: #{clip_classifier_wmap_v6.1} parent=0 // loop_footer_branch
    %17 = sbr.rel target = $region3
  $region8: #{clip_classifier_wmap_v6.1} parent=0 // loop_exit
    _

</llo_original>
